<compile_context>
chip_gen: v6e
topology: v6e:2x2x1
jax: 0.10.0
libtpu: 0.0.40
codegen_flags: <defaults>
</compile_context>

<pallas_src>
import jax
import jax.numpy as jnp
import numpy as np
from jax.experimental import pallas as pl
from jax.experimental.pallas import tpu as pltpu  # noqa: F401


# ----------------------------------------------------------------------------
# Pallas kernels
# ----------------------------------------------------------------------------
def _conv_mm_relu_kernel(x_ref, w_ref, b_ref, o_ref):
    """o = relu(x @ w + b); bf16 operands, f32 MXU accumulation."""
    acc = jnp.dot(x_ref[...], w_ref[...], preferred_element_type=jnp.float32)
    o_ref[...] = jnp.maximum(acc + b_ref[...], 0.0).astype(o_ref.dtype)


def conv_matmul_relu(patches, w, b):
    m = patches.shape[0]
    n = w.shape[1]
    # Single fused launch, full-array VMEM blocks, no grid (shapes are tiny).
    return pl.pallas_call(
        _conv_mm_relu_kernel,
        out_shape=jax.ShapeDtypeStruct((m, n), jnp.bfloat16),
    )(patches, w, b)


def _make_tail_kernel(num_pos, c3, batch, nfc):
    """Fused conv3 + features_fc + value/advantage head + dueling combine.

    p3_ref : (num_pos, batch, kh*kw*Cin)  conv3 im2col patches, position-major
    w3_ref : (kh*kw*Cin, c3)              conv3 weight
    fcw_ref: (num_pos*c3, nfc)            features_fc weight, NHWC-row order
    """
    def kernel(p3_ref, w3_ref, b3_ref, fcw_ref, fcb_ref,
               wh_ref, bh_ref, w2_ref, b2_ref, o_ref):
        # conv3 matmul + bias + ReLU per output position; each position's
        # activations immediately feed its slab of the features_fc matmul,
        # so the conv3 output and the flattened feature vector never hit HBM.
        acc = jnp.zeros((batch, nfc), jnp.float32)
        for p in range(num_pos):
            h3 = jnp.dot(p3_ref[p], w3_ref[...],
                         preferred_element_type=jnp.float32)
            h3 = jnp.maximum(h3 + b3_ref[...], 0.0).astype(jnp.bfloat16)
            acc = acc + jnp.dot(h3, fcw_ref[p * c3:(p + 1) * c3, :],
                                preferred_element_type=jnp.float32)
        # features_fc bias + ReLU                               (N, 512)
        h = jnp.maximum(acc + fcb_ref[...], 0.0).astype(jnp.bfloat16)
        # value | advantage hidden layers fused side-by-side -> ReLU   (N, 256)
        z = jnp.dot(h, wh_ref[...], preferred_element_type=jnp.float32)
        z = jnp.maximum(z + bh_ref[...], 0.0).astype(jnp.bfloat16)
        # value | advantage output layers fused block-diagonally       (N, 1+A)
        va = jnp.dot(z, w2_ref[...], preferred_element_type=jnp.float32) \
            + b2_ref[...]
        value = va[:, 0:1]
        adv = va[:, 1:]
        # dueling combine, entirely in vregs (single (N, A) store)
        o_ref[...] = value + (adv - jnp.mean(adv, axis=-1, keepdims=True))
    return kernel


def pallas_tail(p3, prep):
    num_pos, batch = p3.shape[0], p3.shape[1]
    c3 = prep["conv3_w"].shape[1]
    nfc = prep["fc_b"].shape[1]
    num_actions = prep["b2"].shape[1] - 1
    kernel = _make_tail_kernel(num_pos, c3, batch, nfc)
    return pl.pallas_call(
        kernel,
        out_shape=jax.ShapeDtypeStruct((batch, num_actions), jnp.float32),
    )(p3, prep["conv3_w"], prep["conv3_b"], prep["fc_w"], prep["fc_b"],
      prep["wh"], prep["bh"], prep["w2"], prep["b2"])


# ----------------------------------------------------------------------------
# Conv as im2col (XLA glue) + fused Pallas matmul/bias/ReLU
# ----------------------------------------------------------------------------
def _window_slices(x_nhwc, kh, kw, stride):
    n, h, w, c = x_nhwc.shape
    oh = (h - kh) // stride + 1
    ow = (w - kw) // stride + 1
    cols = []
    for i in range(kh):
        for j in range(kw):
            cols.append(x_nhwc[:, i:i + stride * oh:stride,
                               j:j + stride * ow:stride, :])
    return jnp.stack(cols, axis=3), oh, ow            # [n, oh, ow, kh*kw, c]


def _im2col(x_nhwc, kh, kw, stride):
    n, _, _, c = x_nhwc.shape
    patches, oh, ow = _window_slices(x_nhwc, kh, kw, stride)
    return patches.reshape(n * oh * ow, kh * kw * c), oh, ow


def _im2col_pos_major(x_nhwc, kh, kw, stride):
    """Patches grouped by output position: (oh*ow, n, kh*kw*c)."""
    n, _, _, c = x_nhwc.shape
    patches, oh, ow = _window_slices(x_nhwc, kh, kw, stride)
    patches = patches.transpose(1, 2, 0, 3, 4)         # [oh, ow, n, kh*kw, c]
    return patches.reshape(oh * ow, n, kh * kw * c)


def conv2d_relu(x_nhwc, w_flat, b, k, stride):
    n = x_nhwc.shape[0]
    patches, oh, ow = _im2col(x_nhwc, k, k, stride)
    y = conv_matmul_relu(patches, w_flat, b)           # (n*oh*ow, out_c) bf16
    return y.reshape(n, oh, ow, w_flat.shape[1])


# ----------------------------------------------------------------------------
# Forward
# ----------------------------------------------------------------------------
def dueling_dqn_forward(prep, x_nchw):
    x = jnp.transpose(x_nchw, (0, 2, 3, 1)).astype(jnp.bfloat16)  # NCHW->NHWC
    x = conv2d_relu(x, prep["conv1_w"], prep["conv1_b"], 8, 4)
    x = conv2d_relu(x, prep["conv2_w"], prep["conv2_b"], 4, 2)
    # conv3 + whole FC head: one fused kernel.  Patches are position-major so
    # the kernel indexes per output position (no in-kernel strided gather,
    # no flatten/reshape of conv3 activations).
    p3 = _im2col_pos_major(x, 3, 3, 1)
    # nn.Dropout: inference-mode identity.
    # TODO(synk): training-mode stochastic dropout masking not implemented.
    return pallas_tail(p3, prep)


# ----------------------------------------------------------------------------
# Raw parameters (PyTorch layout) + one-time prep for the Pallas kernels
# ----------------------------------------------------------------------------
def _conv_out(s, k, st):
    return (s - k) // st + 1


def init_params(key, num_actions, input_shape):
    c, h, w = input_shape
    oh = _conv_out(_conv_out(_conv_out(h, 8, 4), 4, 2), 3, 1)
    ow = _conv_out(_conv_out(_conv_out(w, 8, 4), 4, 2), 3, 1)
    feat = 64 * oh * ow

    ks = jax.random.split(key, 16)

    def rnd(k_, shape, fan_in):
        return jax.random.normal(k_, shape, jnp.float32) / np.sqrt(fan_in)

    params = {
        "conv1_w": rnd(ks[0], (32, c, 8, 8), c * 8 * 8),
        "conv1_b": rnd(ks[1], (32,), c * 8 * 8),
        "conv2_w": rnd(ks[2], (64, 32, 4, 4), 32 * 4 * 4),
        "conv2_b": rnd(ks[3], (64,), 32 * 4 * 4),
        "conv3_w": rnd(ks[4], (64, 64, 3, 3), 64 * 3 * 3),
        "conv3_b": rnd(ks[5], (64,), 64 * 3 * 3),
        # Linear weights stored as (in, out) for x @ W.
        "fc_w": rnd(ks[6], (feat, 512), feat),
        "fc_b": rnd(ks[7], (512,), feat),
        "val1_w": rnd(ks[8], (512, 128), 512),
        "val1_b": rnd(ks[9], (128,), 512),
        "val2_w": rnd(ks[10], (128, 1), 128),
        "val2_b": rnd(ks[11], (1,), 128),
        "adv1_w": rnd(ks[12], (512, 128), 512),
        "adv1_b": rnd(ks[13], (128,), 512),
        "adv2_w": rnd(ks[14], (128, num_actions), 128),
        "adv2_b": rnd(ks[15], (num_actions,), 128),
    }
    return params, feat


def prepare_params(params, conv_out_hw):
    """One-time (outside jit) reshape/permute/cast of weights for the kernels."""
    oh, ow = conv_out_hw
    prep = {}
    # Conv weights: (O, I, kh, kw) -> (kh*kw*I, O), bf16; biases -> (1, O) f32.
    for name in ("conv1", "conv2", "conv3"):
        w = params[f"{name}_w"]
        o, i, kh, kw = w.shape
        prep[f"{name}_w"] = (jnp.transpose(w, (2, 3, 1, 0))
                             .reshape(kh * kw * i, o).astype(jnp.bfloat16))
        prep[f"{name}_b"] = params[f"{name}_b"].reshape(1, o).astype(jnp.float32)

    # features_fc: permute rows from PyTorch NCHW-flatten order (c,h,w) to
    # NHWC-flatten order (h,w,c); row block p*C3:(p+1)*C3 then matches the
    # conv3 output channels at spatial position p = y*ow + x.
    c3 = params["conv3_w"].shape[0]
    fc_w = params["fc_w"]                            # (c3*oh*ow, 512)
    nfc = fc_w.shape[1]
    fc_w = (fc_w.reshape(c3, oh, ow, nfc)
            .transpose(1, 2, 0, 3).reshape(c3 * oh * ow, nfc))
    prep["fc_w"] = fc_w.astype(jnp.bfloat16)
    prep["fc_b"] = params["fc_b"].reshape(1, nfc).astype(jnp.float32)

    # value|advantage hidden layers fused side-by-side: (512, 256).
    prep["wh"] = jnp.concatenate([params["val1_w"], params["adv1_w"]],
                                 axis=1).astype(jnp.bfloat16)
    prep["bh"] = jnp.concatenate([params["val1_b"], params["adv1_b"]]
                                 ).reshape(1, -1).astype(jnp.float32)

    # value|advantage output layers fused block-diagonally: (256, 1 + A).
    hidden = params["val1_w"].shape[1]
    num_actions = params["adv2_w"].shape[1]
    top = jnp.concatenate(
        [params["val2_w"], jnp.zeros((hidden, num_actions), jnp.float32)], axis=1)
    bot = jnp.concatenate(
        [jnp.zeros((hidden, 1), jnp.float32), params["adv2_w"]], axis=1)
    prep["w2"] = jnp.concatenate([top, bot], axis=0).astype(jnp.bfloat16)
    prep["b2"] = jnp.concatenate([params["val2_b"], params["adv2_b"]]
                                 ).reshape(1, -1).astype(jnp.float32)
    return prep


# ----------------------------------------------------------------------------
# Pure-JAX f32 reference (numerical sanity check)
# ----------------------------------------------------------------------------
def ref_forward(params, x):
    def conv(x_, w, b, s):
        y = jax.lax.conv_general_dilated(
            x_, w, (s, s), "VALID",
            dimension_numbers=("NCHW", "OIHW", "NCHW"))
        return jax.nn.relu(y + b[None, :, None, None])

    y = conv(x, params["conv1_w"], params["conv1_b"], 4)
    y = conv(y, params["conv2_w"], params["conv2_b"], 2)
    y = conv(y, params["conv3_w"], params["conv3_b"], 1)
    y = y.reshape(y.shape[0], -1)
    y = jax.nn.relu(y @ params["fc_w"] + params["fc_b"])
    vh = jax.nn.relu(y @ params["val1_w"] + params["val1_b"])
    value = vh @ params["val2_w"] + params["val2_b"]
    ah = jax.nn.relu(y @ params["adv1_w"] + params["adv1_b"])
    adv = ah @ params["adv2_w"] + params["adv2_b"]
    return value + (adv - adv.mean(axis=1, keepdims=True))


# ----------------------------------------------------------------------------
if __name__ == "__main__":
    # Spatial size must survive the 8/4/3 conv stack; 52x52 is the smallest
    # "small" choice used here (16x16 would collapse to nothing).
    num_actions = 6
    input_shape = (4, 52, 52)
    batch = 2

    key = jax.random.PRNGKey(0)
    pkey, xkey = jax.random.split(key)
    params, feat = init_params(pkey, num_actions, input_shape)

    oh = _conv_out(_conv_out(_conv_out(input_shape[1], 8, 4), 4, 2), 3, 1)
    ow = _conv_out(_conv_out(_conv_out(input_shape[2], 8, 4), 4, 2), 3, 1)
    prep = prepare_params(params, (oh, ow))

    x = jax.random.normal(xkey, (batch,) + input_shape, jnp.float32)

    fwd = jax.jit(dueling_dqn_forward)
    q = jax.block_until_ready(fwd(prep, x))

    assert q.shape == (batch, num_actions), q.shape

    q_ref = jax.block_until_ready(ref_forward(params, x))
    np.testing.assert_allclose(np.asarray(q), np.asarray(q_ref),
                               rtol=5e-2, atol=5e-2)

    print("KERNEL_OK")
</pallas_src>

<mosaic_0001>
module attributes {stable_mosaic.version = 11 : i64} {
  func.func @_conv_mm_relu_kernel(%arg0: memref<288x256xbf16, #tpu.memory_space<vmem>>, %arg1: memref<256x32xbf16, #tpu.memory_space<vmem>>, %arg2: memref<1x32xf32, #tpu.memory_space<vmem>>, %arg3: memref<288x32xbf16, #tpu.memory_space<vmem>>) attributes {dimension_semantics = [], scalar_prefetch = 0 : i64, scratch_operands = 0 : i64, tpu.core_type = #tpu.core_type<tc>} {
    %c0 = arith.constant 0 : index
    %c0_0 = arith.constant 0 : index
    %0 = vector.load %arg0[%c0, %c0_0] : memref<288x256xbf16, #tpu.memory_space<vmem>>, vector<288x256xbf16>
    %c0_1 = arith.constant 0 : index
    %c0_2 = arith.constant 0 : index
    %1 = vector.load %arg1[%c0_1, %c0_2] : memref<256x32xbf16, #tpu.memory_space<vmem>>, vector<256x32xbf16>
    %cst = arith.constant dense<0.000000e+00> : vector<288x32xf32>
    %2 = tpu.matmul %0, %1, %cst {dimension_numbers = #tpu.dot_dimension_numbers<[1], [0], [0], [1], [0, 0, 1, 1], [], []>} : vector<288x256xbf16>, vector<256x32xbf16>, vector<288x32xf32> -> vector<288x32xf32>
    %c0_3 = arith.constant 0 : index
    %c0_4 = arith.constant 0 : index
    %3 = vector.load %arg2[%c0_3, %c0_4] : memref<1x32xf32, #tpu.memory_space<vmem>>, vector<1x32xf32>
    %4 = vector.broadcast %3 : vector<1x32xf32> to vector<288x32xf32>
    %5 = arith.addf %2, %4 : vector<288x32xf32>
    %cst_5 = arith.constant 0.000000e+00 : f32
    %6 = vector.broadcast %cst_5 : f32 to vector<288x32xf32>
    %7 = arith.maximumf %5, %6 : vector<288x32xf32>
    %8 = arith.truncf %7 : vector<288x32xf32> to vector<288x32xbf16>
    %c0_6 = arith.constant 0 : index
    %c0_7 = arith.constant 0 : index
    %9 = vector.load %arg3[%c0_6, %c0_7] : memref<288x32xbf16, #tpu.memory_space<vmem>>, vector<288x32xbf16>
    tpu.vector_store %arg3[%c0_6, %c0_7], %8 {strides = array<i32>} : memref<288x32xbf16, #tpu.memory_space<vmem>>, vector<288x32xbf16>,
    return
  }
}

module attributes {stable_mosaic.version = 11 : i64} {
  func.func @_conv_mm_relu_kernel(%arg0: memref<50x512xbf16, #tpu.memory_space<vmem>>, %arg1: memref<512x64xbf16, #tpu.memory_space<vmem>>, %arg2: memref<1x64xf32, #tpu.memory_space<vmem>>, %arg3: memref<50x64xbf16, #tpu.memory_space<vmem>>) attributes {dimension_semantics = [], scalar_prefetch = 0 : i64, scratch_operands = 0 : i64, tpu.core_type = #tpu.core_type<tc>} {
    %c0 = arith.constant 0 : index
    %c0_0 = arith.constant 0 : index
    %0 = vector.load %arg0[%c0, %c0_0] : memref<50x512xbf16, #tpu.memory_space<vmem>>, vector<50x512xbf16>
    %c0_1 = arith.constant 0 : index
    %c0_2 = arith.constant 0 : index
    %1 = vector.load %arg1[%c0_1, %c0_2] : memref<512x64xbf16, #tpu.memory_space<vmem>>, vector<512x64xbf16>
    %cst = arith.constant dense<0.000000e+00> : vector<50x64xf32>
    %2 = tpu.matmul %0, %1, %cst {dimension_numbers = #tpu.dot_dimension_numbers<[1], [0], [0], [1], [0, 0, 1, 1], [], []>} : vector<50x512xbf16>, vector<512x64xbf16>, vector<50x64xf32> -> vector<50x64xf32>
    %c0_3 = arith.constant 0 : index
    %c0_4 = arith.constant 0 : index
    %3 = vector.load %arg2[%c0_3, %c0_4] : memref<1x64xf32, #tpu.memory_space<vmem>>, vector<1x64xf32>
    %4 = vector.broadcast %3 : vector<1x64xf32> to vector<50x64xf32>
    %5 = arith.addf %2, %4 : vector<50x64xf32>
    %cst_5 = arith.constant 0.000000e+00 : f32
    %6 = vector.broadcast %cst_5 : f32 to vector<50x64xf32>
    %7 = arith.maximumf %5, %6 : vector<50x64xf32>
    %8 = arith.truncf %7 : vector<50x64xf32> to vector<50x64xbf16>
    %c0_6 = arith.constant 0 : index
    %c0_7 = arith.constant 0 : index
    %9 = vector.load %arg3[%c0_6, %c0_7] : memref<50x64xbf16, #tpu.memory_space<vmem>>, vector<50x64xbf16>
    tpu.vector_store %arg3[%c0_6, %c0_7], %8 {strides = array<i32>} : memref<50x64xbf16, #tpu.memory_space<vmem>>, vector<50x64xbf16>,
    return
  }
}

module attributes {stable_mosaic.version = 11 : i64} {
  func.func @kernel(%arg0: memref<9x2x576xbf16, #tpu.memory_space<vmem>>, %arg1: memref<576x64xbf16, #tpu.memory_space<vmem>>, %arg2: memref<1x64xf32, #tpu.memory_space<vmem>>, %arg3: memref<576x512xbf16, #tpu.memory_space<vmem>>, %arg4: memref<1x512xf32, #tpu.memory_space<vmem>>, %arg5: memref<512x256xbf16, #tpu.memory_space<vmem>>, %arg6: memref<1x256xf32, #tpu.memory_space<vmem>>, %arg7: memref<256x7xbf16, #tpu.memory_space<vmem>>, %arg8: memref<1x7xf32, #tpu.memory_space<vmem>>, %arg9: memref<2x6xf32, #tpu.memory_space<vmem>>) attributes {dimension_semantics = [], scalar_prefetch = 0 : i64, scratch_operands = 0 : i64, tpu.core_type = #tpu.core_type<tc>} {
    %cst = arith.constant 0.000000e+00 : f32
    %0 = vector.broadcast %cst : f32 to vector<2x512xf32>
    %c0 = arith.constant 0 : index
    %c0_0 = arith.constant 0 : index
    %c0_1 = arith.constant 0 : index
    %1 = vector.load %arg0[%c0, %c0_0, %c0_1] : memref<9x2x576xbf16, #tpu.memory_space<vmem>>, vector<1x2x576xbf16>
    %2 = vector.shape_cast %1 : vector<1x2x576xbf16> to vector<2x576xbf16>
    %c0_2 = arith.constant 0 : index
    %c0_3 = arith.constant 0 : index
    %3 = vector.load %arg1[%c0_2, %c0_3] : memref<576x64xbf16, #tpu.memory_space<vmem>>, vector<576x64xbf16>
    %cst_4 = arith.constant dense<0.000000e+00> : vector<2x64xf32>
    %4 = tpu.matmul %2, %3, %cst_4 {dimension_numbers = #tpu.dot_dimension_numbers<[1], [0], [0], [1], [0, 0, 1, 1], [], []>} : vector<2x576xbf16>, vector<576x64xbf16>, vector<2x64xf32> -> vector<2x64xf32>
    %c0_5 = arith.constant 0 : index
    %c0_6 = arith.constant 0 : index
    %5 = vector.load %arg2[%c0_5, %c0_6] : memref<1x64xf32, #tpu.memory_space<vmem>>, vector<1x64xf32>
    %6 = vector.broadcast %5 : vector<1x64xf32> to vector<2x64xf32>
    %7 = arith.addf %4, %6 : vector<2x64xf32>
    %cst_7 = arith.constant 0.000000e+00 : f32
    %8 = vector.broadcast %cst_7 : f32 to vector<2x64xf32>
    %9 = arith.maximumf %7, %8 : vector<2x64xf32>
    %10 = arith.truncf %9 : vector<2x64xf32> to vector<2x64xbf16>
    %c0_8 = arith.constant 0 : index
    %c0_9 = arith.constant 0 : index
    %11 = vector.load %arg3[%c0_8, %c0_9] : memref<576x512xbf16, #tpu.memory_space<vmem>>, vector<64x512xbf16>
    %cst_10 = arith.constant dense<0.000000e+00> : vector<2x512xf32>
    %12 = tpu.matmul %10, %11, %cst_10 {dimension_numbers = #tpu.dot_dimension_numbers<[1], [0], [0], [1], [0, 0, 1, 1], [], []>} : vector<2x64xbf16>, vector<64x512xbf16>, vector<2x512xf32> -> vector<2x512xf32>
    %13 = arith.addf %0, %12 : vector<2x512xf32>
    %c1 = arith.constant 1 : index
    %c0_11 = arith.constant 0 : index
    %c0_12 = arith.constant 0 : index
    %14 = vector.load %arg0[%c1, %c0_11, %c0_12] : memref<9x2x576xbf16, #tpu.memory_space<vmem>>, vector<1x2x576xbf16>
    %15 = vector.shape_cast %14 : vector<1x2x576xbf16> to vector<2x576xbf16>
    %c0_13 = arith.constant 0 : index
    %c0_14 = arith.constant 0 : index
    %16 = vector.load %arg1[%c0_13, %c0_14] : memref<576x64xbf16, #tpu.memory_space<vmem>>, vector<576x64xbf16>
    %cst_15 = arith.constant dense<0.000000e+00> : vector<2x64xf32>
    %17 = tpu.matmul %15, %16, %cst_15 {dimension_numbers = #tpu.dot_dimension_numbers<[1], [0], [0], [1], [0, 0, 1, 1], [], []>} : vector<2x576xbf16>, vector<576x64xbf16>, vector<2x64xf32> -> vector<2x64xf32>
    %c0_16 = arith.constant 0 : index
    %c0_17 = arith.constant 0 : index
    %18 = vector.load %arg2[%c0_16, %c0_17] : memref<1x64xf32, #tpu.memory_space<vmem>>, vector<1x64xf32>
    %19 = vector.broadcast %18 : vector<1x64xf32> to vector<2x64xf32>
    %20 = arith.addf %17, %19 : vector<2x64xf32>
    %cst_18 = arith.constant 0.000000e+00 : f32
    %21 = vector.broadcast %cst_18 : f32 to vector<2x64xf32>
    %22 = arith.maximumf %20, %21 : vector<2x64xf32>
    %23 = arith.truncf %22 : vector<2x64xf32> to vector<2x64xbf16>
    %c64 = arith.constant 64 : index
    %c0_19 = arith.constant 0 : index
    %24 = vector.load %arg3[%c64, %c0_19] : memref<576x512xbf16, #tpu.memory_space<vmem>>, vector<64x512xbf16>
    %cst_20 = arith.constant dense<0.000000e+00> : vector<2x512xf32>
    %25 = tpu.matmul %23, %24, %cst_20 {dimension_numbers = #tpu.dot_dimension_numbers<[1], [0], [0], [1], [0, 0, 1, 1], [], []>} : vector<2x64xbf16>, vector<64x512xbf16>, vector<2x512xf32> -> vector<2x512xf32>
    %26 = arith.addf %13, %25 : vector<2x512xf32>
    %c2 = arith.constant 2 : index
    %c0_21 = arith.constant 0 : index
    %c0_22 = arith.constant 0 : index
    %27 = vector.load %arg0[%c2, %c0_21, %c0_22] : memref<9x2x576xbf16, #tpu.memory_space<vmem>>, vector<1x2x576xbf16>
    %28 = vector.shape_cast %27 : vector<1x2x576xbf16> to vector<2x576xbf16>
    %c0_23 = arith.constant 0 : index
    %c0_24 = arith.constant 0 : index
    %29 = vector.load %arg1[%c0_23, %c0_24] : memref<576x64xbf16, #tpu.memory_space<vmem>>, vector<576x64xbf16>
    %cst_25 = arith.constant dense<0.000000e+00> : vector<2x64xf32>
    %30 = tpu.matmul %28, %29, %cst_25 {dimension_numbers = #tpu.dot_dimension_numbers<[1], [0], [0], [1], [0, 0, 1, 1], [], []>} : vector<2x576xbf16>, vector<576x64xbf16>, vector<2x64xf32> -> vector<2x64xf32>
    %c0_26 = arith.constant 0 : index
    %c0_27 = arith.constant 0 : index
    %31 = vector.load %arg2[%c0_26, %c0_27] : memref<1x64xf32, #tpu.memory_space<vmem>>, vector<1x64xf32>
    %32 = vector.broadcast %31 : vector<1x64xf32> to vector<2x64xf32>
    %33 = arith.addf %30, %32 : vector<2x64xf32>
    %cst_28 = arith.constant 0.000000e+00 : f32
    %34 = vector.broadcast %cst_28 : f32 to vector<2x64xf32>
    %35 = arith.maximumf %33, %34 : vector<2x64xf32>
    %36 = arith.truncf %35 : vector<2x64xf32> to vector<2x64xbf16>
    %c128 = arith.constant 128 : index
    %c0_29 = arith.constant 0 : index
    %37 = vector.load %arg3[%c128, %c0_29] : memref<576x512xbf16, #tpu.memory_space<vmem>>, vector<64x512xbf16>
    %cst_30 = arith.constant dense<0.000000e+00> : vector<2x512xf32>
    %38 = tpu.matmul %36, %37, %cst_30 {dimension_numbers = #tpu.dot_dimension_numbers<[1], [0], [0], [1], [0, 0, 1, 1], [], []>} : vector<2x64xbf16>, vector<64x512xbf16>, vector<2x512xf32> -> vector<2x512xf32>
    %39 = arith.addf %26, %38 : vector<2x512xf32>
    %c3 = arith.constant 3 : index
    %c0_31 = arith.constant 0 : index
    %c0_32 = arith.constant 0 : index
    %40 = vector.load %arg0[%c3, %c0_31, %c0_32] : memref<9x2x576xbf16, #tpu.memory_space<vmem>>, vector<1x2x576xbf16>
    %41 = vector.shape_cast %40 : vector<1x2x576xbf16> to vector<2x576xbf16>
    %c0_33 = arith.constant 0 : index
    %c0_34 = arith.constant 0 : index
    %42 = vector.load %arg1[%c0_33, %c0_34] : memref<576x64xbf16, #tpu.memory_space<vmem>>, vector<576x64xbf16>
    %cst_35 = arith.constant dense<0.000000e+00> : vector<2x64xf32>
    %43 = tpu.matmul %41, %42, %cst_35 {dimension_numbers = #tpu.dot_dimension_numbers<[1], [0], [0], [1], [0, 0, 1, 1], [], []>} : vector<2x576xbf16>, vector<576x64xbf16>, vector<2x64xf32> -> vector<2x64xf32>
    %c0_36 = arith.constant 0 : index
    %c0_37 = arith.constant 0 : index
    %44 = vector.load %arg2[%c0_36, %c0_37] : memref<1x64xf32, #tpu.memory_space<vmem>>, vector<1x64xf32>
    %45 = vector.broadcast %44 : vector<1x64xf32> to vector<2x64xf32>
    %46 = arith.addf %43, %45 : vector<2x64xf32>
    %cst_38 = arith.constant 0.000000e+00 : f32
    %47 = vector.broadcast %cst_38 : f32 to vector<2x64xf32>
    %48 = arith.maximumf %46, %47 : vector<2x64xf32>
    %49 = arith.truncf %48 : vector<2x64xf32> to vector<2x64xbf16>
    %c192 = arith.constant 192 : index
    %c0_39 = arith.constant 0 : index
    %50 = vector.load %arg3[%c192, %c0_39] : memref<576x512xbf16, #tpu.memory_space<vmem>>, vector<64x512xbf16>
    %cst_40 = arith.constant dense<0.000000e+00> : vector<2x512xf32>
    %51 = tpu.matmul %49, %50, %cst_40 {dimension_numbers = #tpu.dot_dimension_numbers<[1], [0], [0], [1], [0, 0, 1, 1], [], []>} : vector<2x64xbf16>, vector<64x512xbf16>, vector<2x512xf32> -> vector<2x512xf32>
    %52 = arith.addf %39, %51 : vector<2x512xf32>
    %c4 = arith.constant 4 : index
    %c0_41 = arith.constant 0 : index
    %c0_42 = arith.constant 0 : index
    %53 = vector.load %arg0[%c4, %c0_41, %c0_42] : memref<9x2x576xbf16, #tpu.memory_space<vmem>>, vector<1x2x576xbf16>
    %54 = vector.shape_cast %53 : vector<1x2x576xbf16> to vector<2x576xbf16>
    %c0_43 = arith.constant 0 : index
    %c0_44 = arith.constant 0 : index
    %55 = vector.load %arg1[%c0_43, %c0_44] : memref<576x64xbf16, #tpu.memory_space<vmem>>, vector<576x64xbf16>
    %cst_45 = arith.constant dense<0.000000e+00> : vector<2x64xf32>
    %56 = tpu.matmul %54, %55, %cst_45 {dimension_numbers = #tpu.dot_dimension_numbers<[1], [0], [0], [1], [0, 0, 1, 1], [], []>} : vector<2x576xbf16>, vector<576x64xbf16>, vector<2x64xf32> -> vector<2x64xf32>
    %c0_46 = arith.constant 0 : index
    %c0_47 = arith.constant 0 : index
    %57 = vector.load %arg2[%c0_46, %c0_47] : memref<1x64xf32, #tpu.memory_space<vmem>>, vector<1x64xf32>
    %58 = vector.broadcast %57 : vector<1x64xf32> to vector<2x64xf32>
    %59 = arith.addf %56, %58 : vector<2x64xf32>
    %cst_48 = arith.constant 0.000000e+00 : f32
    %60 = vector.broadcast %cst_48 : f32 to vector<2x64xf32>
    %61 = arith.maximumf %59, %60 : vector<2x64xf32>
    %62 = arith.truncf %61 : vector<2x64xf32> to vector<2x64xbf16>
    %c256 = arith.constant 256 : index
    %c0_49 = arith.constant 0 : index
    %63 = vector.load %arg3[%c256, %c0_49] : memref<576x512xbf16, #tpu.memory_space<vmem>>, vector<64x512xbf16>
    %cst_50 = arith.constant dense<0.000000e+00> : vector<2x512xf32>
    %64 = tpu.matmul %62, %63, %cst_50 {dimension_numbers = #tpu.dot_dimension_numbers<[1], [0], [0], [1], [0, 0, 1, 1], [], []>} : vector<2x64xbf16>, vector<64x512xbf16>, vector<2x512xf32> -> vector<2x512xf32>
    %65 = arith.addf %52, %64 : vector<2x512xf32>
    %c5 = arith.constant 5 : index
    %c0_51 = arith.constant 0 : index
    %c0_52 = arith.constant 0 : index
    %66 = vector.load %arg0[%c5, %c0_51, %c0_52] : memref<9x2x576xbf16, #tpu.memory_space<vmem>>, vector<1x2x576xbf16>
    %67 = vector.shape_cast %66 : vector<1x2x576xbf16> to vector<2x576xbf16>
    %c0_53 = arith.constant 0 : index
    %c0_54 = arith.constant 0 : index
    %68 = vector.load %arg1[%c0_53, %c0_54] : memref<576x64xbf16, #tpu.memory_space<vmem>>, vector<576x64xbf16>
    %cst_55 = arith.constant dense<0.000000e+00> : vector<2x64xf32>
    %69 = tpu.matmul %67, %68, %cst_55 {dimension_numbers = #tpu.dot_dimension_numbers<[1], [0], [0], [1], [0, 0, 1, 1], [], []>} : vector<2x576xbf16>, vector<576x64xbf16>, vector<2x64xf32> -> vector<2x64xf32>
    %c0_56 = arith.constant 0 : index
    %c0_57 = arith.constant 0 : index
    %70 = vector.load %arg2[%c0_56, %c0_57] : memref<1x64xf32, #tpu.memory_space<vmem>>, vector<1x64xf32>
    %71 = vector.broadcast %70 : vector<1x64xf32> to vector<2x64xf32>
    %72 = arith.addf %69, %71 : vector<2x64xf32>
    %cst_58 = arith.constant 0.000000e+00 : f32
    %73 = vector.broadcast %cst_58 : f32 to vector<2x64xf32>
    %74 = arith.maximumf %72, %73 : vector<2x64xf32>
    %75 = arith.truncf %74 : vector<2x64xf32> to vector<2x64xbf16>
    %c320 = arith.constant 320 : index
    %c0_59 = arith.constant 0 : index
    %76 = vector.load %arg3[%c320, %c0_59] : memref<576x512xbf16, #tpu.memory_space<vmem>>, vector<64x512xbf16>
    %cst_60 = arith.constant dense<0.000000e+00> : vector<2x512xf32>
    %77 = tpu.matmul %75, %76, %cst_60 {dimension_numbers = #tpu.dot_dimension_numbers<[1], [0], [0], [1], [0, 0, 1, 1], [], []>} : vector<2x64xbf16>, vector<64x512xbf16>, vector<2x512xf32> -> vector<2x512xf32>
    %78 = arith.addf %65, %77 : vector<2x512xf32>
    %c6 = arith.constant 6 : index
    %c0_61 = arith.constant 0 : index
    %c0_62 = arith.constant 0 : index
    %79 = vector.load %arg0[%c6, %c0_61, %c0_62] : memref<9x2x576xbf16, #tpu.memory_space<vmem>>, vector<1x2x576xbf16>
    %80 = vector.shape_cast %79 : vector<1x2x576xbf16> to vector<2x576xbf16>
    %c0_63 = arith.constant 0 : index
    %c0_64 = arith.constant 0 : index
    %81 = vector.load %arg1[%c0_63, %c0_64] : memref<576x64xbf16, #tpu.memory_space<vmem>>, vector<576x64xbf16>
    %cst_65 = arith.constant dense<0.000000e+00> : vector<2x64xf32>
    %82 = tpu.matmul %80, %81, %cst_65 {dimension_numbers = #tpu.dot_dimension_numbers<[1], [0], [0], [1], [0, 0, 1, 1], [], []>} : vector<2x576xbf16>, vector<576x64xbf16>, vector<2x64xf32> -> vector<2x64xf32>
    %c0_66 = arith.constant 0 : index
    %c0_67 = arith.constant 0 : index
    %83 = vector.load %arg2[%c0_66, %c0_67] : memref<1x64xf32, #tpu.memory_space<vmem>>, vector<1x64xf32>
    %84 = vector.broadcast %83 : vector<1x64xf32> to vector<2x64xf32>
    %85 = arith.addf %82, %84 : vector<2x64xf32>
    %cst_68 = arith.constant 0.000000e+00 : f32
    %86 = vector.broadcast %cst_68 : f32 to vector<2x64xf32>
    %87 = arith.maximumf %85, %86 : vector<2x64xf32>
    %88 = arith.truncf %87 : vector<2x64xf32> to vector<2x64xbf16>
    %c384 = arith.constant 384 : index
    %c0_69 = arith.constant 0 : index
    %89 = vector.load %arg3[%c384, %c0_69] : memref<576x512xbf16, #tpu.memory_space<vmem>>, vector<64x512xbf16>
    %cst_70 = arith.constant dense<0.000000e+00> : vector<2x512xf32>
    %90 = tpu.matmul %88, %89, %cst_70 {dimension_numbers = #tpu.dot_dimension_numbers<[1], [0], [0], [1], [0, 0, 1, 1], [], []>} : vector<2x64xbf16>, vector<64x512xbf16>, vector<2x512xf32> -> vector<2x512xf32>
    %91 = arith.addf %78, %90 : vector<2x512xf32>
    %c7 = arith.constant 7 : index
    %c0_71 = arith.constant 0 : index
    %c0_72 = arith.constant 0 : index
    %92 = vector.load %arg0[%c7, %c0_71, %c0_72] : memref<9x2x576xbf16, #tpu.memory_space<vmem>>, vector<1x2x576xbf16>
    %93 = vector.shape_cast %92 : vector<1x2x576xbf16> to vector<2x576xbf16>
    %c0_73 = arith.constant 0 : index
    %c0_74 = arith.constant 0 : index
    %94 = vector.load %arg1[%c0_73, %c0_74] : memref<576x64xbf16, #tpu.memory_space<vmem>>, vector<576x64xbf16>
    %cst_75 = arith.constant dense<0.000000e+00> : vector<2x64xf32>
    %95 = tpu.matmul %93, %94, %cst_75 {dimension_numbers = #tpu.dot_dimension_numbers<[1], [0], [0], [1], [0, 0, 1, 1], [], []>} : vector<2x576xbf16>, vector<576x64xbf16>, vector<2x64xf32> -> vector<2x64xf32>
    %c0_76 = arith.constant 0 : index
    %c0_77 = arith.constant 0 : index
    %96 = vector.load %arg2[%c0_76, %c0_77] : memref<1x64xf32, #tpu.memory_space<vmem>>, vector<1x64xf32>
    %97 = vector.broadcast %96 : vector<1x64xf32> to vector<2x64xf32>
    %98 = arith.addf %95, %97 : vector<2x64xf32>
    %cst_78 = arith.constant 0.000000e+00 : f32
    %99 = vector.broadcast %cst_78 : f32 to vector<2x64xf32>
    %100 = arith.maximumf %98, %99 : vector<2x64xf32>
    %101 = arith.truncf %100 : vector<2x64xf32> to vector<2x64xbf16>
    %c448 = arith.constant 448 : index
    %c0_79 = arith.constant 0 : index
    %102 = vector.load %arg3[%c448, %c0_79] : memref<576x512xbf16, #tpu.memory_space<vmem>>, vector<64x512xbf16>
    %cst_80 = arith.constant dense<0.000000e+00> : vector<2x512xf32>
    %103 = tpu.matmul %101, %102, %cst_80 {dimension_numbers = #tpu.dot_dimension_numbers<[1], [0], [0], [1], [0, 0, 1, 1], [], []>} : vector<2x64xbf16>, vector<64x512xbf16>, vector<2x512xf32> -> vector<2x512xf32>
    %104 = arith.addf %91, %103 : vector<2x512xf32>
    %c8 = arith.constant 8 : index
    %c0_81 = arith.constant 0 : index
    %c0_82 = arith.constant 0 : index
    %105 = vector.load %arg0[%c8, %c0_81, %c0_82] : memref<9x2x576xbf16, #tpu.memory_space<vmem>>, vector<1x2x576xbf16>
    %106 = vector.shape_cast %105 : vector<1x2x576xbf16> to vector<2x576xbf16>
    %c0_83 = arith.constant 0 : index
    %c0_84 = arith.constant 0 : index
    %107 = vector.load %arg1[%c0_83, %c0_84] : memref<576x64xbf16, #tpu.memory_space<vmem>>, vector<576x64xbf16>
    %cst_85 = arith.constant dense<0.000000e+00> : vector<2x64xf32>
    %108 = tpu.matmul %106, %107, %cst_85 {dimension_numbers = #tpu.dot_dimension_numbers<[1], [0], [0], [1], [0, 0, 1, 1], [], []>} : vector<2x576xbf16>, vector<576x64xbf16>, vector<2x64xf32> -> vector<2x64xf32>
    %c0_86 = arith.constant 0 : index
    %c0_87 = arith.constant 0 : index
    %109 = vector.load %arg2[%c0_86, %c0_87] : memref<1x64xf32, #tpu.memory_space<vmem>>, vector<1x64xf32>
    %110 = vector.broadcast %109 : vector<1x64xf32> to vector<2x64xf32>
    %111 = arith.addf %108, %110 : vector<2x64xf32>
    %cst_88 = arith.constant 0.000000e+00 : f32
    %112 = vector.broadcast %cst_88 : f32 to vector<2x64xf32>
    %113 = arith.maximumf %111, %112 : vector<2x64xf32>
    %114 = arith.truncf %113 : vector<2x64xf32> to vector<2x64xbf16>
    %c512 = arith.constant 512 : index
    %c0_89 = arith.constant 0 : index
    %115 = vector.load %arg3[%c512, %c0_89] : memref<576x512xbf16, #tpu.memory_space<vmem>>, vector<64x512xbf16>
    %cst_90 = arith.constant dense<0.000000e+00> : vector<2x512xf32>
    %116 = tpu.matmul %114, %115, %cst_90 {dimension_numbers = #tpu.dot_dimension_numbers<[1], [0], [0], [1], [0, 0, 1, 1], [], []>} : vector<2x64xbf16>, vector<64x512xbf16>, vector<2x512xf32> -> vector<2x512xf32>
    %117 = arith.addf %104, %116 : vector<2x512xf32>
    %c0_91 = arith.constant 0 : index
    %c0_92 = arith.constant 0 : index
    %118 = vector.load %arg4[%c0_91, %c0_92] : memref<1x512xf32, #tpu.memory_space<vmem>>, vector<1x512xf32>
    %119 = vector.broadcast %118 : vector<1x512xf32> to vector<2x512xf32>
    %120 = arith.addf %117, %119 : vector<2x512xf32>
    %cst_93 = arith.constant 0.000000e+00 : f32
    %121 = vector.broadcast %cst_93 : f32 to vector<2x512xf32>
    %122 = arith.maximumf %120, %121 : vector<2x512xf32>
    %123 = arith.truncf %122 : vector<2x512xf32> to vector<2x512xbf16>
    %c0_94 = arith.constant 0 : index
    %c0_95 = arith.constant 0 : index
    %124 = vector.load %arg5[%c0_94, %c0_95] : memref<512x256xbf16, #tpu.memory_space<vmem>>, vector<512x256xbf16>
    %cst_96 = arith.constant dense<0.000000e+00> : vector<2x256xf32>
    %125 = tpu.matmul %123, %124, %cst_96 {dimension_numbers = #tpu.dot_dimension_numbers<[1], [0], [0], [1], [0, 0, 1, 1], [], []>} : vector<2x512xbf16>, vector<512x256xbf16>, vector<2x256xf32> -> vector<2x256xf32>
    %c0_97 = arith.constant 0 : index
    %c0_98 = arith.constant 0 : index
    %126 = vector.load %arg6[%c0_97, %c0_98] : memref<1x256xf32, #tpu.memory_space<vmem>>, vector<1x256xf32>
    %127 = vector.broadcast %126 : vector<1x256xf32> to vector<2x256xf32>
    %128 = arith.addf %125, %127 : vector<2x256xf32>
    %cst_99 = arith.constant 0.000000e+00 : f32
    %129 = vector.broadcast %cst_99 : f32 to vector<2x256xf32>
    %130 = arith.maximumf %128, %129 : vector<2x256xf32>
    %131 = arith.truncf %130 : vector<2x256xf32> to vector<2x256xbf16>
    %c0_100 = arith.constant 0 : index
    %c0_101 = arith.constant 0 : index
    %132 = vector.load %arg7[%c0_100, %c0_101] : memref<256x7xbf16, #tpu.memory_space<vmem>>, vector<256x7xbf16>
    %cst_102 = arith.constant dense<0.000000e+00> : vector<2x7xf32>
    %133 = tpu.matmul %131, %132, %cst_102 {dimension_numbers = #tpu.dot_dimension_numbers<[1], [0], [0], [1], [0, 0, 1, 1], [], []>} : vector<2x256xbf16>, vector<256x7xbf16>, vector<2x7xf32> -> vector<2x7xf32>
    %c0_103 = arith.constant 0 : index
    %c0_104 = arith.constant 0 : index
    %134 = vector.load %arg8[%c0_103, %c0_104] : memref<1x7xf32, #tpu.memory_space<vmem>>, vector<1x7xf32>
    %135 = vector.broadcast %134 : vector<1x7xf32> to vector<2x7xf32>
    %136 = arith.addf %133, %135 : vector<2x7xf32>
    %137 = vector.extract_strided_slice %136 {offsets = [0, 0], sizes = [2, 1], strides = [1, 1]} : vector<2x7xf32> to vector<2x1xf32>
    %138 = vector.extract_strided_slice %136 {offsets = [0, 1], sizes = [2, 6], strides = [1, 1]} : vector<2x7xf32> to vector<2x6xf32>
    %cst_105 = arith.constant dense<0.000000e+00> : vector<2xf32>
    %139 = vector.multi_reduction <add>, %138, %cst_105 [1] : vector<2x6xf32> to vector<2xf32>
    %140 = vector.shape_cast %139 : vector<2xf32> to vector<2x1xf32>
    %cst_106 = arith.constant 6.000000e+00 : f32
    %141 = vector.broadcast %cst_106 : f32 to vector<2x1xf32>
    %142 = arith.divf %140, %141 : vector<2x1xf32>
    %143 = vector.broadcast %142 : vector<2x1xf32> to vector<2x6xf32>
    %144 = arith.subf %138, %143 : vector<2x6xf32>
    %145 = vector.broadcast %137 : vector<2x1xf32> to vector<2x6xf32>
    %146 = arith.addf %145, %144 : vector<2x6xf32>
    %c0_107 = arith.constant 0 : index
    %c0_108 = arith.constant 0 : index
    %147 = vector.load %arg9[%c0_107, %c0_108] : memref<2x6xf32, #tpu.memory_space<vmem>>, vector<2x6xf32>
    tpu.vector_store %arg9[%c0_107, %c0_108], %146 {strides = array<i32>} : memref<2x6xf32, #tpu.memory_space<vmem>>, vector<2x6xf32>,
    return
  }
}

</mosaic_0001>

<llo_original>
// kernel: dueling_dqn_forward.3
$region0: #{dueling_dqn_forward.3}
  #allocation0 [shape = 'u32[]', space=smem, size = 0x4, offset = 0x4, fixed_abs, tag = 'smem constant byte address 0x4 - core index']
  #allocation1 [shape = 'u32[144,128]{1,0:T(1,128)}', space=vmem, size = 0x12000, scoped, tag = 'internal scratch']
  %s0 = inlined_call_operand.vmem [shape: bf16[288,256], index: 0, kind: input, shape index: {}]
  %s1 = inlined_call_operand.vmem [shape: bf16[256,32], index: 1, kind: input, shape index: {}]
  %s2 = inlined_call_operand.vmem [shape: f32[1,32], index: 2, kind: input, shape index: {}]
  %s3 = inlined_call_operand.vmem [shape: bf16[288,32], index: 3, kind: output, shape index: {}]
  %s4 = sld [smem:[#allocation0]]
  $region22: #{dueling_dqn_forward.3} parent=0
    _
  %s6 = ssub.s32 1, %s4
  %s7 = scalar_select 0, %s6, %s4
  // Predicated region
  $region2: #{dueling_dqn_forward.3} parent=0 // pred_check
    _
  $region3: #{dueling_dqn_forward.3} parent=0 // pred_check_branch
    %9 = sbr.rel (0) target = $region5
  $region4: #{dueling_dqn_forward.3} parent=0 // pred_region
    _
  $region5: #{dueling_dqn_forward.3} parent=0 // pred_fallthru
    _
  // Predicated region
  $region6: #{dueling_dqn_forward.3} parent=0 // pred_check
    _
  $region7: #{dueling_dqn_forward.3} parent=0 // pred_check_branch
    %11 = sbr.rel (0) target = $region9
  $region8: #{dueling_dqn_forward.3} parent=0 // pred_region
    _
  $region9: #{dueling_dqn_forward.3} parent=0 // pred_fallthru
    _
  // Predicated region
  $region10: #{dueling_dqn_forward.3} parent=0 // pred_check
    _
  $region11: #{dueling_dqn_forward.3} parent=0 // pred_check_branch
    %13 = sbr.rel (0) target = $region13
  $region12: #{dueling_dqn_forward.3} parent=0 // pred_region
    _
  $region13: #{dueling_dqn_forward.3} parent=0 // pred_fallthru
    _
  %v15 = vld [vmem:[%s0] sm:$0xff]
  %v16 = vld [vmem:[%s0 + $0x8] sm:$0xff]
  %v17 = vld [vmem:[%s0 + $0x10] sm:$0xff]
  %v18 = vld [vmem:[%s0 + $0x18] sm:$0xff]
  %v19 = vld [vmem:[%s0 + $0x20] sm:$0xff]
  %v20 = vld [vmem:[%s0 + $0x28] sm:$0xff]
  %v21 = vld [vmem:[%s0 + $0x30] sm:$0xff]
  %v22 = vld [vmem:[%s0 + $0x38] sm:$0xff]
  %v23 = vld [vmem:[%s0 + $0x40] sm:$0xff]
  %v24 = vld [vmem:[%s0 + $0x48] sm:$0xff]
  %v25 = vld [vmem:[%s0 + $0x50] sm:$0xff]
  %v26 = vld [vmem:[%s0 + $0x58] sm:$0xff]
  %v27 = vld [vmem:[%s0 + $0x60] sm:$0xff]
  %v28 = vld [vmem:[%s0 + $0x68] sm:$0xff]
  %v29 = vld [vmem:[%s0 + $0x70] sm:$0xff]
  %v30 = vld [vmem:[%s0 + $0x78] sm:$0xff]
  %v31 = vld [vmem:[%s0 + $0x80] sm:$0xff]
  %v32 = vld [vmem:[%s0 + $0x88] sm:$0xff]
  %v33 = vld [vmem:[%s0 + $0x90] sm:$0xff]
  %v34 = vld [vmem:[%s0 + $0x98] sm:$0xff]
  %v35 = vld [vmem:[%s0 + $0xa0] sm:$0xff]
  %v36 = vld [vmem:[%s0 + $0xa8] sm:$0xff]
  %v37 = vld [vmem:[%s0 + $0xb0] sm:$0xff]
  %v38 = vld [vmem:[%s0 + $0xb8] sm:$0xff]
  %v39 = vld [vmem:[%s0 + $0xc0] sm:$0xff]
  %v40 = vld [vmem:[%s0 + $0xc8] sm:$0xff]
  %v41 = vld [vmem:[%s0 + $0xd0] sm:$0xff]
  %v42 = vld [vmem:[%s0 + $0xd8] sm:$0xff]
  %v43 = vld [vmem:[%s0 + $0xe0] sm:$0xff]
  %v44 = vld [vmem:[%s0 + $0xe8] sm:$0xff]
  %v45 = vld [vmem:[%s0 + $0xf0] sm:$0xff]
  %v46 = vld [vmem:[%s0 + $0xf8] sm:$0xff]
  %v47 = vld [vmem:[%s0 + $0x100] sm:$0xff]
  %v48 = vld [vmem:[%s0 + $0x108] sm:$0xff]
  %v49 = vld [vmem:[%s0 + $0x110] sm:$0xff]
  %v50 = vld [vmem:[%s0 + $0x118] sm:$0xff]
  %v51 = vld [vmem:[%s1] sm:$0xf]
  %v52 = vld [vmem:[%s1 + $0x4] sm:$0xf]
  %v53 = vld [vmem:[%s1 + $0x8] sm:$0xf]
  %v54 = vld [vmem:[%s1 + $0xc] sm:$0xf]
  %v55 = vld [vmem:[%s1 + $0x10] sm:$0xf]
  %v56 = vld [vmem:[%s1 + $0x14] sm:$0xf]
  %v57 = vld [vmem:[%s1 + $0x18] sm:$0xf]
  %v58 = vld [vmem:[%s1 + $0x1c] sm:$0xf]
  %v59 = vld [vmem:[%s1 + $0x20] sm:$0xf]
  %v60 = vld [vmem:[%s1 + $0x24] sm:$0xf]
  %v61 = vld [vmem:[%s1 + $0x28] sm:$0xf]
  %v62 = vld [vmem:[%s1 + $0x2c] sm:$0xf]
  %v63 = vld [vmem:[%s1 + $0x30] sm:$0xf]
  %v64 = vld [vmem:[%s1 + $0x34] sm:$0xf]
  %v65 = vld [vmem:[%s1 + $0x38] sm:$0xf]
  %v66 = vld [vmem:[%s1 + $0x3c] sm:$0xf]
  %v67 = vld [vmem:[%s1 + $0x40] sm:$0xf]
  %v68 = vld [vmem:[%s1 + $0x44] sm:$0xf]
  %v69 = vld [vmem:[%s1 + $0x48] sm:$0xf]
  %v70 = vld [vmem:[%s1 + $0x4c] sm:$0xf]
  %v71 = vld [vmem:[%s1 + $0x50] sm:$0xf]
  %v72 = vld [vmem:[%s1 + $0x54] sm:$0xf]
  %v73 = vld [vmem:[%s1 + $0x58] sm:$0xf]
  %v74 = vld [vmem:[%s1 + $0x5c] sm:$0xf]
  %v75 = vld [vmem:[%s1 + $0x60] sm:$0xf]
  %v76 = vld [vmem:[%s1 + $0x64] sm:$0xf]
  %v77 = vld [vmem:[%s1 + $0x68] sm:$0xf]
  %v78 = vld [vmem:[%s1 + $0x6c] sm:$0xf]
  %v79 = vld [vmem:[%s1 + $0x70] sm:$0xf]
  %v80 = vld [vmem:[%s1 + $0x74] sm:$0xf]
  %v81 = vld [vmem:[%s1 + $0x78] sm:$0xf]
  %v82 = vld [vmem:[%s1 + $0x7c] sm:$0xf]
  %v83 = vld [vmem:[%s2] sm:$0x1]
  %v85 = vlaneseq
  %v86 = vshrl.u32 %v85, 7
  %v87 = vsub.s32 0, %v86
  %v88 = vrot.slane %v83, %v87
  %v126 = vunpack.c.l.b16 %v15
  %v127 = vunpack.c.h.b16 %v15
  %v128 = vunpack.c.l.b16 %v16
  %v129 = vunpack.c.h.b16 %v16
  %v130 = vunpack.c.l.b16 %v17
  %v131 = vunpack.c.h.b16 %v17
  %v132 = vunpack.c.l.b16 %v18
  %v133 = vunpack.c.h.b16 %v18
  %v134 = vunpack.c.l.b16 %v19
  %v135 = vunpack.c.h.b16 %v19
  %v136 = vunpack.c.l.b16 %v20
  %v137 = vunpack.c.h.b16 %v20
  %v138 = vunpack.c.l.b16 %v21
  %v139 = vunpack.c.h.b16 %v21
  %v140 = vunpack.c.l.b16 %v22
  %v141 = vunpack.c.h.b16 %v22
  %v142 = vunpack.c.l.b16 %v23
  %v143 = vunpack.c.h.b16 %v23
  %v144 = vunpack.c.l.b16 %v24
  %v145 = vunpack.c.h.b16 %v24
  %v146 = vunpack.c.l.b16 %v25
  %v147 = vunpack.c.h.b16 %v25
  %v148 = vunpack.c.l.b16 %v26
  %v149 = vunpack.c.h.b16 %v26
  %v150 = vunpack.c.l.b16 %v27
  %v151 = vunpack.c.h.b16 %v27
  %v152 = vunpack.c.l.b16 %v28
  %v153 = vunpack.c.h.b16 %v28
  %v154 = vunpack.c.l.b16 %v29
  %v155 = vunpack.c.h.b16 %v29
  %v156 = vunpack.c.l.b16 %v30
  %v157 = vunpack.c.h.b16 %v30
  %v158 = vunpack.c.l.b16 %v31
  %v159 = vunpack.c.h.b16 %v31
  %v160 = vunpack.c.l.b16 %v32
  %v161 = vunpack.c.h.b16 %v32
  %v162 = vunpack.c.l.b16 %v33
  %v163 = vunpack.c.h.b16 %v33
  %v164 = vunpack.c.l.b16 %v34
  %v165 = vunpack.c.h.b16 %v34
  %v166 = vunpack.c.l.b16 %v35
  %v167 = vunpack.c.h.b16 %v35
  %v168 = vunpack.c.l.b16 %v36
  %v169 = vunpack.c.h.b16 %v36
  %v170 = vunpack.c.l.b16 %v37
  %v171 = vunpack.c.h.b16 %v37
  %v172 = vunpack.c.l.b16 %v38
  %v173 = vunpack.c.h.b16 %v38
  %v174 = vunpack.c.l.b16 %v39
  %v175 = vunpack.c.h.b16 %v39
  %v176 = vunpack.c.l.b16 %v40
  %v177 = vunpack.c.h.b16 %v40
  %v178 = vunpack.c.l.b16 %v41
  %v179 = vunpack.c.h.b16 %v41
  %v180 = vunpack.c.l.b16 %v42
  %v181 = vunpack.c.h.b16 %v42
  %v182 = vunpack.c.l.b16 %v43
  %v183 = vunpack.c.h.b16 %v43
  %v184 = vunpack.c.l.b16 %v44
  %v185 = vunpack.c.h.b16 %v44
  %v186 = vunpack.c.l.b16 %v45
  %v187 = vunpack.c.h.b16 %v45
  %v188 = vunpack.c.l.b16 %v46
  %v189 = vunpack.c.h.b16 %v46
  %v190 = vunpack.c.l.b16 %v47
  %v191 = vunpack.c.h.b16 %v47
  %v192 = vunpack.c.l.b16 %v48
  %v193 = vunpack.c.h.b16 %v48
  %v194 = vunpack.c.l.b16 %v49
  %v195 = vunpack.c.h.b16 %v49
  %v196 = vunpack.c.l.b16 %v50
  %v197 = vunpack.c.h.b16 %v50
  %v198 = vpack.c.b16 %v128, %v126
  %v199 = vpack.c.b16 %v129, %v127
  %v200 = vpack.c.b16 %v132, %v130
  %v201 = vpack.c.b16 %v133, %v131
  %v202 = vpack.c.b16 %v136, %v134
  %v203 = vpack.c.b16 %v137, %v135
  %v204 = vpack.c.b16 %v140, %v138
  %v205 = vpack.c.b16 %v141, %v139
  %v206 = vpack.c.b16 %v144, %v142
  %v207 = vpack.c.b16 %v145, %v143
  %v208 = vpack.c.b16 %v148, %v146
  %v209 = vpack.c.b16 %v149, %v147
  %v210 = vpack.c.b16 %v152, %v150
  %v211 = vpack.c.b16 %v153, %v151
  %v212 = vpack.c.b16 %v156, %v154
  %v213 = vpack.c.b16 %v157, %v155
  %v214 = vpack.c.b16 %v160, %v158
  %v215 = vpack.c.b16 %v161, %v159
  %v216 = vpack.c.b16 %v164, %v162
  %v217 = vpack.c.b16 %v165, %v163
  %v218 = vpack.c.b16 %v168, %v166
  %v219 = vpack.c.b16 %v169, %v167
  %v220 = vpack.c.b16 %v172, %v170
  %v221 = vpack.c.b16 %v173, %v171
  %v222 = vpack.c.b16 %v176, %v174
  %v223 = vpack.c.b16 %v177, %v175
  %v224 = vpack.c.b16 %v180, %v178
  %v225 = vpack.c.b16 %v181, %v179
  %v226 = vpack.c.b16 %v184, %v182
  %v227 = vpack.c.b16 %v185, %v183
  %v228 = vpack.c.b16 %v188, %v186
  %v229 = vpack.c.b16 %v189, %v187
  %v230 = vpack.c.b16 %v192, %v190
  %v231 = vpack.c.b16 %v193, %v191
  %v232 = vpack.c.b16 %v196, %v194
  %v233 = vpack.c.b16 %v197, %v195
  %v302 = vunpack.c.l.b16 %v51
  %v303 = vunpack.c.l.b16 %v52
  %v304 = vunpack.c.l.b16 %v53
  %v305 = vunpack.c.l.b16 %v54
  %v306 = vunpack.c.l.b16 %v55
  %v307 = vunpack.c.l.b16 %v56
  %v308 = vunpack.c.l.b16 %v57
  %v309 = vunpack.c.l.b16 %v58
  %v310 = vunpack.c.l.b16 %v59
  %v311 = vunpack.c.l.b16 %v60
  %v312 = vunpack.c.l.b16 %v61
  %v313 = vunpack.c.l.b16 %v62
  %v314 = vunpack.c.l.b16 %v63
  %v315 = vunpack.c.l.b16 %v64
  %v316 = vunpack.c.l.b16 %v65
  %v317 = vunpack.c.l.b16 %v66
  %v318 = vunpack.c.l.b16 %v67
  %v319 = vunpack.c.l.b16 %v68
  %v320 = vunpack.c.l.b16 %v69
  %v321 = vunpack.c.l.b16 %v70
  %v322 = vunpack.c.l.b16 %v71
  %v323 = vunpack.c.l.b16 %v72
  %v324 = vunpack.c.l.b16 %v73
  %v325 = vunpack.c.l.b16 %v74
  %v326 = vunpack.c.l.b16 %v75
  %v327 = vunpack.c.l.b16 %v76
  %v328 = vunpack.c.l.b16 %v77
  %v329 = vunpack.c.l.b16 %v78
  %v330 = vunpack.c.l.b16 %v79
  %v331 = vunpack.c.l.b16 %v80
  %v332 = vunpack.c.l.b16 %v81
  %v333 = vunpack.c.l.b16 %v82
  %v334 = vpack.c.b16 %v303, %v302
  %v335 = vpack.c.b16 %v305, %v304
  %v336 = vpack.c.b16 %v307, %v306
  %v337 = vpack.c.b16 %v309, %v308
  %v338 = vpack.c.b16 %v311, %v310
  %v339 = vpack.c.b16 %v313, %v312
  %v340 = vpack.c.b16 %v315, %v314
  %v341 = vpack.c.b16 %v317, %v316
  %v342 = vpack.c.b16 %v319, %v318
  %v343 = vpack.c.b16 %v321, %v320
  %v344 = vpack.c.b16 %v323, %v322
  %v345 = vpack.c.b16 %v325, %v324
  %v346 = vpack.c.b16 %v327, %v326
  %v347 = vpack.c.b16 %v329, %v328
  %v348 = vpack.c.b16 %v331, %v330
  %v349 = vpack.c.b16 %v333, %v332
  %366 = vmatprep.subr.bf16.mxu0 0
  %367 = vmatpush1.bf16.msra.mxu0 %v341
  %368 = vmatprep.subr.bf16.mxu0 0
  %369 = vmatpush1.bf16.msra.mxu0 %v340
  %370 = vmatprep.subr.bf16.mxu0 0
  %371 = vmatpush1.bf16.msra.mxu0 %v339
  %372 = vmatprep.subr.bf16.mxu0 0
  %373 = vmatpush1.bf16.msra.mxu0 %v338
  %374 = vmatprep.subr.bf16.mxu0 0
  %375 = vmatpush1.bf16.msra.mxu0 %v337
  %376 = vmatprep.subr.bf16.mxu0 0
  %377 = vmatpush1.bf16.msra.mxu0 %v336
  %378 = vmatprep.subr.bf16.mxu0 0
  %379 = vmatpush1.bf16.msra.mxu0 %v335
  %380 = vmatprep.subr.bf16.mxu0 0
  %381 = vmatpush1.bf16.msra.mxu0 %v334
  %382 = vmatprep.subr.bf16.mxu0 0
  %383 = vmatpush2.bf16.msra.mxu0 %v349
  %384 = vmatprep.subr.bf16.mxu0 0
  %385 = vmatpush2.bf16.msra.mxu0 %v348
  %386 = vmatprep.subr.bf16.mxu0 0
  %387 = vmatpush2.bf16.msra.mxu0 %v347
  %388 = vmatprep.subr.bf16.mxu0 0
  %389 = vmatpush2.bf16.msra.mxu0 %v346
  %390 = vmatprep.subr.bf16.mxu0 0
  %391 = vmatpush2.bf16.msra.mxu0 %v345
  %392 = vmatprep.subr.bf16.mxu0 0
  %393 = vmatpush2.bf16.msra.mxu0 %v344
  %394 = vmatprep.subr.bf16.mxu0 0
  %395 = vmatpush2.bf16.msra.mxu0 %v343
  %396 = vmatprep.subr.bf16.mxu0 0
  %397 = vmatpush2.bf16.msra.mxu0 %v342
  %398 = vmatprep.mubr.bf16.mxu0 %v199
  %399 = vmatmul.mubr.bf16.gmra.mxu0 %v198
  %v400 = vpop.f32.mrf.mxu0
  %v401 = vadd.f32 %v88, %v400
  %v402 = vpop.f32.mrf.mxu0
  %v403 = vpop.f32.mrf.mxu0
  %v404 = vadd.f32 %v88, %v403
  %v405 = vpop.f32.mrf.mxu0
  %406 = vmatprep.mubr.bf16.mxu0 %v201
  %407 = vmatmul.mubr.bf16.gmra.mxu0 %v200
  %v408 = vpop.f32.mrf.mxu0
  %v409 = vadd.f32 %v88, %v408
  %v410 = vpop.f32.mrf.mxu0
  %v411 = vpop.f32.mrf.mxu0
  %v412 = vadd.f32 %v88, %v411
  %v413 = vpop.f32.mrf.mxu0
  %414 = vmatprep.mubr.bf16.mxu0 %v203
  %415 = vmatmul.mubr.bf16.gmra.mxu0 %v202
  %v416 = vpop.f32.mrf.mxu0
  %v417 = vadd.f32 %v88, %v416
  %v418 = vpop.f32.mrf.mxu0
  %v419 = vpop.f32.mrf.mxu0
  %v420 = vadd.f32 %v88, %v419
  %v421 = vpop.f32.mrf.mxu0
  %422 = vmatprep.mubr.bf16.mxu0 %v205
  %423 = vmatmul.mubr.bf16.gmra.mxu0 %v204
  %v424 = vpop.f32.mrf.mxu0
  %v425 = vadd.f32 %v88, %v424
  %v426 = vpop.f32.mrf.mxu0
  %v427 = vpop.f32.mrf.mxu0
  %v428 = vadd.f32 %v88, %v427
  %v429 = vpop.f32.mrf.mxu0
  %430 = vmatprep.mubr.bf16.mxu0 %v207
  %431 = vmatmul.mubr.bf16.gmra.mxu0 %v206
  %v432 = vpop.f32.mrf.mxu0
  %v433 = vadd.f32 %v88, %v432
  %v434 = vpop.f32.mrf.mxu0
  %v435 = vpop.f32.mrf.mxu0
  %v436 = vadd.f32 %v88, %v435
  %v437 = vpop.f32.mrf.mxu0
  %438 = vmatprep.mubr.bf16.mxu0 %v209
  %439 = vmatmul.mubr.bf16.gmra.mxu0 %v208
  %v440 = vpop.f32.mrf.mxu0
  %v441 = vadd.f32 %v88, %v440
  %v442 = vpop.f32.mrf.mxu0
  %v443 = vpop.f32.mrf.mxu0
  %v444 = vadd.f32 %v88, %v443
  %v445 = vpop.f32.mrf.mxu0
  %446 = vmatprep.mubr.bf16.mxu0 %v211
  %447 = vmatmul.mubr.bf16.gmra.mxu0 %v210
  %v448 = vpop.f32.mrf.mxu0
  %v449 = vadd.f32 %v88, %v448
  %v450 = vpop.f32.mrf.mxu0
  %v451 = vpop.f32.mrf.mxu0
  %v452 = vadd.f32 %v88, %v451
  %v453 = vpop.f32.mrf.mxu0
  %454 = vmatprep.mubr.bf16.mxu0 %v213
  %455 = vmatmul.mubr.bf16.gmra.mxu0 %v212
  %v456 = vpop.f32.mrf.mxu0
  %v457 = vadd.f32 %v88, %v456
  %v458 = vpop.f32.mrf.mxu0
  %v459 = vpop.f32.mrf.mxu0
  %v460 = vadd.f32 %v88, %v459
  %v461 = vpop.f32.mrf.mxu0
  %462 = vmatprep.mubr.bf16.mxu0 %v215
  %463 = vmatmul.mubr.bf16.gmra.mxu0 %v214
  %v464 = vpop.f32.mrf.mxu0
  %v465 = vadd.f32 %v88, %v464
  %v466 = vpop.f32.mrf.mxu0
  %v467 = vpop.f32.mrf.mxu0
  %v468 = vadd.f32 %v88, %v467
  %v469 = vpop.f32.mrf.mxu0
  %470 = vmatprep.mubr.bf16.mxu0 %v217
  %471 = vmatmul.mubr.bf16.gmra.mxu0 %v216
  %v472 = vpop.f32.mrf.mxu0
  %v473 = vadd.f32 %v88, %v472
  %v474 = vpop.f32.mrf.mxu0
  %v475 = vpop.f32.mrf.mxu0
  %v476 = vadd.f32 %v88, %v475
  %v477 = vpop.f32.mrf.mxu0
  %478 = vmatprep.mubr.bf16.mxu0 %v219
  %479 = vmatmul.mubr.bf16.gmra.mxu0 %v218
  %v480 = vpop.f32.mrf.mxu0
  %v481 = vadd.f32 %v88, %v480
  %v482 = vpop.f32.mrf.mxu0
  %v483 = vpop.f32.mrf.mxu0
  %v484 = vadd.f32 %v88, %v483
  %v485 = vpop.f32.mrf.mxu0
  %486 = vmatprep.mubr.bf16.mxu0 %v221
  %487 = vmatmul.mubr.bf16.gmra.mxu0 %v220
  %v488 = vpop.f32.mrf.mxu0
  %v489 = vadd.f32 %v88, %v488
  %v490 = vpop.f32.mrf.mxu0
  %v491 = vpop.f32.mrf.mxu0
  %v492 = vadd.f32 %v88, %v491
  %v493 = vpop.f32.mrf.mxu0
  %494 = vmatprep.mubr.bf16.mxu0 %v223
  %495 = vmatmul.mubr.bf16.gmra.mxu0 %v222
  %v496 = vpop.f32.mrf.mxu0
  %v497 = vadd.f32 %v88, %v496
  %v498 = vpop.f32.mrf.mxu0
  %v499 = vpop.f32.mrf.mxu0
  %v500 = vadd.f32 %v88, %v499
  %v501 = vpop.f32.mrf.mxu0
  %502 = vmatprep.mubr.bf16.mxu0 %v225
  %503 = vmatmul.mubr.bf16.gmra.mxu0 %v224
  %v504 = vpop.f32.mrf.mxu0
  %v505 = vadd.f32 %v88, %v504
  %v506 = vpop.f32.mrf.mxu0
  %v507 = vpop.f32.mrf.mxu0
  %v508 = vadd.f32 %v88, %v507
  %v509 = vpop.f32.mrf.mxu0
  %510 = vmatprep.mubr.bf16.mxu0 %v227
  %511 = vmatmul.mubr.bf16.gmra.mxu0 %v226
  %v512 = vpop.f32.mrf.mxu0
  %v513 = vadd.f32 %v88, %v512
  %v514 = vpop.f32.mrf.mxu0
  %v515 = vpop.f32.mrf.mxu0
  %v516 = vadd.f32 %v88, %v515
  %v517 = vpop.f32.mrf.mxu0
  %518 = vmatprep.mubr.bf16.mxu0 %v229
  %519 = vmatmul.mubr.bf16.gmra.mxu0 %v228
  %v520 = vpop.f32.mrf.mxu0
  %v521 = vadd.f32 %v88, %v520
  %v522 = vpop.f32.mrf.mxu0
  %v523 = vpop.f32.mrf.mxu0
  %v524 = vadd.f32 %v88, %v523
  %v525 = vpop.f32.mrf.mxu0
  %526 = vmatprep.mubr.bf16.mxu0 %v231
  %527 = vmatmul.mubr.bf16.gmra.mxu0 %v230
  %v528 = vpop.f32.mrf.mxu0
  %v529 = vadd.f32 %v88, %v528
  %v530 = vpop.f32.mrf.mxu0
  %v531 = vpop.f32.mrf.mxu0
  %v532 = vadd.f32 %v88, %v531
  %v533 = vpop.f32.mrf.mxu0
  %534 = vmatprep.mubr.bf16.mxu0 %v233
  %535 = vmatmul.mubr.bf16.gmra.mxu0 %v232
  %v536 = vpop.f32.mrf.mxu0
  %v537 = vadd.f32 %v88, %v536
  %v538 = vpop.f32.mrf.mxu0
  %v539 = vpop.f32.mrf.mxu0
  %v540 = vadd.f32 %v88, %v539
  %v541 = vpop.f32.mrf.mxu0
  %542 = vdwg.mxu0
  %v543 = vmax.f32 %v401, 0.0
  %v544 = vmax.f32 %v404, 0.0
  %v545 = vmax.f32 %v409, 0.0
  %v546 = vmax.f32 %v412, 0.0
  %v547 = vmax.f32 %v417, 0.0
  %v548 = vmax.f32 %v420, 0.0
  %v549 = vmax.f32 %v425, 0.0
  %v550 = vmax.f32 %v428, 0.0
  %v551 = vmax.f32 %v433, 0.0
  %v552 = vmax.f32 %v436, 0.0
  %v553 = vmax.f32 %v441, 0.0
  %v554 = vmax.f32 %v444, 0.0
  %v555 = vmax.f32 %v449, 0.0
  %v556 = vmax.f32 %v452, 0.0
  %v557 = vmax.f32 %v457, 0.0
  %v558 = vmax.f32 %v460, 0.0
  %v559 = vmax.f32 %v465, 0.0
  %v560 = vmax.f32 %v468, 0.0
  %v561 = vmax.f32 %v473, 0.0
  %v562 = vmax.f32 %v476, 0.0
  %v563 = vmax.f32 %v481, 0.0
  %v564 = vmax.f32 %v484, 0.0
  %v565 = vmax.f32 %v489, 0.0
  %v566 = vmax.f32 %v492, 0.0
  %v567 = vmax.f32 %v497, 0.0
  %v568 = vmax.f32 %v500, 0.0
  %v569 = vmax.f32 %v505, 0.0
  %v570 = vmax.f32 %v508, 0.0
  %v571 = vmax.f32 %v513, 0.0
  %v572 = vmax.f32 %v516, 0.0
  %v573 = vmax.f32 %v521, 0.0
  %v574 = vmax.f32 %v524, 0.0
  %v575 = vmax.f32 %v529, 0.0
  %v576 = vmax.f32 %v532, 0.0
  %v577 = vmax.f32 %v537, 0.0
  %v578 = vmax.f32 %v540, 0.0
  %v579 = vpack.c.bf16 %v544, %v543
  %v580 = vpack.c.bf16 %v546, %v545
  %v581 = vpack.c.bf16 %v548, %v547
  %v582 = vpack.c.bf16 %v550, %v549
  %v583 = vpack.c.bf16 %v552, %v551
  %v584 = vpack.c.bf16 %v554, %v553
  %v585 = vpack.c.bf16 %v556, %v555
  %v586 = vpack.c.bf16 %v558, %v557
  %v587 = vpack.c.bf16 %v560, %v559
  %v588 = vpack.c.bf16 %v562, %v561
  %v589 = vpack.c.bf16 %v564, %v563
  %v590 = vpack.c.bf16 %v566, %v565
  %v591 = vpack.c.bf16 %v568, %v567
  %v592 = vpack.c.bf16 %v570, %v569
  %v593 = vpack.c.bf16 %v572, %v571
  %v594 = vpack.c.bf16 %v574, %v573
  %v595 = vpack.c.bf16 %v576, %v575
  %v596 = vpack.c.bf16 %v578, %v577
  %v615 = vunpack.c.l.b16 %v579
  %v616 = vunpack.c.h.b16 %v579
  %v617 = vunpack.c.l.b16 %v580
  %v618 = vunpack.c.h.b16 %v580
  %v619 = vunpack.c.l.b16 %v581
  %v620 = vunpack.c.h.b16 %v581
  %v621 = vunpack.c.l.b16 %v582
  %v622 = vunpack.c.h.b16 %v582
  %v623 = vunpack.c.l.b16 %v583
  %v624 = vunpack.c.h.b16 %v583
  %v625 = vunpack.c.l.b16 %v584
  %v626 = vunpack.c.h.b16 %v584
  %v627 = vunpack.c.l.b16 %v585
  %v628 = vunpack.c.h.b16 %v585
  %v629 = vunpack.c.l.b16 %v586
  %v630 = vunpack.c.h.b16 %v586
  %v631 = vunpack.c.l.b16 %v587
  %v632 = vunpack.c.h.b16 %v587
  %v633 = vunpack.c.l.b16 %v588
  %v634 = vunpack.c.h.b16 %v588
  %v635 = vunpack.c.l.b16 %v589
  %v636 = vunpack.c.h.b16 %v589
  %v637 = vunpack.c.l.b16 %v590
  %v638 = vunpack.c.h.b16 %v590
  %v639 = vunpack.c.l.b16 %v591
  %v640 = vunpack.c.h.b16 %v591
  %v641 = vunpack.c.l.b16 %v592
  %v642 = vunpack.c.h.b16 %v592
  %v643 = vunpack.c.l.b16 %v593
  %v644 = vunpack.c.h.b16 %v593
  %v645 = vunpack.c.l.b16 %v594
  %v646 = vunpack.c.h.b16 %v594
  %v647 = vunpack.c.l.b16 %v595
  %v648 = vunpack.c.h.b16 %v595
  %v649 = vunpack.c.l.b16 %v596
  %v650 = vunpack.c.h.b16 %v596
  %v651 = vpack.c.b16 %v615, %v615
  %v652 = vpack.c.b16 %v616, %v616
  %v653 = vpack.c.b16 %v617, %v617
  %v654 = vpack.c.b16 %v618, %v618
  %v655 = vpack.c.b16 %v619, %v619
  %v656 = vpack.c.b16 %v620, %v620
  %v657 = vpack.c.b16 %v621, %v621
  %v658 = vpack.c.b16 %v622, %v622
  %v659 = vpack.c.b16 %v623, %v623
  %v660 = vpack.c.b16 %v624, %v624
  %v661 = vpack.c.b16 %v625, %v625
  %v662 = vpack.c.b16 %v626, %v626
  %v663 = vpack.c.b16 %v627, %v627
  %v664 = vpack.c.b16 %v628, %v628
  %v665 = vpack.c.b16 %v629, %v629
  %v666 = vpack.c.b16 %v630, %v630
  %v667 = vpack.c.b16 %v631, %v631
  %v668 = vpack.c.b16 %v632, %v632
  %v669 = vpack.c.b16 %v633, %v633
  %v670 = vpack.c.b16 %v634, %v634
  %v671 = vpack.c.b16 %v635, %v635
  %v672 = vpack.c.b16 %v636, %v636
  %v673 = vpack.c.b16 %v637, %v637
  %v674 = vpack.c.b16 %v638, %v638
  %v675 = vpack.c.b16 %v639, %v639
  %v676 = vpack.c.b16 %v640, %v640
  %v677 = vpack.c.b16 %v641, %v641
  %v678 = vpack.c.b16 %v642, %v642
  %v679 = vpack.c.b16 %v643, %v643
  %v680 = vpack.c.b16 %v644, %v644
  %v681 = vpack.c.b16 %v645, %v645
  %v682 = vpack.c.b16 %v646, %v646
  %v683 = vpack.c.b16 %v647, %v647
  %v684 = vpack.c.b16 %v648, %v648
  %v685 = vpack.c.b16 %v649, %v649
  %v686 = vpack.c.b16 %v650, %v650
  %vm723 = vcmask 257024
  %724 = vst.msk [vmem:[%s3] sm:$0xf] %vm723, %v651
  %725 = vst.msk [vmem:[%s3 + $0x4] sm:$0xf] %vm723, %v652
  %726 = vst.msk [vmem:[%s3 + $0x8] sm:$0xf] %vm723, %v653
  %727 = vst.msk [vmem:[%s3 + $0xc] sm:$0xf] %vm723, %v654
  %728 = vst.msk [vmem:[%s3 + $0x10] sm:$0xf] %vm723, %v655
  %729 = vst.msk [vmem:[%s3 + $0x14] sm:$0xf] %vm723, %v656
  %730 = vst.msk [vmem:[%s3 + $0x18] sm:$0xf] %vm723, %v657
  %731 = vst.msk [vmem:[%s3 + $0x1c] sm:$0xf] %vm723, %v658
  %732 = vst.msk [vmem:[%s3 + $0x20] sm:$0xf] %vm723, %v659
  %733 = vst.msk [vmem:[%s3 + $0x24] sm:$0xf] %vm723, %v660
  %734 = vst.msk [vmem:[%s3 + $0x28] sm:$0xf] %vm723, %v661
  %735 = vst.msk [vmem:[%s3 + $0x2c] sm:$0xf] %vm723, %v662
  %736 = vst.msk [vmem:[%s3 + $0x30] sm:$0xf] %vm723, %v663
  %737 = vst.msk [vmem:[%s3 + $0x34] sm:$0xf] %vm723, %v664
  %738 = vst.msk [vmem:[%s3 + $0x38] sm:$0xf] %vm723, %v665
  %739 = vst.msk [vmem:[%s3 + $0x3c] sm:$0xf] %vm723, %v666
  %740 = vst.msk [vmem:[%s3 + $0x40] sm:$0xf] %vm723, %v667
  %741 = vst.msk [vmem:[%s3 + $0x44] sm:$0xf] %vm723, %v668
  %742 = vst.msk [vmem:[%s3 + $0x48] sm:$0xf] %vm723, %v669
  %743 = vst.msk [vmem:[%s3 + $0x4c] sm:$0xf] %vm723, %v670
  %744 = vst.msk [vmem:[%s3 + $0x50] sm:$0xf] %vm723, %v671
  %745 = vst.msk [vmem:[%s3 + $0x54] sm:$0xf] %vm723, %v672
  %746 = vst.msk [vmem:[%s3 + $0x58] sm:$0xf] %vm723, %v673
  %747 = vst.msk [vmem:[%s3 + $0x5c] sm:$0xf] %vm723, %v674
  %748 = vst.msk [vmem:[%s3 + $0x60] sm:$0xf] %vm723, %v675
  %749 = vst.msk [vmem:[%s3 + $0x64] sm:$0xf] %vm723, %v676
  %750 = vst.msk [vmem:[%s3 + $0x68] sm:$0xf] %vm723, %v677
  %751 = vst.msk [vmem:[%s3 + $0x6c] sm:$0xf] %vm723, %v678
  %752 = vst.msk [vmem:[%s3 + $0x70] sm:$0xf] %vm723, %v679
  %753 = vst.msk [vmem:[%s3 + $0x74] sm:$0xf] %vm723, %v680
  %754 = vst.msk [vmem:[%s3 + $0x78] sm:$0xf] %vm723, %v681
  %755 = vst.msk [vmem:[%s3 + $0x7c] sm:$0xf] %vm723, %v682
  %756 = vst.msk [vmem:[%s3 + $0x80] sm:$0xf] %vm723, %v683
  %757 = vst.msk [vmem:[%s3 + $0x84] sm:$0xf] %vm723, %v684
  %758 = vst.msk [vmem:[%s3 + $0x88] sm:$0xf] %vm723, %v685
  %759 = vst.msk [vmem:[%s3 + $0x8c] sm:$0xf] %vm723, %v686
  // Predicated region
  $region14: #{dueling_dqn_forward.3} parent=0 // pred_check
    _
  $region15: #{dueling_dqn_forward.3} parent=0 // pred_check_branch
    %761 = sbr.rel (0) target = $region17
  $region16: #{dueling_dqn_forward.3} parent=0 // pred_region
    _
  $region17: #{dueling_dqn_forward.3} parent=0 // pred_fallthru
    _
  // Predicated region
  $region18: #{dueling_dqn_forward.3} parent=0 // pred_check
    _
  $region19: #{dueling_dqn_forward.3} parent=0 // pred_check_branch
    %763 = sbr.rel (0) target = $region21
  $region20: #{dueling_dqn_forward.3} parent=0 // pred_region
    _
  $region21: #{dueling_dqn_forward.3} parent=0 // pred_fallthru
    _

// kernel: dueling_dqn_forward.4
$region0: #{dueling_dqn_forward.4}
  #allocation0 [shape = 'u32[]', space=smem, size = 0x4, offset = 0x4, fixed_abs, tag = 'smem constant byte address 0x4 - core index']
  #allocation1 [shape = 'u32[144,128]{1,0:T(1,128)}', space=vmem, size = 0x12000, scoped, tag = 'internal scratch']
  %s0 = inlined_call_operand.vmem [shape: bf16[50,512], index: 0, kind: input, shape index: {}]
  %s1 = inlined_call_operand.vmem [shape: bf16[512,64], index: 1, kind: input, shape index: {}]
  %s2 = inlined_call_operand.vmem [shape: f32[1,64], index: 2, kind: input, shape index: {}]
  %s3 = inlined_call_operand.vmem [shape: bf16[50,64], index: 3, kind: output, shape index: {}]
  %s4 = sld [smem:[#allocation0]]
  $region22: #{dueling_dqn_forward.4} parent=0
    _
  %s6 = ssub.s32 1, %s4
  %s7 = scalar_select 0, %s6, %s4
  // Predicated region
  $region2: #{dueling_dqn_forward.4} parent=0 // pred_check
    _
  $region3: #{dueling_dqn_forward.4} parent=0 // pred_check_branch
    %9 = sbr.rel (0) target = $region5
  $region4: #{dueling_dqn_forward.4} parent=0 // pred_region
    _
  $region5: #{dueling_dqn_forward.4} parent=0 // pred_fallthru
    _
  // Predicated region
  $region6: #{dueling_dqn_forward.4} parent=0 // pred_check
    _
  $region7: #{dueling_dqn_forward.4} parent=0 // pred_check_branch
    %11 = sbr.rel (0) target = $region9
  $region8: #{dueling_dqn_forward.4} parent=0 // pred_region
    _
  $region9: #{dueling_dqn_forward.4} parent=0 // pred_fallthru
    _
  // Predicated region
  $region10: #{dueling_dqn_forward.4} parent=0 // pred_check
    _
  $region11: #{dueling_dqn_forward.4} parent=0 // pred_check_branch
    %13 = sbr.rel (0) target = $region13
  $region12: #{dueling_dqn_forward.4} parent=0 // pred_region
    _
  $region13: #{dueling_dqn_forward.4} parent=0 // pred_fallthru
    _
  %v15 = vld [vmem:[%s0] sm:$0xff]
  %v16 = vld [vmem:[%s0 + $0x8] sm:$0xff]
  %v17 = vld [vmem:[%s0 + $0x10] sm:$0xff]
  %v18 = vld [vmem:[%s0 + $0x18] sm:$0xff]
  %v19 = vld [vmem:[%s0 + $0x20] sm:$0xff]
  %v20 = vld [vmem:[%s0 + $0x28] sm:$0xff]
  %v21 = vld [vmem:[%s0 + $0x30] sm:$0xff]
  %v22 = vld [vmem:[%s0 + $0x38] sm:$0xff]
  %v23 = vld [vmem:[%s0 + $0x40] sm:$0xff]
  %v24 = vld [vmem:[%s0 + $0x48] sm:$0xff]
  %v25 = vld [vmem:[%s0 + $0x50] sm:$0xff]
  %v26 = vld [vmem:[%s0 + $0x58] sm:$0xff]
  %v27 = vld [vmem:[%s0 + $0x60] sm:$0x11]
  %v28 = vld [vmem:[%s0 + $0x68] sm:$0x11]
  %v29 = vld [vmem:[%s1] sm:$0xf]
  %v30 = vld [vmem:[%s1 + $0x4] sm:$0xf]
  %v31 = vld [vmem:[%s1 + $0x8] sm:$0xf]
  %v32 = vld [vmem:[%s1 + $0xc] sm:$0xf]
  %v33 = vld [vmem:[%s1 + $0x10] sm:$0xf]
  %v34 = vld [vmem:[%s1 + $0x14] sm:$0xf]
  %v35 = vld [vmem:[%s1 + $0x18] sm:$0xf]
  %v36 = vld [vmem:[%s1 + $0x1c] sm:$0xf]
  %v37 = vld [vmem:[%s1 + $0x20] sm:$0xf]
  %v38 = vld [vmem:[%s1 + $0x24] sm:$0xf]
  %v39 = vld [vmem:[%s1 + $0x28] sm:$0xf]
  %v40 = vld [vmem:[%s1 + $0x2c] sm:$0xf]
  %v41 = vld [vmem:[%s1 + $0x30] sm:$0xf]
  %v42 = vld [vmem:[%s1 + $0x34] sm:$0xf]
  %v43 = vld [vmem:[%s1 + $0x38] sm:$0xf]
  %v44 = vld [vmem:[%s1 + $0x3c] sm:$0xf]
  %v45 = vld [vmem:[%s1 + $0x40] sm:$0xf]
  %v46 = vld [vmem:[%s1 + $0x44] sm:$0xf]
  %v47 = vld [vmem:[%s1 + $0x48] sm:$0xf]
  %v48 = vld [vmem:[%s1 + $0x4c] sm:$0xf]
  %v49 = vld [vmem:[%s1 + $0x50] sm:$0xf]
  %v50 = vld [vmem:[%s1 + $0x54] sm:$0xf]
  %v51 = vld [vmem:[%s1 + $0x58] sm:$0xf]
  %v52 = vld [vmem:[%s1 + $0x5c] sm:$0xf]
  %v53 = vld [vmem:[%s1 + $0x60] sm:$0xf]
  %v54 = vld [vmem:[%s1 + $0x64] sm:$0xf]
  %v55 = vld [vmem:[%s1 + $0x68] sm:$0xf]
  %v56 = vld [vmem:[%s1 + $0x6c] sm:$0xf]
  %v57 = vld [vmem:[%s1 + $0x70] sm:$0xf]
  %v58 = vld [vmem:[%s1 + $0x74] sm:$0xf]
  %v59 = vld [vmem:[%s1 + $0x78] sm:$0xf]
  %v60 = vld [vmem:[%s1 + $0x7c] sm:$0xf]
  %v61 = vld [vmem:[%s1 + $0x80] sm:$0xf]
  %v62 = vld [vmem:[%s1 + $0x84] sm:$0xf]
  %v63 = vld [vmem:[%s1 + $0x88] sm:$0xf]
  %v64 = vld [vmem:[%s1 + $0x8c] sm:$0xf]
  %v65 = vld [vmem:[%s1 + $0x90] sm:$0xf]
  %v66 = vld [vmem:[%s1 + $0x94] sm:$0xf]
  %v67 = vld [vmem:[%s1 + $0x98] sm:$0xf]
  %v68 = vld [vmem:[%s1 + $0x9c] sm:$0xf]
  %v69 = vld [vmem:[%s1 + $0xa0] sm:$0xf]
  %v70 = vld [vmem:[%s1 + $0xa4] sm:$0xf]
  %v71 = vld [vmem:[%s1 + $0xa8] sm:$0xf]
  %v72 = vld [vmem:[%s1 + $0xac] sm:$0xf]
  %v73 = vld [vmem:[%s1 + $0xb0] sm:$0xf]
  %v74 = vld [vmem:[%s1 + $0xb4] sm:$0xf]
  %v75 = vld [vmem:[%s1 + $0xb8] sm:$0xf]
  %v76 = vld [vmem:[%s1 + $0xbc] sm:$0xf]
  %v77 = vld [vmem:[%s1 + $0xc0] sm:$0xf]
  %v78 = vld [vmem:[%s1 + $0xc4] sm:$0xf]
  %v79 = vld [vmem:[%s1 + $0xc8] sm:$0xf]
  %v80 = vld [vmem:[%s1 + $0xcc] sm:$0xf]
  %v81 = vld [vmem:[%s1 + $0xd0] sm:$0xf]
  %v82 = vld [vmem:[%s1 + $0xd4] sm:$0xf]
  %v83 = vld [vmem:[%s1 + $0xd8] sm:$0xf]
  %v84 = vld [vmem:[%s1 + $0xdc] sm:$0xf]
  %v85 = vld [vmem:[%s1 + $0xe0] sm:$0xf]
  %v86 = vld [vmem:[%s1 + $0xe4] sm:$0xf]
  %v87 = vld [vmem:[%s1 + $0xe8] sm:$0xf]
  %v88 = vld [vmem:[%s1 + $0xec] sm:$0xf]
  %v89 = vld [vmem:[%s1 + $0xf0] sm:$0xf]
  %v90 = vld [vmem:[%s1 + $0xf4] sm:$0xf]
  %v91 = vld [vmem:[%s1 + $0xf8] sm:$0xf]
  %v92 = vld [vmem:[%s1 + $0xfc] sm:$0xf]
  %v93 = vld [vmem:[%s2] sm:$0x1]
  %v95 = vlaneseq
  %v96 = vshrl.u32 %v95, 7
  %v97 = vsub.s32 0, %v96
  %v98 = vrot.slane %v93, %v97
  %v114 = vunpack.c.l.b16 %v15
  %v115 = vunpack.c.h.b16 %v15
  %v116 = vunpack.c.l.b16 %v16
  %v117 = vunpack.c.h.b16 %v16
  %v118 = vunpack.c.l.b16 %v17
  %v119 = vunpack.c.h.b16 %v17
  %v120 = vunpack.c.l.b16 %v18
  %v121 = vunpack.c.h.b16 %v18
  %v122 = vunpack.c.l.b16 %v19
  %v123 = vunpack.c.h.b16 %v19
  %v124 = vunpack.c.l.b16 %v20
  %v125 = vunpack.c.h.b16 %v20
  %v126 = vunpack.c.l.b16 %v21
  %v127 = vunpack.c.h.b16 %v21
  %v128 = vunpack.c.l.b16 %v22
  %v129 = vunpack.c.h.b16 %v22
  %v130 = vunpack.c.l.b16 %v23
  %v131 = vunpack.c.h.b16 %v23
  %v132 = vunpack.c.l.b16 %v24
  %v133 = vunpack.c.h.b16 %v24
  %v134 = vunpack.c.l.b16 %v25
  %v135 = vunpack.c.h.b16 %v25
  %v136 = vunpack.c.l.b16 %v26
  %v137 = vunpack.c.h.b16 %v26
  %v138 = vunpack.c.l.b16 %v27
  %v139 = vunpack.c.h.b16 %v27
  %v140 = vunpack.c.l.b16 %v28
  %v141 = vunpack.c.h.b16 %v28
  %v142 = vpack.c.b16 %v118, %v114
  %v143 = vpack.c.b16 %v119, %v115
  %v144 = vpack.c.b16 %v120, %v116
  %v145 = vpack.c.b16 %v121, %v117
  %v146 = vpack.c.b16 %v126, %v122
  %v147 = vpack.c.b16 %v127, %v123
  %v148 = vpack.c.b16 %v128, %v124
  %v149 = vpack.c.b16 %v129, %v125
  %v150 = vpack.c.b16 %v134, %v130
  %v151 = vpack.c.b16 %v135, %v131
  %v152 = vpack.c.b16 %v136, %v132
  %v153 = vpack.c.b16 %v137, %v133
  %v154 = vpack.c.b16 %v138, %v138
  %v155 = vpack.c.b16 %v139, %v139
  %v156 = vpack.c.b16 %v140, %v140
  %v157 = vpack.c.b16 %v141, %v141
  %v238 = vunpack.c.l.b16 %v29
  %v239 = vunpack.c.l.b16 %v30
  %v240 = vunpack.c.l.b16 %v31
  %v241 = vunpack.c.l.b16 %v32
  %v242 = vunpack.c.l.b16 %v33
  %v243 = vunpack.c.l.b16 %v34
  %v244 = vunpack.c.l.b16 %v35
  %v245 = vunpack.c.l.b16 %v36
  %v246 = vunpack.c.l.b16 %v37
  %v247 = vunpack.c.l.b16 %v38
  %v248 = vunpack.c.l.b16 %v39
  %v249 = vunpack.c.l.b16 %v40
  %v250 = vunpack.c.l.b16 %v41
  %v251 = vunpack.c.l.b16 %v42
  %v252 = vunpack.c.l.b16 %v43
  %v253 = vunpack.c.l.b16 %v44
  %v254 = vunpack.c.l.b16 %v45
  %v255 = vunpack.c.l.b16 %v46
  %v256 = vunpack.c.l.b16 %v47
  %v257 = vunpack.c.l.b16 %v48
  %v258 = vunpack.c.l.b16 %v49
  %v259 = vunpack.c.l.b16 %v50
  %v260 = vunpack.c.l.b16 %v51
  %v261 = vunpack.c.l.b16 %v52
  %v262 = vunpack.c.l.b16 %v53
  %v263 = vunpack.c.l.b16 %v54
  %v264 = vunpack.c.l.b16 %v55
  %v265 = vunpack.c.l.b16 %v56
  %v266 = vunpack.c.l.b16 %v57
  %v267 = vunpack.c.l.b16 %v58
  %v268 = vunpack.c.l.b16 %v59
  %v269 = vunpack.c.l.b16 %v60
  %v270 = vunpack.c.l.b16 %v61
  %v271 = vunpack.c.l.b16 %v62
  %v272 = vunpack.c.l.b16 %v63
  %v273 = vunpack.c.l.b16 %v64
  %v274 = vunpack.c.l.b16 %v65
  %v275 = vunpack.c.l.b16 %v66
  %v276 = vunpack.c.l.b16 %v67
  %v277 = vunpack.c.l.b16 %v68
  %v278 = vunpack.c.l.b16 %v69
  %v279 = vunpack.c.l.b16 %v70
  %v280 = vunpack.c.l.b16 %v71
  %v281 = vunpack.c.l.b16 %v72
  %v282 = vunpack.c.l.b16 %v73
  %v283 = vunpack.c.l.b16 %v74
  %v284 = vunpack.c.l.b16 %v75
  %v285 = vunpack.c.l.b16 %v76
  %v286 = vunpack.c.l.b16 %v77
  %v287 = vunpack.c.l.b16 %v78
  %v288 = vunpack.c.l.b16 %v79
  %v289 = vunpack.c.l.b16 %v80
  %v290 = vunpack.c.l.b16 %v81
  %v291 = vunpack.c.l.b16 %v82
  %v292 = vunpack.c.l.b16 %v83
  %v293 = vunpack.c.l.b16 %v84
  %v294 = vunpack.c.l.b16 %v85
  %v295 = vunpack.c.l.b16 %v86
  %v296 = vunpack.c.l.b16 %v87
  %v297 = vunpack.c.l.b16 %v88
  %v298 = vunpack.c.l.b16 %v89
  %v299 = vunpack.c.l.b16 %v90
  %v300 = vunpack.c.l.b16 %v91
  %v301 = vunpack.c.l.b16 %v92
  %v302 = vpack.c.b16 %v239, %v238
  %v303 = vpack.c.b16 %v241, %v240
  %v304 = vpack.c.b16 %v243, %v242
  %v305 = vpack.c.b16 %v245, %v244
  %v306 = vpack.c.b16 %v247, %v246
  %v307 = vpack.c.b16 %v249, %v248
  %v308 = vpack.c.b16 %v251, %v250
  %v309 = vpack.c.b16 %v253, %v252
  %v310 = vpack.c.b16 %v255, %v254
  %v311 = vpack.c.b16 %v257, %v256
  %v312 = vpack.c.b16 %v259, %v258
  %v313 = vpack.c.b16 %v261, %v260
  %v314 = vpack.c.b16 %v263, %v262
  %v315 = vpack.c.b16 %v265, %v264
  %v316 = vpack.c.b16 %v267, %v266
  %v317 = vpack.c.b16 %v269, %v268
  %v318 = vpack.c.b16 %v271, %v270
  %v319 = vpack.c.b16 %v273, %v272
  %v320 = vpack.c.b16 %v275, %v274
  %v321 = vpack.c.b16 %v277, %v276
  %v322 = vpack.c.b16 %v279, %v278
  %v323 = vpack.c.b16 %v281, %v280
  %v324 = vpack.c.b16 %v283, %v282
  %v325 = vpack.c.b16 %v285, %v284
  %v326 = vpack.c.b16 %v287, %v286
  %v327 = vpack.c.b16 %v289, %v288
  %v328 = vpack.c.b16 %v291, %v290
  %v329 = vpack.c.b16 %v293, %v292
  %v330 = vpack.c.b16 %v295, %v294
  %v331 = vpack.c.b16 %v297, %v296
  %v332 = vpack.c.b16 %v299, %v298
  %v333 = vpack.c.b16 %v301, %v300
  %366 = vmatprep.subr.bf16.mxu0 0
  %367 = vmatpush1.bf16.msra.mxu0 %v309
  %368 = vmatprep.subr.bf16.mxu0 0
  %369 = vmatpush1.bf16.msra.mxu0 %v308
  %370 = vmatprep.subr.bf16.mxu0 0
  %371 = vmatpush1.bf16.msra.mxu0 %v307
  %372 = vmatprep.subr.bf16.mxu0 0
  %373 = vmatpush1.bf16.msra.mxu0 %v306
  %374 = vmatprep.subr.bf16.mxu0 0
  %375 = vmatpush1.bf16.msra.mxu0 %v305
  %376 = vmatprep.subr.bf16.mxu0 0
  %377 = vmatpush1.bf16.msra.mxu0 %v304
  %378 = vmatprep.subr.bf16.mxu0 0
  %379 = vmatpush1.bf16.msra.mxu0 %v303
  %380 = vmatprep.subr.bf16.mxu0 0
  %381 = vmatpush1.bf16.msra.mxu0 %v302
  %382 = vmatprep.subr.bf16.mxu0 0
  %383 = vmatpush2.bf16.msra.mxu0 %v317
  %384 = vmatprep.subr.bf16.mxu0 0
  %385 = vmatpush2.bf16.msra.mxu0 %v316
  %386 = vmatprep.subr.bf16.mxu0 0
  %387 = vmatpush2.bf16.msra.mxu0 %v315
  %388 = vmatprep.subr.bf16.mxu0 0
  %389 = vmatpush2.bf16.msra.mxu0 %v314
  %390 = vmatprep.subr.bf16.mxu0 0
  %391 = vmatpush2.bf16.msra.mxu0 %v313
  %392 = vmatprep.subr.bf16.mxu0 0
  %393 = vmatpush2.bf16.msra.mxu0 %v312
  %394 = vmatprep.subr.bf16.mxu0 0
  %395 = vmatpush2.bf16.msra.mxu0 %v311
  %396 = vmatprep.subr.bf16.mxu0 0
  %397 = vmatpush2.bf16.msra.mxu0 %v310
  %398 = vmatprep.mubr.bf16.mxu0 %v143
  %399 = vmatmul.mubr.bf16.gmra.mxu0 %v142
  %v400 = vpop.f32.mrf.mxu0
  %v401 = vadd.f32 %v98, %v400
  %v402 = vpop.f32.mrf.mxu0
  %v403 = vpop.f32.mrf.mxu0
  %v404 = vadd.f32 %v98, %v403
  %v405 = vpop.f32.mrf.mxu0
  %406 = vmatprep.mubr.bf16.mxu0 %v147
  %407 = vmatmul.mubr.bf16.gmra.mxu0 %v146
  %v408 = vpop.f32.mrf.mxu0
  %v409 = vadd.f32 %v98, %v408
  %v410 = vpop.f32.mrf.mxu0
  %v411 = vpop.f32.mrf.mxu0
  %v412 = vadd.f32 %v98, %v411
  %v413 = vpop.f32.mrf.mxu0
  %414 = vmatprep.mubr.bf16.mxu0 %v151
  %415 = vmatmul.mubr.bf16.gmra.mxu0 %v150
  %v416 = vpop.f32.mrf.mxu0
  %v417 = vadd.f32 %v98, %v416
  %v418 = vpop.f32.mrf.mxu0
  %v419 = vpop.f32.mrf.mxu0
  %v420 = vadd.f32 %v98, %v419
  %v421 = vpop.f32.mrf.mxu0
  %422 = vmatprep.mubr.bf16.mxu0 %v155
  %423 = vmatmul.mubr.bf16.gmra.mxu0 %v154
  %v424 = vpop.f32.mrf.mxu0
  %v425 = vadd.f32 %v98, %v424
  %v426 = vpop.f32.mrf.mxu0
  %v427 = vpop.f32.mrf.mxu0
  %v428 = vpop.f32.mrf.mxu0
  %429 = vdwg.mxu0
  %430 = vmatprep.subr.bf16.mxu0 0
  %431 = vmatpush1.bf16.msra.mxu0 %v325
  %432 = vmatprep.subr.bf16.mxu0 0
  %433 = vmatpush1.bf16.msra.mxu0 %v324
  %434 = vmatprep.subr.bf16.mxu0 0
  %435 = vmatpush1.bf16.msra.mxu0 %v323
  %436 = vmatprep.subr.bf16.mxu0 0
  %437 = vmatpush1.bf16.msra.mxu0 %v322
  %438 = vmatprep.subr.bf16.mxu0 0
  %439 = vmatpush1.bf16.msra.mxu0 %v321
  %440 = vmatprep.subr.bf16.mxu0 0
  %441 = vmatpush1.bf16.msra.mxu0 %v320
  %442 = vmatprep.subr.bf16.mxu0 0
  %443 = vmatpush1.bf16.msra.mxu0 %v319
  %444 = vmatprep.subr.bf16.mxu0 0
  %445 = vmatpush1.bf16.msra.mxu0 %v318
  %446 = vmatprep.subr.bf16.mxu0 0
  %447 = vmatpush2.bf16.msra.mxu0 %v333
  %448 = vmatprep.subr.bf16.mxu0 0
  %449 = vmatpush2.bf16.msra.mxu0 %v332
  %450 = vmatprep.subr.bf16.mxu0 0
  %451 = vmatpush2.bf16.msra.mxu0 %v331
  %452 = vmatprep.subr.bf16.mxu0 0
  %453 = vmatpush2.bf16.msra.mxu0 %v330
  %454 = vmatprep.subr.bf16.mxu0 0
  %455 = vmatpush2.bf16.msra.mxu0 %v329
  %456 = vmatprep.subr.bf16.mxu0 0
  %457 = vmatpush2.bf16.msra.mxu0 %v328
  %458 = vmatprep.subr.bf16.mxu0 0
  %459 = vmatpush2.bf16.msra.mxu0 %v327
  %460 = vmatprep.subr.bf16.mxu0 0
  %461 = vmatpush2.bf16.msra.mxu0 %v326
  %462 = vmatprep.mubr.bf16.mxu0 %v145
  %463 = vmatmul.mubr.bf16.gmra.mxu0 %v144
  %v464 = vpop.f32.mrf.mxu0
  %v465 = vadd.f32 %v401, %v464
  %v466 = vpop.f32.mrf.mxu0
  %v467 = vpop.f32.mrf.mxu0
  %v468 = vadd.f32 %v404, %v467
  %v469 = vpop.f32.mrf.mxu0
  %470 = vmatprep.mubr.bf16.mxu0 %v149
  %471 = vmatmul.mubr.bf16.gmra.mxu0 %v148
  %v472 = vpop.f32.mrf.mxu0
  %v473 = vadd.f32 %v409, %v472
  %v474 = vpop.f32.mrf.mxu0
  %v475 = vpop.f32.mrf.mxu0
  %v476 = vadd.f32 %v412, %v475
  %v477 = vpop.f32.mrf.mxu0
  %478 = vmatprep.mubr.bf16.mxu0 %v153
  %479 = vmatmul.mubr.bf16.gmra.mxu0 %v152
  %v480 = vpop.f32.mrf.mxu0
  %v481 = vadd.f32 %v417, %v480
  %v482 = vpop.f32.mrf.mxu0
  %v483 = vpop.f32.mrf.mxu0
  %v484 = vadd.f32 %v420, %v483
  %v485 = vpop.f32.mrf.mxu0
  %486 = vmatprep.mubr.bf16.mxu0 %v157
  %487 = vmatmul.mubr.bf16.gmra.mxu0 %v156
  %v488 = vpop.f32.mrf.mxu0
  %v489 = vadd.f32 %v425, %v488
  %v490 = vpop.f32.mrf.mxu0
  %v491 = vpop.f32.mrf.mxu0
  %v492 = vpop.f32.mrf.mxu0
  %493 = vdwg.mxu0
  %v494 = vmax.f32 %v465, 0.0
  %v495 = vmax.f32 %v468, 0.0
  %v496 = vmax.f32 %v473, 0.0
  %v497 = vmax.f32 %v476, 0.0
  %v498 = vmax.f32 %v481, 0.0
  %v499 = vmax.f32 %v484, 0.0
  %v500 = vmax.f32 %v489, 0.0
  %v501 = vpack.c.bf16 %v495, %v494
  %v502 = vpack.c.bf16 %v497, %v496
  %v503 = vpack.c.bf16 %v499, %v498
  %v504 = vpack.c.bf16 %v500, %v500
  %v509 = vunpack.c.l.b16 %v501
  %v510 = vunpack.c.h.b16 %v501
  %v511 = vunpack.c.l.b16 %v502
  %v512 = vunpack.c.h.b16 %v502
  %v513 = vunpack.c.l.b16 %v503
  %v514 = vunpack.c.h.b16 %v503
  %v515 = vunpack.c.l.b16 %v504
  %v516 = vpack.c.b16 %v509, %v509
  %v517 = vpack.c.b16 %v510, %v510
  %v518 = vpack.c.b16 %v511, %v511
  %v519 = vpack.c.b16 %v512, %v512
  %v520 = vpack.c.b16 %v513, %v513
  %v521 = vpack.c.b16 %v514, %v514
  %v522 = vpack.c.b16 %v515, %v515
  %vm530 = vcmask 519168
  %531 = vst.msk [vmem:[%s3] sm:$0xf] %vm530, %v516
  %532 = vst.msk [vmem:[%s3 + $0x4] sm:$0xf] %vm530, %v517
  %533 = vst.msk [vmem:[%s3 + $0x8] sm:$0xf] %vm530, %v518
  %534 = vst.msk [vmem:[%s3 + $0xc] sm:$0xf] %vm530, %v519
  %535 = vst.msk [vmem:[%s3 + $0x10] sm:$0xf] %vm530, %v520
  %536 = vst.msk [vmem:[%s3 + $0x14] sm:$0xf] %vm530, %v521
  %vm537 = vcmask 516096
  %538 = vst.msk [vmem:[%s3 + $0x18] sm:$0x1] %vm537, %v522
  // Predicated region
  $region14: #{dueling_dqn_forward.4} parent=0 // pred_check
    _
  $region15: #{dueling_dqn_forward.4} parent=0 // pred_check_branch
    %540 = sbr.rel (0) target = $region17
  $region16: #{dueling_dqn_forward.4} parent=0 // pred_region
    _
  $region17: #{dueling_dqn_forward.4} parent=0 // pred_fallthru
    _
  // Predicated region
  $region18: #{dueling_dqn_forward.4} parent=0 // pred_check
    _
  $region19: #{dueling_dqn_forward.4} parent=0 // pred_check_branch
    %542 = sbr.rel (0) target = $region21
  $region20: #{dueling_dqn_forward.4} parent=0 // pred_region
    _
  $region21: #{dueling_dqn_forward.4} parent=0 // pred_fallthru
    _

// kernel: dueling_dqn_forward.5
$region0: #{dueling_dqn_forward.5}
  #allocation0 [shape = 'u32[]', space=smem, size = 0x4, offset = 0x4, fixed_abs, tag = 'smem constant byte address 0x4 - core index']
  #allocation1 [shape = 'u32[144,128]{1,0:T(1,128)}', space=vmem, size = 0x12000, scoped, tag = 'internal scratch']
  %s0 = inlined_call_operand.vmem [shape: bf16[9,2,576], index: 0, kind: input, shape index: {}]
  %s1 = inlined_call_operand.vmem [shape: bf16[576,64], index: 1, kind: input, shape index: {}]
  %s2 = inlined_call_operand.vmem [shape: f32[1,64], index: 2, kind: input, shape index: {}]
  %s3 = inlined_call_operand.vmem [shape: bf16[576,512], index: 3, kind: input, shape index: {}]
  %s4 = inlined_call_operand.vmem [shape: f32[1,512], index: 4, kind: input, shape index: {}]
  %s5 = inlined_call_operand.vmem [shape: bf16[512,256], index: 5, kind: input, shape index: {}]
  %s6 = inlined_call_operand.vmem [shape: f32[1,256], index: 6, kind: input, shape index: {}]
  %s7 = inlined_call_operand.vmem [shape: bf16[256,7], index: 7, kind: input, shape index: {}]
  %s8 = inlined_call_operand.vmem [shape: f32[1,7], index: 8, kind: input, shape index: {}]
  %s9 = inlined_call_operand.hbm [shape: f32[2,6], index: 9, kind: output, shape index: {}]
  %s10 = sld [smem:[#allocation0]]
  $region46: #{dueling_dqn_forward.5} parent=0
    _
  %s12 = ssub.s32 1, %s10
  %s13 = scalar_select 0, %s12, %s10
  $region1: #{dueling_dqn_forward.5} parent=0
    #allocation2 [shape = 'u8[1024]{0}', space=vmem, size = 0x400, scoped, tag = 'output window, operand 0, single buffered']
    #allocation3 [shape = 's32[1]{0}', space=sflag, size = 0x4, scoped, tag = 'scoped memory for dueling_dqn_forward.5']
    %14 = vsyncpa [#allocation3], 0
    // Predicated region
    $region2: #{dueling_dqn_forward.5} parent=1 // pred_check
      _
    $region3: #{dueling_dqn_forward.5} parent=1 // pred_check_branch
      %16 = sbr.rel (0) target = $region5
    $region4: #{dueling_dqn_forward.5} parent=1 // pred_region
      _
    $region5: #{dueling_dqn_forward.5} parent=1 // pred_fallthru
      _
    // Predicated region
    $region6: #{dueling_dqn_forward.5} parent=1 // pred_check
      _
    $region7: #{dueling_dqn_forward.5} parent=1 // pred_check_branch
      %18 = sbr.rel (0) target = $region9
    $region8: #{dueling_dqn_forward.5} parent=1 // pred_region
      _
    $region9: #{dueling_dqn_forward.5} parent=1 // pred_fallthru
      _
    // Predicated region
    $region10: #{dueling_dqn_forward.5} parent=1 // pred_check
      _
    $region11: #{dueling_dqn_forward.5} parent=1 // pred_check_branch
      %20 = sbr.rel (0) target = $region13
    $region12: #{dueling_dqn_forward.5} parent=1 // pred_region
      _
    $region13: #{dueling_dqn_forward.5} parent=1 // pred_fallthru
      _
    // Predicated region
    $region14: #{dueling_dqn_forward.5} parent=1 // pred_check
      _
    $region15: #{dueling_dqn_forward.5} parent=1 // pred_check_branch
      %22 = sbr.rel (0) target = $region17
    $region16: #{dueling_dqn_forward.5} parent=1 // pred_region
      _
    $region17: #{dueling_dqn_forward.5} parent=1 // pred_fallthru
      _
    // Predicated region
    $region18: #{dueling_dqn_forward.5} parent=1 // pred_check
      _
    $region19: #{dueling_dqn_forward.5} parent=1 // pred_check_branch
      %24 = sbr.rel (0) target = $region21
    $region20: #{dueling_dqn_forward.5} parent=1 // pred_region
      _
    $region21: #{dueling_dqn_forward.5} parent=1 // pred_fallthru
      _
    // Predicated region
    $region22: #{dueling_dqn_forward.5} parent=1 // pred_check
      _
    $region23: #{dueling_dqn_forward.5} parent=1 // pred_check_branch
      %26 = sbr.rel (0) target = $region25
    $region24: #{dueling_dqn_forward.5} parent=1 // pred_region
      _
    $region25: #{dueling_dqn_forward.5} parent=1 // pred_fallthru
      _
    // Predicated region
    $region26: #{dueling_dqn_forward.5} parent=1 // pred_check
      _
    $region27: #{dueling_dqn_forward.5} parent=1 // pred_check_branch
      %28 = sbr.rel (0) target = $region29
    $region28: #{dueling_dqn_forward.5} parent=1 // pred_region
      _
    $region29: #{dueling_dqn_forward.5} parent=1 // pred_fallthru
      _
    // Predicated region
    $region30: #{dueling_dqn_forward.5} parent=1 // pred_check
      _
    $region31: #{dueling_dqn_forward.5} parent=1 // pred_check_branch
      %30 = sbr.rel (0) target = $region33
    $region32: #{dueling_dqn_forward.5} parent=1 // pred_region
      _
    $region33: #{dueling_dqn_forward.5} parent=1 // pred_fallthru
      _
    // Predicated region
    $region34: #{dueling_dqn_forward.5} parent=1 // pred_check
      _
    $region35: #{dueling_dqn_forward.5} parent=1 // pred_check_branch
      %32 = sbr.rel (0) target = $region37
    $region36: #{dueling_dqn_forward.5} parent=1 // pred_region
      _
    $region37: #{dueling_dqn_forward.5} parent=1 // pred_fallthru
      _
    %v34 = vld [vmem:[%s0] sm:$0x1f]
    %v35 = vld [vmem:[%s1] sm:$0xf]
    %v36 = vld [vmem:[%s1 + $0x4] sm:$0xf]
    %v37 = vld [vmem:[%s1 + $0x8] sm:$0xf]
    %v38 = vld [vmem:[%s1 + $0xc] sm:$0xf]
    %v39 = vld [vmem:[%s1 + $0x10] sm:$0xf]
    %v40 = vld [vmem:[%s1 + $0x14] sm:$0xf]
    %v41 = vld [vmem:[%s1 + $0x18] sm:$0xf]
    %v42 = vld [vmem:[%s1 + $0x1c] sm:$0xf]
    %v43 = vld [vmem:[%s1 + $0x20] sm:$0xf]
    %v44 = vld [vmem:[%s1 + $0x24] sm:$0xf]
    %v45 = vld [vmem:[%s1 + $0x28] sm:$0xf]
    %v46 = vld [vmem:[%s1 + $0x2c] sm:$0xf]
    %v47 = vld [vmem:[%s1 + $0x30] sm:$0xf]
    %v48 = vld [vmem:[%s1 + $0x34] sm:$0xf]
    %v49 = vld [vmem:[%s1 + $0x38] sm:$0xf]
    %v50 = vld [vmem:[%s1 + $0x3c] sm:$0xf]
    %v51 = vld [vmem:[%s1 + $0x40] sm:$0xf]
    %v52 = vld [vmem:[%s1 + $0x44] sm:$0xf]
    %v53 = vld [vmem:[%s1 + $0x48] sm:$0xf]
    %v54 = vld [vmem:[%s1 + $0x4c] sm:$0xf]
    %v55 = vld [vmem:[%s1 + $0x50] sm:$0xf]
    %v56 = vld [vmem:[%s1 + $0x54] sm:$0xf]
    %v57 = vld [vmem:[%s1 + $0x58] sm:$0xf]
    %v58 = vld [vmem:[%s1 + $0x5c] sm:$0xf]
    %v59 = vld [vmem:[%s1 + $0x60] sm:$0xf]
    %v60 = vld [vmem:[%s1 + $0x64] sm:$0xf]
    %v61 = vld [vmem:[%s1 + $0x68] sm:$0xf]
    %v62 = vld [vmem:[%s1 + $0x6c] sm:$0xf]
    %v63 = vld [vmem:[%s1 + $0x70] sm:$0xf]
    %v64 = vld [vmem:[%s1 + $0x74] sm:$0xf]
    %v65 = vld [vmem:[%s1 + $0x78] sm:$0xf]
    %v66 = vld [vmem:[%s1 + $0x7c] sm:$0xf]
    %v67 = vld [vmem:[%s1 + $0x80] sm:$0xf]
    %v68 = vld [vmem:[%s1 + $0x84] sm:$0xf]
    %v69 = vld [vmem:[%s1 + $0x88] sm:$0xf]
    %v70 = vld [vmem:[%s1 + $0x8c] sm:$0xf]
    %v71 = vld [vmem:[%s1 + $0x90] sm:$0xf]
    %v72 = vld [vmem:[%s1 + $0x94] sm:$0xf]
    %v73 = vld [vmem:[%s1 + $0x98] sm:$0xf]
    %v74 = vld [vmem:[%s1 + $0x9c] sm:$0xf]
    %v75 = vld [vmem:[%s1 + $0xa0] sm:$0xf]
    %v76 = vld [vmem:[%s1 + $0xa4] sm:$0xf]
    %v77 = vld [vmem:[%s1 + $0xa8] sm:$0xf]
    %v78 = vld [vmem:[%s1 + $0xac] sm:$0xf]
    %v79 = vld [vmem:[%s1 + $0xb0] sm:$0xf]
    %v80 = vld [vmem:[%s1 + $0xb4] sm:$0xf]
    %v81 = vld [vmem:[%s1 + $0xb8] sm:$0xf]
    %v82 = vld [vmem:[%s1 + $0xbc] sm:$0xf]
    %v83 = vld [vmem:[%s1 + $0xc0] sm:$0xf]
    %v84 = vld [vmem:[%s1 + $0xc4] sm:$0xf]
    %v85 = vld [vmem:[%s1 + $0xc8] sm:$0xf]
    %v86 = vld [vmem:[%s1 + $0xcc] sm:$0xf]
    %v87 = vld [vmem:[%s1 + $0xd0] sm:$0xf]
    %v88 = vld [vmem:[%s1 + $0xd4] sm:$0xf]
    %v89 = vld [vmem:[%s1 + $0xd8] sm:$0xf]
    %v90 = vld [vmem:[%s1 + $0xdc] sm:$0xf]
    %v91 = vld [vmem:[%s1 + $0xe0] sm:$0xf]
    %v92 = vld [vmem:[%s1 + $0xe4] sm:$0xf]
    %v93 = vld [vmem:[%s1 + $0xe8] sm:$0xf]
    %v94 = vld [vmem:[%s1 + $0xec] sm:$0xf]
    %v95 = vld [vmem:[%s1 + $0xf0] sm:$0xf]
    %v96 = vld [vmem:[%s1 + $0xf4] sm:$0xf]
    %v97 = vld [vmem:[%s1 + $0xf8] sm:$0xf]
    %v98 = vld [vmem:[%s1 + $0xfc] sm:$0xf]
    %v99 = vld [vmem:[%s1 + $0x100] sm:$0xf]
    %v100 = vld [vmem:[%s1 + $0x104] sm:$0xf]
    %v101 = vld [vmem:[%s1 + $0x108] sm:$0xf]
    %v102 = vld [vmem:[%s1 + $0x10c] sm:$0xf]
    %v103 = vld [vmem:[%s1 + $0x110] sm:$0xf]
    %v104 = vld [vmem:[%s1 + $0x114] sm:$0xf]
    %v105 = vld [vmem:[%s1 + $0x118] sm:$0xf]
    %v106 = vld [vmem:[%s1 + $0x11c] sm:$0xf]
    %v107 = vld [vmem:[%s2] sm:$0x1]
    %v109 = vlaneseq
    %v110 = vshrl.u32 %v109, 7
    %v111 = vsub.s32 0, %v110
    %v112 = vrot.slane %v107, %v111
    %v115 = vcombine.high %v34, %v34
    %v117 = vunpack.c.l.s4 1966171168
    %v118 = vunpack.c.0.s8 %v117
    %v119 = vlaneseq
    %v120 = vshrl.u32 %v119, 7
    %v121 = vsub.s32 %v118, %v120
    %v122 = vrot.slane %v34, %v121
    %v124 = vunpack.c.l.s4 1966171168
    %v125 = vunpack.c.0.s8 %v124
    %v126 = vlaneseq
    %v127 = vshrl.u32 %v126, 7
    %v128 = vsub.s32 %v125, %v127
    %v129 = vrot.slane %v115, %v128
    %v130 = vcombine.high %v122, %v122
    %v132 = vunpack.c.l.s4 1966171168
    %v133 = vunpack.c.0.s8 %v132
    %v134 = vlaneseq
    %v135 = vshrl.u32 %v134, 7
    %v136 = vsub.s32 %v133, %v135
    %v137 = vrot.slane %v122, %v136
    %v139 = vunpack.c.l.s4 1966171168
    %v140 = vunpack.c.0.s8 %v139
    %v141 = vlaneseq
    %v142 = vshrl.u32 %v141, 7
    %v143 = vsub.s32 %v140, %v142
    %v144 = vrot.slane %v129, %v143
    %v146 = vunpack.c.l.s4 1966171168
    %v147 = vunpack.c.0.s8 %v146
    %v148 = vlaneseq
    %v149 = vshrl.u32 %v148, 7
    %v150 = vsub.s32 %v147, %v149
    %v151 = vrot.slane %v130, %v150
    %v152 = vcombine.high %v137, %v137
    %v153 = vcombine.high %v151, %v151
    %v230 = vunpack.c.l.b16 %v35
    %v231 = vunpack.c.l.b16 %v36
    %v232 = vunpack.c.l.b16 %v37
    %v233 = vunpack.c.l.b16 %v38
    %v234 = vunpack.c.l.b16 %v39
    %v235 = vunpack.c.l.b16 %v40
    %v236 = vunpack.c.l.b16 %v41
    %v237 = vunpack.c.l.b16 %v42
    %v238 = vunpack.c.l.b16 %v43
    %v239 = vunpack.c.l.b16 %v44
    %v240 = vunpack.c.l.b16 %v45
    %v241 = vunpack.c.l.b16 %v46
    %v242 = vunpack.c.l.b16 %v47
    %v243 = vunpack.c.l.b16 %v48
    %v244 = vunpack.c.l.b16 %v49
    %v245 = vunpack.c.l.b16 %v50
    %v246 = vunpack.c.l.b16 %v51
    %v247 = vunpack.c.l.b16 %v52
    %v248 = vunpack.c.l.b16 %v53
    %v249 = vunpack.c.l.b16 %v54
    %v250 = vunpack.c.l.b16 %v55
    %v251 = vunpack.c.l.b16 %v56
    %v252 = vunpack.c.l.b16 %v57
    %v253 = vunpack.c.l.b16 %v58
    %v254 = vunpack.c.l.b16 %v59
    %v255 = vunpack.c.l.b16 %v60
    %v256 = vunpack.c.l.b16 %v61
    %v257 = vunpack.c.l.b16 %v62
    %v258 = vunpack.c.l.b16 %v63
    %v259 = vunpack.c.l.b16 %v64
    %v260 = vunpack.c.l.b16 %v65
    %v261 = vunpack.c.l.b16 %v66
    %v262 = vunpack.c.l.b16 %v67
    %v263 = vunpack.c.l.b16 %v68
    %v264 = vunpack.c.l.b16 %v69
    %v265 = vunpack.c.l.b16 %v70
    %v266 = vunpack.c.l.b16 %v71
    %v267 = vunpack.c.l.b16 %v72
    %v268 = vunpack.c.l.b16 %v73
    %v269 = vunpack.c.l.b16 %v74
    %v270 = vunpack.c.l.b16 %v75
    %v271 = vunpack.c.l.b16 %v76
    %v272 = vunpack.c.l.b16 %v77
    %v273 = vunpack.c.l.b16 %v78
    %v274 = vunpack.c.l.b16 %v79
    %v275 = vunpack.c.l.b16 %v80
    %v276 = vunpack.c.l.b16 %v81
    %v277 = vunpack.c.l.b16 %v82
    %v278 = vunpack.c.l.b16 %v83
    %v279 = vunpack.c.l.b16 %v84
    %v280 = vunpack.c.l.b16 %v85
    %v281 = vunpack.c.l.b16 %v86
    %v282 = vunpack.c.l.b16 %v87
    %v283 = vunpack.c.l.b16 %v88
    %v284 = vunpack.c.l.b16 %v89
    %v285 = vunpack.c.l.b16 %v90
    %v286 = vunpack.c.l.b16 %v91
    %v287 = vunpack.c.l.b16 %v92
    %v288 = vunpack.c.l.b16 %v93
    %v289 = vunpack.c.l.b16 %v94
    %v290 = vunpack.c.l.b16 %v95
    %v291 = vunpack.c.l.b16 %v96
    %v292 = vunpack.c.l.b16 %v97
    %v293 = vunpack.c.l.b16 %v98
    %v294 = vunpack.c.l.b16 %v99
    %v295 = vunpack.c.l.b16 %v100
    %v296 = vunpack.c.l.b16 %v101
    %v297 = vunpack.c.l.b16 %v102
    %v298 = vunpack.c.l.b16 %v103
    %v299 = vunpack.c.l.b16 %v104
    %v300 = vunpack.c.l.b16 %v105
    %v301 = vunpack.c.l.b16 %v106
    %v302 = vpack.c.b16 %v231, %v230
    %v303 = vpack.c.b16 %v233, %v232
    %v304 = vpack.c.b16 %v235, %v234
    %v305 = vpack.c.b16 %v237, %v236
    %v306 = vpack.c.b16 %v239, %v238
    %v307 = vpack.c.b16 %v241, %v240
    %v308 = vpack.c.b16 %v243, %v242
    %v309 = vpack.c.b16 %v245, %v244
    %v310 = vpack.c.b16 %v247, %v246
    %v311 = vpack.c.b16 %v249, %v248
    %v312 = vpack.c.b16 %v251, %v250
    %v313 = vpack.c.b16 %v253, %v252
    %v314 = vpack.c.b16 %v255, %v254
    %v315 = vpack.c.b16 %v257, %v256
    %v316 = vpack.c.b16 %v259, %v258
    %v317 = vpack.c.b16 %v261, %v260
    %v318 = vpack.c.b16 %v263, %v262
    %v319 = vpack.c.b16 %v265, %v264
    %v320 = vpack.c.b16 %v267, %v266
    %v321 = vpack.c.b16 %v269, %v268
    %v322 = vpack.c.b16 %v271, %v270
    %v323 = vpack.c.b16 %v273, %v272
    %v324 = vpack.c.b16 %v275, %v274
    %v325 = vpack.c.b16 %v277, %v276
    %v326 = vpack.c.b16 %v279, %v278
    %v327 = vpack.c.b16 %v281, %v280
    %v328 = vpack.c.b16 %v283, %v282
    %v329 = vpack.c.b16 %v285, %v284
    %v330 = vpack.c.b16 %v287, %v286
    %v331 = vpack.c.b16 %v289, %v288
    %v332 = vpack.c.b16 %v291, %v290
    %v333 = vpack.c.b16 %v293, %v292
    %v334 = vpack.c.b16 %v295, %v294
    %v335 = vpack.c.b16 %v297, %v296
    %v336 = vpack.c.b16 %v299, %v298
    %v337 = vpack.c.b16 %v301, %v300
    %vm374 = vcmask 523264
    %v376 = vsel %vm374, %v144, 0
    %378 = vmatprep.subr.bf16.mxu0 0
    %379 = vmatpush1.bf16.msra.mxu0 %v309
    %380 = vmatprep.subr.bf16.mxu0 0
    %381 = vmatpush1.bf16.msra.mxu0 %v308
    %382 = vmatprep.subr.bf16.mxu0 0
    %383 = vmatpush1.bf16.msra.mxu0 %v307
    %384 = vmatprep.subr.bf16.mxu0 0
    %385 = vmatpush1.bf16.msra.mxu0 %v306
    %386 = vmatprep.subr.bf16.mxu0 0
    %387 = vmatpush1.bf16.msra.mxu0 %v305
    %388 = vmatprep.subr.bf16.mxu0 0
    %389 = vmatpush1.bf16.msra.mxu0 %v304
    %390 = vmatprep.subr.bf16.mxu0 0
    %391 = vmatpush1.bf16.msra.mxu0 %v303
    %392 = vmatprep.subr.bf16.mxu0 0
    %393 = vmatpush1.bf16.msra.mxu0 %v302
    %394 = vmatprep.subr.bf16.mxu0 0
    %395 = vmatpush2.bf16.msra.mxu0 %v317
    %396 = vmatprep.subr.bf16.mxu0 0
    %397 = vmatpush2.bf16.msra.mxu0 %v316
    %398 = vmatprep.subr.bf16.mxu0 0
    %399 = vmatpush2.bf16.msra.mxu0 %v315
    %400 = vmatprep.subr.bf16.mxu0 0
    %401 = vmatpush2.bf16.msra.mxu0 %v314
    %402 = vmatprep.subr.bf16.mxu0 0
    %403 = vmatpush2.bf16.msra.mxu0 %v313
    %404 = vmatprep.subr.bf16.mxu0 0
    %405 = vmatpush2.bf16.msra.mxu0 %v312
    %406 = vmatprep.subr.bf16.mxu0 0
    %407 = vmatpush2.bf16.msra.mxu0 %v311
    %408 = vmatprep.subr.bf16.mxu0 0
    %409 = vmatpush2.bf16.msra.mxu0 %v310
    %410 = vmatprep.mubr.bf16.mxu0 %v151
    %411 = vmatmul.mubr.bf16.gmra.mxu0 %v137
    %v412 = vpop.f32.mrf.mxu0
    %v413 = vadd.f32 %v112, %v412
    %v414 = vpop.f32.mrf.mxu0
    %v415 = vpop.f32.mrf.mxu0
    %v416 = vpop.f32.mrf.mxu0
    %417 = vdwg.mxu0
    %418 = vmatprep.subr.bf16.mxu0 0
    %419 = vmatpush1.bf16.msra.mxu0 %v325
    %420 = vmatprep.subr.bf16.mxu0 0
    %421 = vmatpush1.bf16.msra.mxu0 %v324
    %422 = vmatprep.subr.bf16.mxu0 0
    %423 = vmatpush1.bf16.msra.mxu0 %v323
    %424 = vmatprep.subr.bf16.mxu0 0
    %425 = vmatpush1.bf16.msra.mxu0 %v322
    %426 = vmatprep.subr.bf16.mxu0 0
    %427 = vmatpush1.bf16.msra.mxu0 %v321
    %428 = vmatprep.subr.bf16.mxu0 0
    %429 = vmatpush1.bf16.msra.mxu0 %v320
    %430 = vmatprep.subr.bf16.mxu0 0
    %431 = vmatpush1.bf16.msra.mxu0 %v319
    %432 = vmatprep.subr.bf16.mxu0 0
    %433 = vmatpush1.bf16.msra.mxu0 %v318
    %434 = vmatprep.subr.bf16.mxu0 0
    %435 = vmatpush2.bf16.msra.mxu0 %v333
    %436 = vmatprep.subr.bf16.mxu0 0
    %437 = vmatpush2.bf16.msra.mxu0 %v332
    %438 = vmatprep.subr.bf16.mxu0 0
    %439 = vmatpush2.bf16.msra.mxu0 %v331
    %440 = vmatprep.subr.bf16.mxu0 0
    %441 = vmatpush2.bf16.msra.mxu0 %v330
    %442 = vmatprep.subr.bf16.mxu0 0
    %443 = vmatpush2.bf16.msra.mxu0 %v329
    %444 = vmatprep.subr.bf16.mxu0 0
    %445 = vmatpush2.bf16.msra.mxu0 %v328
    %446 = vmatprep.subr.bf16.mxu0 0
    %447 = vmatpush2.bf16.msra.mxu0 %v327
    %448 = vmatprep.subr.bf16.mxu0 0
    %449 = vmatpush2.bf16.msra.mxu0 %v326
    %450 = vmatprep.mubr.bf16.mxu0 %v153
    %451 = vmatmul.mubr.bf16.gmra.mxu0 %v152
    %v452 = vpop.f32.mrf.mxu0
    %v453 = vadd.f32 %v413, %v452
    %v454 = vpop.f32.mrf.mxu0
    %v455 = vpop.f32.mrf.mxu0
    %v456 = vpop.f32.mrf.mxu0
    %457 = vdwg.mxu0
    %458 = vmatprep.subr.bf16.mxu0 0
    %459 = vmatpush1.bf16.msra.mxu0 0
    %460 = vmatprep.subr.bf16.mxu0 0
    %461 = vmatpush1.bf16.msra.mxu0 0
    %462 = vmatprep.subr.bf16.mxu0 0
    %463 = vmatpush1.bf16.msra.mxu0 0
    %464 = vmatprep.subr.bf16.mxu0 0
    %465 = vmatpush1.bf16.msra.mxu0 0
    %466 = vmatprep.subr.bf16.mxu0 0
    %467 = vmatpush1.bf16.msra.mxu0 %v337
    %468 = vmatprep.subr.bf16.mxu0 0
    %469 = vmatpush1.bf16.msra.mxu0 %v336
    %470 = vmatprep.subr.bf16.mxu0 0
    %471 = vmatpush1.bf16.msra.mxu0 %v335
    %472 = vmatprep.subr.bf16.mxu0 0
    %473 = vmatpush1.bf16.msra.mxu0 %v334
    %474 = vmatprep.subr.bf16.mxu0 0
    %475 = vmatpush2.bf16.msra.mxu0 0
    %476 = vmatprep.subr.bf16.mxu0 0
    %477 = vmatpush2.bf16.msra.mxu0 0
    %478 = vmatprep.subr.bf16.mxu0 0
    %479 = vmatpush2.bf16.msra.mxu0 0
    %480 = vmatprep.subr.bf16.mxu0 0
    %481 = vmatpush2.bf16.msra.mxu0 0
    %482 = vmatprep.subr.bf16.mxu0 0
    %483 = vmatpush2.bf16.msra.mxu0 0
    %484 = vmatprep.subr.bf16.mxu0 0
    %485 = vmatpush2.bf16.msra.mxu0 0
    %486 = vmatprep.subr.bf16.mxu0 0
    %487 = vmatpush2.bf16.msra.mxu0 0
    %488 = vmatprep.subr.bf16.mxu0 0
    %489 = vmatpush2.bf16.msra.mxu0 0
    %490 = vmatprep.mubr.bf16.mxu0 0
    %491 = vmatmul.mubr.bf16.gmra.mxu0 %v376
    %v492 = vpop.f32.mrf.mxu0
    %v493 = vadd.f32 %v453, %v492
    %v494 = vpop.f32.mrf.mxu0
    %v495 = vpop.f32.mrf.mxu0
    %v496 = vpop.f32.mrf.mxu0
    %497 = vdwg.mxu0
    %v498 = vmax.f32 %v493, 0.0
    %v499 = vpack.c.bf16 %v498, %v498
    %v500 = vld [vmem:[%s3] sm:$0xff]
    %v501 = vld [vmem:[%s3 + $0x8] sm:$0xff]
    %v502 = vld [vmem:[%s3 + $0x10] sm:$0xff]
    %v503 = vld [vmem:[%s3 + $0x18] sm:$0xff]
    %v504 = vld [vmem:[%s3 + $0x20] sm:$0xff]
    %v505 = vld [vmem:[%s3 + $0x28] sm:$0xff]
    %v506 = vld [vmem:[%s3 + $0x30] sm:$0xff]
    %v507 = vld [vmem:[%s3 + $0x38] sm:$0xff]
    %v508 = vld [vmem:[%s3 + $0x40] sm:$0xff]
    %v509 = vld [vmem:[%s3 + $0x48] sm:$0xff]
    %v510 = vld [vmem:[%s3 + $0x50] sm:$0xff]
    %v511 = vld [vmem:[%s3 + $0x58] sm:$0xff]
    %v512 = vld [vmem:[%s3 + $0x60] sm:$0xff]
    %v513 = vld [vmem:[%s3 + $0x68] sm:$0xff]
    %v514 = vld [vmem:[%s3 + $0x70] sm:$0xff]
    %v515 = vld [vmem:[%s3 + $0x78] sm:$0xff]
    %s516 = scalar_lea.vmem %s0, 5
    %v517 = vld [vmem:[%s516] sm:$0x1f]
    %v519 = vcombine.high %v517, %v517
    %v521 = vunpack.c.l.s4 1966171168
    %v522 = vunpack.c.0.s8 %v521
    %v523 = vlaneseq
    %v524 = vshrl.u32 %v523, 7
    %v525 = vsub.s32 %v522, %v524
    %v526 = vrot.slane %v517, %v525
    %v528 = vunpack.c.l.s4 1966171168
    %v529 = vunpack.c.0.s8 %v528
    %v530 = vlaneseq
    %v531 = vshrl.u32 %v530, 7
    %v532 = vsub.s32 %v529, %v531
    %v533 = vrot.slane %v519, %v532
    %v534 = vcombine.high %v526, %v526
    %v536 = vunpack.c.l.s4 1966171168
    %v537 = vunpack.c.0.s8 %v536
    %v538 = vlaneseq
    %v539 = vshrl.u32 %v538, 7
    %v540 = vsub.s32 %v537, %v539
    %v541 = vrot.slane %v526, %v540
    %v543 = vunpack.c.l.s4 1966171168
    %v544 = vunpack.c.0.s8 %v543
    %v545 = vlaneseq
    %v546 = vshrl.u32 %v545, 7
    %v547 = vsub.s32 %v544, %v546
    %v548 = vrot.slane %v533, %v547
    %v550 = vunpack.c.l.s4 1966171168
    %v551 = vunpack.c.0.s8 %v550
    %v552 = vlaneseq
    %v553 = vshrl.u32 %v552, 7
    %v554 = vsub.s32 %v551, %v553
    %v555 = vrot.slane %v534, %v554
    %v556 = vcombine.high %v541, %v541
    %v557 = vcombine.high %v555, %v555
    %v563 = vsel %vm374, %v548, 0
    %565 = vmatprep.subr.bf16.mxu0 0
    %566 = vmatpush1.bf16.msra.mxu0 %v309
    %567 = vmatprep.subr.bf16.mxu0 0
    %568 = vmatpush1.bf16.msra.mxu0 %v308
    %569 = vmatprep.subr.bf16.mxu0 0
    %570 = vmatpush1.bf16.msra.mxu0 %v307
    %571 = vmatprep.subr.bf16.mxu0 0
    %572 = vmatpush1.bf16.msra.mxu0 %v306
    %573 = vmatprep.subr.bf16.mxu0 0
    %574 = vmatpush1.bf16.msra.mxu0 %v305
    %575 = vmatprep.subr.bf16.mxu0 0
    %576 = vmatpush1.bf16.msra.mxu0 %v304
    %577 = vmatprep.subr.bf16.mxu0 0
    %578 = vmatpush1.bf16.msra.mxu0 %v303
    %579 = vmatprep.subr.bf16.mxu0 0
    %580 = vmatpush1.bf16.msra.mxu0 %v302
    %581 = vmatprep.subr.bf16.mxu0 0
    %582 = vmatpush2.bf16.msra.mxu0 %v317
    %583 = vmatprep.subr.bf16.mxu0 0
    %584 = vmatpush2.bf16.msra.mxu0 %v316
    %585 = vmatprep.subr.bf16.mxu0 0
    %586 = vmatpush2.bf16.msra.mxu0 %v315
    %587 = vmatprep.subr.bf16.mxu0 0
    %588 = vmatpush2.bf16.msra.mxu0 %v314
    %589 = vmatprep.subr.bf16.mxu0 0
    %590 = vmatpush2.bf16.msra.mxu0 %v313
    %591 = vmatprep.subr.bf16.mxu0 0
    %592 = vmatpush2.bf16.msra.mxu0 %v312
    %593 = vmatprep.subr.bf16.mxu0 0
    %594 = vmatpush2.bf16.msra.mxu0 %v311
    %595 = vmatprep.subr.bf16.mxu0 0
    %596 = vmatpush2.bf16.msra.mxu0 %v310
    %597 = vmatprep.mubr.bf16.mxu0 %v555
    %598 = vmatmul.mubr.bf16.gmra.mxu0 %v541
    %v599 = vpop.f32.mrf.mxu0
    %v600 = vadd.f32 %v112, %v599
    %v601 = vpop.f32.mrf.mxu0
    %v602 = vpop.f32.mrf.mxu0
    %v603 = vpop.f32.mrf.mxu0
    %604 = vdwg.mxu0
    %605 = vmatprep.subr.bf16.mxu0 0
    %606 = vmatpush1.bf16.msra.mxu0 %v325
    %607 = vmatprep.subr.bf16.mxu0 0
    %608 = vmatpush1.bf16.msra.mxu0 %v324
    %609 = vmatprep.subr.bf16.mxu0 0
    %610 = vmatpush1.bf16.msra.mxu0 %v323
    %611 = vmatprep.subr.bf16.mxu0 0
    %612 = vmatpush1.bf16.msra.mxu0 %v322
    %613 = vmatprep.subr.bf16.mxu0 0
    %614 = vmatpush1.bf16.msra.mxu0 %v321
    %615 = vmatprep.subr.bf16.mxu0 0
    %616 = vmatpush1.bf16.msra.mxu0 %v320
    %617 = vmatprep.subr.bf16.mxu0 0
    %618 = vmatpush1.bf16.msra.mxu0 %v319
    %619 = vmatprep.subr.bf16.mxu0 0
    %620 = vmatpush1.bf16.msra.mxu0 %v318
    %621 = vmatprep.subr.bf16.mxu0 0
    %622 = vmatpush2.bf16.msra.mxu0 %v333
    %623 = vmatprep.subr.bf16.mxu0 0
    %624 = vmatpush2.bf16.msra.mxu0 %v332
    %625 = vmatprep.subr.bf16.mxu0 0
    %626 = vmatpush2.bf16.msra.mxu0 %v331
    %627 = vmatprep.subr.bf16.mxu0 0
    %628 = vmatpush2.bf16.msra.mxu0 %v330
    %629 = vmatprep.subr.bf16.mxu0 0
    %630 = vmatpush2.bf16.msra.mxu0 %v329
    %631 = vmatprep.subr.bf16.mxu0 0
    %632 = vmatpush2.bf16.msra.mxu0 %v328
    %633 = vmatprep.subr.bf16.mxu0 0
    %634 = vmatpush2.bf16.msra.mxu0 %v327
    %635 = vmatprep.subr.bf16.mxu0 0
    %636 = vmatpush2.bf16.msra.mxu0 %v326
    %637 = vmatprep.mubr.bf16.mxu0 %v557
    %638 = vmatmul.mubr.bf16.gmra.mxu0 %v556
    %v639 = vpop.f32.mrf.mxu0
    %v640 = vadd.f32 %v600, %v639
    %v641 = vpop.f32.mrf.mxu0
    %v642 = vpop.f32.mrf.mxu0
    %v643 = vpop.f32.mrf.mxu0
    %644 = vdwg.mxu0
    %645 = vmatprep.subr.bf16.mxu0 0
    %646 = vmatpush1.bf16.msra.mxu0 0
    %647 = vmatprep.subr.bf16.mxu0 0
    %648 = vmatpush1.bf16.msra.mxu0 0
    %649 = vmatprep.subr.bf16.mxu0 0
    %650 = vmatpush1.bf16.msra.mxu0 0
    %651 = vmatprep.subr.bf16.mxu0 0
    %652 = vmatpush1.bf16.msra.mxu0 0
    %653 = vmatprep.subr.bf16.mxu0 0
    %654 = vmatpush1.bf16.msra.mxu0 %v337
    %655 = vmatprep.subr.bf16.mxu0 0
    %656 = vmatpush1.bf16.msra.mxu0 %v336
    %657 = vmatprep.subr.bf16.mxu0 0
    %658 = vmatpush1.bf16.msra.mxu0 %v335
    %659 = vmatprep.subr.bf16.mxu0 0
    %660 = vmatpush1.bf16.msra.mxu0 %v334
    %661 = vmatprep.subr.bf16.mxu0 0
    %662 = vmatpush2.bf16.msra.mxu0 0
    %663 = vmatprep.subr.bf16.mxu0 0
    %664 = vmatpush2.bf16.msra.mxu0 0
    %665 = vmatprep.subr.bf16.mxu0 0
    %666 = vmatpush2.bf16.msra.mxu0 0
    %667 = vmatprep.subr.bf16.mxu0 0
    %668 = vmatpush2.bf16.msra.mxu0 0
    %669 = vmatprep.subr.bf16.mxu0 0
    %670 = vmatpush2.bf16.msra.mxu0 0
    %671 = vmatprep.subr.bf16.mxu0 0
    %672 = vmatpush2.bf16.msra.mxu0 0
    %673 = vmatprep.subr.bf16.mxu0 0
    %674 = vmatpush2.bf16.msra.mxu0 0
    %675 = vmatprep.subr.bf16.mxu0 0
    %676 = vmatpush2.bf16.msra.mxu0 0
    %677 = vmatprep.mubr.bf16.mxu0 0
    %678 = vmatmul.mubr.bf16.gmra.mxu0 %v563
    %v679 = vpop.f32.mrf.mxu0
    %v680 = vadd.f32 %v640, %v679
    %v681 = vpop.f32.mrf.mxu0
    %v682 = vpop.f32.mrf.mxu0
    %v683 = vpop.f32.mrf.mxu0
    %684 = vdwg.mxu0
    %v685 = vmax.f32 %v680, 0.0
    %v686 = vpack.c.bf16 %v685, %v685
    %v687 = vld [vmem:[%s3 + $0x80] sm:$0xff]
    %v688 = vld [vmem:[%s3 + $0x88] sm:$0xff]
    %v689 = vld [vmem:[%s3 + $0x90] sm:$0xff]
    %v690 = vld [vmem:[%s3 + $0x98] sm:$0xff]
    %v691 = vld [vmem:[%s3 + $0xa0] sm:$0xff]
    %v692 = vld [vmem:[%s3 + $0xa8] sm:$0xff]
    %v693 = vld [vmem:[%s3 + $0xb0] sm:$0xff]
    %v694 = vld [vmem:[%s3 + $0xb8] sm:$0xff]
    %v695 = vld [vmem:[%s3 + $0xc0] sm:$0xff]
    %v696 = vld [vmem:[%s3 + $0xc8] sm:$0xff]
    %v697 = vld [vmem:[%s3 + $0xd0] sm:$0xff]
    %v698 = vld [vmem:[%s3 + $0xd8] sm:$0xff]
    %v699 = vld [vmem:[%s3 + $0xe0] sm:$0xff]
    %v700 = vld [vmem:[%s3 + $0xe8] sm:$0xff]
    %v701 = vld [vmem:[%s3 + $0xf0] sm:$0xff]
    %v702 = vld [vmem:[%s3 + $0xf8] sm:$0xff]
    %v719 = vunpack.c.l.b16 %v687
    %v720 = vunpack.c.h.b16 %v687
    %v721 = vunpack.c.l.b16 %v688
    %v722 = vunpack.c.h.b16 %v688
    %v723 = vunpack.c.l.b16 %v689
    %v724 = vunpack.c.h.b16 %v689
    %v725 = vunpack.c.l.b16 %v690
    %v726 = vunpack.c.h.b16 %v690
    %v727 = vunpack.c.l.b16 %v691
    %v728 = vunpack.c.h.b16 %v691
    %v729 = vunpack.c.l.b16 %v692
    %v730 = vunpack.c.h.b16 %v692
    %v731 = vunpack.c.l.b16 %v693
    %v732 = vunpack.c.h.b16 %v693
    %v733 = vunpack.c.l.b16 %v694
    %v734 = vunpack.c.h.b16 %v694
    %v735 = vunpack.c.l.b16 %v695
    %v736 = vunpack.c.h.b16 %v695
    %v737 = vunpack.c.l.b16 %v696
    %v738 = vunpack.c.h.b16 %v696
    %v739 = vunpack.c.l.b16 %v697
    %v740 = vunpack.c.h.b16 %v697
    %v741 = vunpack.c.l.b16 %v698
    %v742 = vunpack.c.h.b16 %v698
    %v743 = vunpack.c.l.b16 %v699
    %v744 = vunpack.c.h.b16 %v699
    %v745 = vunpack.c.l.b16 %v700
    %v746 = vunpack.c.h.b16 %v700
    %v747 = vunpack.c.l.b16 %v701
    %v748 = vunpack.c.h.b16 %v701
    %v749 = vunpack.c.l.b16 %v702
    %v750 = vunpack.c.h.b16 %v702
    %v751 = vpack.c.b16 %v723, %v719
    %v752 = vpack.c.b16 %v724, %v720
    %v753 = vpack.c.b16 %v725, %v721
    %v754 = vpack.c.b16 %v726, %v722
    %v755 = vpack.c.b16 %v731, %v727
    %v756 = vpack.c.b16 %v732, %v728
    %v757 = vpack.c.b16 %v733, %v729
    %v758 = vpack.c.b16 %v734, %v730
    %v759 = vpack.c.b16 %v739, %v735
    %v760 = vpack.c.b16 %v740, %v736
    %v761 = vpack.c.b16 %v741, %v737
    %v762 = vpack.c.b16 %v742, %v738
    %v763 = vpack.c.b16 %v747, %v743
    %v764 = vpack.c.b16 %v748, %v744
    %v765 = vpack.c.b16 %v749, %v745
    %v766 = vpack.c.b16 %v750, %v746
    %v784 = vsel %vm374, %v686, 0
    %786 = vmatprep.subr.bf16.mxu0 0
    %787 = vmatpush1.bf16.msra.mxu0 0
    %788 = vmatprep.subr.bf16.mxu0 0
    %789 = vmatpush1.bf16.msra.mxu0 0
    %790 = vmatprep.subr.bf16.mxu0 0
    %791 = vmatpush1.bf16.msra.mxu0 0
    %792 = vmatprep.subr.bf16.mxu0 0
    %793 = vmatpush1.bf16.msra.mxu0 0
    %794 = vmatprep.subr.bf16.mxu0 %v764
    %795 = vmatpush1.bf16.msra.mxu0 %v763
    %796 = vmatprep.subr.bf16.mxu0 %v760
    %797 = vmatpush1.bf16.msra.mxu0 %v759
    %798 = vmatprep.subr.bf16.mxu0 %v756
    %799 = vmatpush1.bf16.msra.mxu0 %v755
    %800 = vmatprep.subr.bf16.mxu0 %v752
    %801 = vmatpush1.bf16.msra.mxu0 %v751
    %802 = vmatprep.subr.bf16.mxu0 0
    %803 = vmatpush2.bf16.msra.mxu0 0
    %804 = vmatprep.subr.bf16.mxu0 0
    %805 = vmatpush2.bf16.msra.mxu0 0
    %806 = vmatprep.subr.bf16.mxu0 0
    %807 = vmatpush2.bf16.msra.mxu0 0
    %808 = vmatprep.subr.bf16.mxu0 0
    %809 = vmatpush2.bf16.msra.mxu0 0
    %810 = vmatprep.subr.bf16.mxu0 0
    %811 = vmatpush2.bf16.msra.mxu0 0
    %812 = vmatprep.subr.bf16.mxu0 0
    %813 = vmatpush2.bf16.msra.mxu0 0
    %814 = vmatprep.subr.bf16.mxu0 0
    %815 = vmatpush2.bf16.msra.mxu0 0
    %816 = vmatprep.subr.bf16.mxu0 0
    %817 = vmatpush2.bf16.msra.mxu0 0
    %818 = vmatprep.mubr.bf16.mxu0 0
    %819 = vmatmul.mubr.bf16.gmra.mxu0 %v784
    %v820 = vpop.f32.mrf.mxu0
    %v821 = vadd.f32 0.0, %v820
    %v822 = vpop.f32.mrf.mxu0
    %v823 = vadd.f32 0.0, %v822
    %v824 = vpop.f32.mrf.mxu0
    %v825 = vpop.f32.mrf.mxu0
    %826 = vdwg.mxu0
    %827 = vmatprep.subr.bf16.mxu0 0
    %828 = vmatpush1.bf16.msra.mxu0 0
    %829 = vmatprep.subr.bf16.mxu0 0
    %830 = vmatpush1.bf16.msra.mxu0 0
    %831 = vmatprep.subr.bf16.mxu0 0
    %832 = vmatpush1.bf16.msra.mxu0 0
    %833 = vmatprep.subr.bf16.mxu0 0
    %834 = vmatpush1.bf16.msra.mxu0 0
    %835 = vmatprep.subr.bf16.mxu0 %v766
    %836 = vmatpush1.bf16.msra.mxu0 %v765
    %837 = vmatprep.subr.bf16.mxu0 %v762
    %838 = vmatpush1.bf16.msra.mxu0 %v761
    %839 = vmatprep.subr.bf16.mxu0 %v758
    %840 = vmatpush1.bf16.msra.mxu0 %v757
    %841 = vmatprep.subr.bf16.mxu0 %v754
    %842 = vmatpush1.bf16.msra.mxu0 %v753
    %843 = vmatprep.subr.bf16.mxu0 0
    %844 = vmatpush2.bf16.msra.mxu0 0
    %845 = vmatprep.subr.bf16.mxu0 0
    %846 = vmatpush2.bf16.msra.mxu0 0
    %847 = vmatprep.subr.bf16.mxu0 0
    %848 = vmatpush2.bf16.msra.mxu0 0
    %849 = vmatprep.subr.bf16.mxu0 0
    %850 = vmatpush2.bf16.msra.mxu0 0
    %851 = vmatprep.subr.bf16.mxu0 0
    %852 = vmatpush2.bf16.msra.mxu0 0
    %853 = vmatprep.subr.bf16.mxu0 0
    %854 = vmatpush2.bf16.msra.mxu0 0
    %855 = vmatprep.subr.bf16.mxu0 0
    %856 = vmatpush2.bf16.msra.mxu0 0
    %857 = vmatprep.subr.bf16.mxu0 0
    %858 = vmatpush2.bf16.msra.mxu0 0
    %859 = vmatprep.mubr.bf16.mxu0 0
    %860 = vmatmul.mubr.bf16.gmra.mxu0 %v784
    %v861 = vpop.f32.mrf.mxu0
    %v862 = vadd.f32 0.0, %v861
    %v863 = vpop.f32.mrf.mxu0
    %v864 = vadd.f32 0.0, %v863
    %v865 = vpop.f32.mrf.mxu0
    %v866 = vpop.f32.mrf.mxu0
    %867 = vdwg.mxu0
    %v884 = vunpack.c.l.b16 %v500
    %v885 = vunpack.c.h.b16 %v500
    %v886 = vunpack.c.l.b16 %v501
    %v887 = vunpack.c.h.b16 %v501
    %v888 = vunpack.c.l.b16 %v502
    %v889 = vunpack.c.h.b16 %v502
    %v890 = vunpack.c.l.b16 %v503
    %v891 = vunpack.c.h.b16 %v503
    %v892 = vunpack.c.l.b16 %v504
    %v893 = vunpack.c.h.b16 %v504
    %v894 = vunpack.c.l.b16 %v505
    %v895 = vunpack.c.h.b16 %v505
    %v896 = vunpack.c.l.b16 %v506
    %v897 = vunpack.c.h.b16 %v506
    %v898 = vunpack.c.l.b16 %v507
    %v899 = vunpack.c.h.b16 %v507
    %v900 = vunpack.c.l.b16 %v508
    %v901 = vunpack.c.h.b16 %v508
    %v902 = vunpack.c.l.b16 %v509
    %v903 = vunpack.c.h.b16 %v509
    %v904 = vunpack.c.l.b16 %v510
    %v905 = vunpack.c.h.b16 %v510
    %v906 = vunpack.c.l.b16 %v511
    %v907 = vunpack.c.h.b16 %v511
    %v908 = vunpack.c.l.b16 %v512
    %v909 = vunpack.c.h.b16 %v512
    %v910 = vunpack.c.l.b16 %v513
    %v911 = vunpack.c.h.b16 %v513
    %v912 = vunpack.c.l.b16 %v514
    %v913 = vunpack.c.h.b16 %v514
    %v914 = vunpack.c.l.b16 %v515
    %v915 = vunpack.c.h.b16 %v515
    %v916 = vpack.c.b16 %v888, %v884
    %v917 = vpack.c.b16 %v889, %v885
    %v918 = vpack.c.b16 %v890, %v886
    %v919 = vpack.c.b16 %v891, %v887
    %v920 = vpack.c.b16 %v896, %v892
    %v921 = vpack.c.b16 %v897, %v893
    %v922 = vpack.c.b16 %v898, %v894
    %v923 = vpack.c.b16 %v899, %v895
    %v924 = vpack.c.b16 %v904, %v900
    %v925 = vpack.c.b16 %v905, %v901
    %v926 = vpack.c.b16 %v906, %v902
    %v927 = vpack.c.b16 %v907, %v903
    %v928 = vpack.c.b16 %v912, %v908
    %v929 = vpack.c.b16 %v913, %v909
    %v930 = vpack.c.b16 %v914, %v910
    %v931 = vpack.c.b16 %v915, %v911
    %v949 = vsel %vm374, %v499, 0
    %951 = vmatprep.subr.bf16.mxu0 0
    %952 = vmatpush1.bf16.msra.mxu0 0
    %953 = vmatprep.subr.bf16.mxu0 0
    %954 = vmatpush1.bf16.msra.mxu0 0
    %955 = vmatprep.subr.bf16.mxu0 0
    %956 = vmatpush1.bf16.msra.mxu0 0
    %957 = vmatprep.subr.bf16.mxu0 0
    %958 = vmatpush1.bf16.msra.mxu0 0
    %959 = vmatprep.subr.bf16.mxu0 %v929
    %960 = vmatpush1.bf16.msra.mxu0 %v928
    %961 = vmatprep.subr.bf16.mxu0 %v925
    %962 = vmatpush1.bf16.msra.mxu0 %v924
    %963 = vmatprep.subr.bf16.mxu0 %v921
    %964 = vmatpush1.bf16.msra.mxu0 %v920
    %965 = vmatprep.subr.bf16.mxu0 %v917
    %966 = vmatpush1.bf16.msra.mxu0 %v916
    %967 = vmatprep.subr.bf16.mxu0 0
    %968 = vmatpush2.bf16.msra.mxu0 0
    %969 = vmatprep.subr.bf16.mxu0 0
    %970 = vmatpush2.bf16.msra.mxu0 0
    %971 = vmatprep.subr.bf16.mxu0 0
    %972 = vmatpush2.bf16.msra.mxu0 0
    %973 = vmatprep.subr.bf16.mxu0 0
    %974 = vmatpush2.bf16.msra.mxu0 0
    %975 = vmatprep.subr.bf16.mxu0 0
    %976 = vmatpush2.bf16.msra.mxu0 0
    %977 = vmatprep.subr.bf16.mxu0 0
    %978 = vmatpush2.bf16.msra.mxu0 0
    %979 = vmatprep.subr.bf16.mxu0 0
    %980 = vmatpush2.bf16.msra.mxu0 0
    %981 = vmatprep.subr.bf16.mxu0 0
    %982 = vmatpush2.bf16.msra.mxu0 0
    %983 = vmatprep.mubr.bf16.mxu0 0
    %984 = vmatmul.mubr.bf16.gmra.mxu0 %v949
    %v985 = vpop.f32.mrf.mxu0
    %v986 = vadd.f32 %v821, %v985
    %v987 = vpop.f32.mrf.mxu0
    %v988 = vadd.f32 %v823, %v987
    %v989 = vpop.f32.mrf.mxu0
    %v990 = vpop.f32.mrf.mxu0
    %991 = vdwg.mxu0
    %992 = vmatprep.subr.bf16.mxu0 0
    %993 = vmatpush1.bf16.msra.mxu0 0
    %994 = vmatprep.subr.bf16.mxu0 0
    %995 = vmatpush1.bf16.msra.mxu0 0
    %996 = vmatprep.subr.bf16.mxu0 0
    %997 = vmatpush1.bf16.msra.mxu0 0
    %998 = vmatprep.subr.bf16.mxu0 0
    %999 = vmatpush1.bf16.msra.mxu0 0
    %1000 = vmatprep.subr.bf16.mxu0 %v931
    %1001 = vmatpush1.bf16.msra.mxu0 %v930
    %1002 = vmatprep.subr.bf16.mxu0 %v927
    %1003 = vmatpush1.bf16.msra.mxu0 %v926
    %1004 = vmatprep.subr.bf16.mxu0 %v923
    %1005 = vmatpush1.bf16.msra.mxu0 %v922
    %1006 = vmatprep.subr.bf16.mxu0 %v919
    %1007 = vmatpush1.bf16.msra.mxu0 %v918
    %1008 = vmatprep.subr.bf16.mxu0 0
    %1009 = vmatpush2.bf16.msra.mxu0 0
    %1010 = vmatprep.subr.bf16.mxu0 0
    %1011 = vmatpush2.bf16.msra.mxu0 0
    %1012 = vmatprep.subr.bf16.mxu0 0
    %1013 = vmatpush2.bf16.msra.mxu0 0
    %1014 = vmatprep.subr.bf16.mxu0 0
    %1015 = vmatpush2.bf16.msra.mxu0 0
    %1016 = vmatprep.subr.bf16.mxu0 0
    %1017 = vmatpush2.bf16.msra.mxu0 0
    %1018 = vmatprep.subr.bf16.mxu0 0
    %1019 = vmatpush2.bf16.msra.mxu0 0
    %1020 = vmatprep.subr.bf16.mxu0 0
    %1021 = vmatpush2.bf16.msra.mxu0 0
    %1022 = vmatprep.subr.bf16.mxu0 0
    %1023 = vmatpush2.bf16.msra.mxu0 0
    %1024 = vmatprep.mubr.bf16.mxu0 0
    %1025 = vmatmul.mubr.bf16.gmra.mxu0 %v949
    %v1026 = vpop.f32.mrf.mxu0
    %v1027 = vadd.f32 %v862, %v1026
    %v1028 = vpop.f32.mrf.mxu0
    %v1029 = vadd.f32 %v864, %v1028
    %v1030 = vpop.f32.mrf.mxu0
    %v1031 = vpop.f32.mrf.mxu0
    %1032 = vdwg.mxu0
    %s1033 = scalar_lea.vmem %s0, 10
    %v1034 = vld [vmem:[%s1033] sm:$0x1f]
    %v1036 = vcombine.high %v1034, %v1034
    %v1038 = vunpack.c.l.s4 1966171168
    %v1039 = vunpack.c.0.s8 %v1038
    %v1040 = vlaneseq
    %v1041 = vshrl.u32 %v1040, 7
    %v1042 = vsub.s32 %v1039, %v1041
    %v1043 = vrot.slane %v1034, %v1042
    %v1045 = vunpack.c.l.s4 1966171168
    %v1046 = vunpack.c.0.s8 %v1045
    %v1047 = vlaneseq
    %v1048 = vshrl.u32 %v1047, 7
    %v1049 = vsub.s32 %v1046, %v1048
    %v1050 = vrot.slane %v1036, %v1049
    %v1051 = vcombine.high %v1043, %v1043
    %v1053 = vunpack.c.l.s4 1966171168
    %v1054 = vunpack.c.0.s8 %v1053
    %v1055 = vlaneseq
    %v1056 = vshrl.u32 %v1055, 7
    %v1057 = vsub.s32 %v1054, %v1056
    %v1058 = vrot.slane %v1043, %v1057
    %v1060 = vunpack.c.l.s4 1966171168
    %v1061 = vunpack.c.0.s8 %v1060
    %v1062 = vlaneseq
    %v1063 = vshrl.u32 %v1062, 7
    %v1064 = vsub.s32 %v1061, %v1063
    %v1065 = vrot.slane %v1050, %v1064
    %v1067 = vunpack.c.l.s4 1966171168
    %v1068 = vunpack.c.0.s8 %v1067
    %v1069 = vlaneseq
    %v1070 = vshrl.u32 %v1069, 7
    %v1071 = vsub.s32 %v1068, %v1070
    %v1072 = vrot.slane %v1051, %v1071
    %v1073 = vcombine.high %v1058, %v1058
    %v1074 = vcombine.high %v1072, %v1072
    %v1080 = vsel %vm374, %v1065, 0
    %1082 = vmatprep.subr.bf16.mxu0 0
    %1083 = vmatpush1.bf16.msra.mxu0 %v309
    %1084 = vmatprep.subr.bf16.mxu0 0
    %1085 = vmatpush1.bf16.msra.mxu0 %v308
    %1086 = vmatprep.subr.bf16.mxu0 0
    %1087 = vmatpush1.bf16.msra.mxu0 %v307
    %1088 = vmatprep.subr.bf16.mxu0 0
    %1089 = vmatpush1.bf16.msra.mxu0 %v306
    %1090 = vmatprep.subr.bf16.mxu0 0
    %1091 = vmatpush1.bf16.msra.mxu0 %v305
    %1092 = vmatprep.subr.bf16.mxu0 0
    %1093 = vmatpush1.bf16.msra.mxu0 %v304
    %1094 = vmatprep.subr.bf16.mxu0 0
    %1095 = vmatpush1.bf16.msra.mxu0 %v303
    %1096 = vmatprep.subr.bf16.mxu0 0
    %1097 = vmatpush1.bf16.msra.mxu0 %v302
    %1098 = vmatprep.subr.bf16.mxu0 0
    %1099 = vmatpush2.bf16.msra.mxu0 %v317
    %1100 = vmatprep.subr.bf16.mxu0 0
    %1101 = vmatpush2.bf16.msra.mxu0 %v316
    %1102 = vmatprep.subr.bf16.mxu0 0
    %1103 = vmatpush2.bf16.msra.mxu0 %v315
    %1104 = vmatprep.subr.bf16.mxu0 0
    %1105 = vmatpush2.bf16.msra.mxu0 %v314
    %1106 = vmatprep.subr.bf16.mxu0 0
    %1107 = vmatpush2.bf16.msra.mxu0 %v313
    %1108 = vmatprep.subr.bf16.mxu0 0
    %1109 = vmatpush2.bf16.msra.mxu0 %v312
    %1110 = vmatprep.subr.bf16.mxu0 0
    %1111 = vmatpush2.bf16.msra.mxu0 %v311
    %1112 = vmatprep.subr.bf16.mxu0 0
    %1113 = vmatpush2.bf16.msra.mxu0 %v310
    %1114 = vmatprep.mubr.bf16.mxu0 %v1072
    %1115 = vmatmul.mubr.bf16.gmra.mxu0 %v1058
    %v1116 = vpop.f32.mrf.mxu0
    %v1117 = vadd.f32 %v112, %v1116
    %v1118 = vpop.f32.mrf.mxu0
    %v1119 = vpop.f32.mrf.mxu0
    %v1120 = vpop.f32.mrf.mxu0
    %1121 = vdwg.mxu0
    %1122 = vmatprep.subr.bf16.mxu0 0
    %1123 = vmatpush1.bf16.msra.mxu0 %v325
    %1124 = vmatprep.subr.bf16.mxu0 0
    %1125 = vmatpush1.bf16.msra.mxu0 %v324
    %1126 = vmatprep.subr.bf16.mxu0 0
    %1127 = vmatpush1.bf16.msra.mxu0 %v323
    %1128 = vmatprep.subr.bf16.mxu0 0
    %1129 = vmatpush1.bf16.msra.mxu0 %v322
    %1130 = vmatprep.subr.bf16.mxu0 0
    %1131 = vmatpush1.bf16.msra.mxu0 %v321
    %1132 = vmatprep.subr.bf16.mxu0 0
    %1133 = vmatpush1.bf16.msra.mxu0 %v320
    %1134 = vmatprep.subr.bf16.mxu0 0
    %1135 = vmatpush1.bf16.msra.mxu0 %v319
    %1136 = vmatprep.subr.bf16.mxu0 0
    %1137 = vmatpush1.bf16.msra.mxu0 %v318
    %1138 = vmatprep.subr.bf16.mxu0 0
    %1139 = vmatpush2.bf16.msra.mxu0 %v333
    %1140 = vmatprep.subr.bf16.mxu0 0
    %1141 = vmatpush2.bf16.msra.mxu0 %v332
    %1142 = vmatprep.subr.bf16.mxu0 0
    %1143 = vmatpush2.bf16.msra.mxu0 %v331
    %1144 = vmatprep.subr.bf16.mxu0 0
    %1145 = vmatpush2.bf16.msra.mxu0 %v330
    %1146 = vmatprep.subr.bf16.mxu0 0
    %1147 = vmatpush2.bf16.msra.mxu0 %v329
    %1148 = vmatprep.subr.bf16.mxu0 0
    %1149 = vmatpush2.bf16.msra.mxu0 %v328
    %1150 = vmatprep.subr.bf16.mxu0 0
    %1151 = vmatpush2.bf16.msra.mxu0 %v327
    %1152 = vmatprep.subr.bf16.mxu0 0
    %1153 = vmatpush2.bf16.msra.mxu0 %v326
    %1154 = vmatprep.mubr.bf16.mxu0 %v1074
    %1155 = vmatmul.mubr.bf16.gmra.mxu0 %v1073
    %v1156 = vpop.f32.mrf.mxu0
    %v1157 = vadd.f32 %v1117, %v1156
    %v1158 = vpop.f32.mrf.mxu0
    %v1159 = vpop.f32.mrf.mxu0
    %v1160 = vpop.f32.mrf.mxu0
    %1161 = vdwg.mxu0
    %1162 = vmatprep.subr.bf16.mxu0 0
    %1163 = vmatpush1.bf16.msra.mxu0 0
    %1164 = vmatprep.subr.bf16.mxu0 0
    %1165 = vmatpush1.bf16.msra.mxu0 0
    %1166 = vmatprep.subr.bf16.mxu0 0
    %1167 = vmatpush1.bf16.msra.mxu0 0
    %1168 = vmatprep.subr.bf16.mxu0 0
    %1169 = vmatpush1.bf16.msra.mxu0 0
    %1170 = vmatprep.subr.bf16.mxu0 0
    %1171 = vmatpush1.bf16.msra.mxu0 %v337
    %1172 = vmatprep.subr.bf16.mxu0 0
    %1173 = vmatpush1.bf16.msra.mxu0 %v336
    %1174 = vmatprep.subr.bf16.mxu0 0
    %1175 = vmatpush1.bf16.msra.mxu0 %v335
    %1176 = vmatprep.subr.bf16.mxu0 0
    %1177 = vmatpush1.bf16.msra.mxu0 %v334
    %1178 = vmatprep.subr.bf16.mxu0 0
    %1179 = vmatpush2.bf16.msra.mxu0 0
    %1180 = vmatprep.subr.bf16.mxu0 0
    %1181 = vmatpush2.bf16.msra.mxu0 0
    %1182 = vmatprep.subr.bf16.mxu0 0
    %1183 = vmatpush2.bf16.msra.mxu0 0
    %1184 = vmatprep.subr.bf16.mxu0 0
    %1185 = vmatpush2.bf16.msra.mxu0 0
    %1186 = vmatprep.subr.bf16.mxu0 0
    %1187 = vmatpush2.bf16.msra.mxu0 0
    %1188 = vmatprep.subr.bf16.mxu0 0
    %1189 = vmatpush2.bf16.msra.mxu0 0
    %1190 = vmatprep.subr.bf16.mxu0 0
    %1191 = vmatpush2.bf16.msra.mxu0 0
    %1192 = vmatprep.subr.bf16.mxu0 0
    %1193 = vmatpush2.bf16.msra.mxu0 0
    %1194 = vmatprep.mubr.bf16.mxu0 0
    %1195 = vmatmul.mubr.bf16.gmra.mxu0 %v1080
    %v1196 = vpop.f32.mrf.mxu0
    %v1197 = vadd.f32 %v1157, %v1196
    %v1198 = vpop.f32.mrf.mxu0
    %v1199 = vpop.f32.mrf.mxu0
    %v1200 = vpop.f32.mrf.mxu0
    %1201 = vdwg.mxu0
    %v1202 = vmax.f32 %v1197, 0.0
    %v1203 = vpack.c.bf16 %v1202, %v1202
    %v1204 = vld [vmem:[%s3 + $0x100] sm:$0xff]
    %v1205 = vld [vmem:[%s3 + $0x108] sm:$0xff]
    %v1206 = vld [vmem:[%s3 + $0x110] sm:$0xff]
    %v1207 = vld [vmem:[%s3 + $0x118] sm:$0xff]
    %v1208 = vld [vmem:[%s3 + $0x120] sm:$0xff]
    %v1209 = vld [vmem:[%s3 + $0x128] sm:$0xff]
    %v1210 = vld [vmem:[%s3 + $0x130] sm:$0xff]
    %v1211 = vld [vmem:[%s3 + $0x138] sm:$0xff]
    %v1212 = vld [vmem:[%s3 + $0x140] sm:$0xff]
    %v1213 = vld [vmem:[%s3 + $0x148] sm:$0xff]
    %v1214 = vld [vmem:[%s3 + $0x150] sm:$0xff]
    %v1215 = vld [vmem:[%s3 + $0x158] sm:$0xff]
    %v1216 = vld [vmem:[%s3 + $0x160] sm:$0xff]
    %v1217 = vld [vmem:[%s3 + $0x168] sm:$0xff]
    %v1218 = vld [vmem:[%s3 + $0x170] sm:$0xff]
    %v1219 = vld [vmem:[%s3 + $0x178] sm:$0xff]
    %v1236 = vunpack.c.l.b16 %v1204
    %v1237 = vunpack.c.h.b16 %v1204
    %v1238 = vunpack.c.l.b16 %v1205
    %v1239 = vunpack.c.h.b16 %v1205
    %v1240 = vunpack.c.l.b16 %v1206
    %v1241 = vunpack.c.h.b16 %v1206
    %v1242 = vunpack.c.l.b16 %v1207
    %v1243 = vunpack.c.h.b16 %v1207
    %v1244 = vunpack.c.l.b16 %v1208
    %v1245 = vunpack.c.h.b16 %v1208
    %v1246 = vunpack.c.l.b16 %v1209
    %v1247 = vunpack.c.h.b16 %v1209
    %v1248 = vunpack.c.l.b16 %v1210
    %v1249 = vunpack.c.h.b16 %v1210
    %v1250 = vunpack.c.l.b16 %v1211
    %v1251 = vunpack.c.h.b16 %v1211
    %v1252 = vunpack.c.l.b16 %v1212
    %v1253 = vunpack.c.h.b16 %v1212
    %v1254 = vunpack.c.l.b16 %v1213
    %v1255 = vunpack.c.h.b16 %v1213
    %v1256 = vunpack.c.l.b16 %v1214
    %v1257 = vunpack.c.h.b16 %v1214
    %v1258 = vunpack.c.l.b16 %v1215
    %v1259 = vunpack.c.h.b16 %v1215
    %v1260 = vunpack.c.l.b16 %v1216
    %v1261 = vunpack.c.h.b16 %v1216
    %v1262 = vunpack.c.l.b16 %v1217
    %v1263 = vunpack.c.h.b16 %v1217
    %v1264 = vunpack.c.l.b16 %v1218
    %v1265 = vunpack.c.h.b16 %v1218
    %v1266 = vunpack.c.l.b16 %v1219
    %v1267 = vunpack.c.h.b16 %v1219
    %v1268 = vpack.c.b16 %v1240, %v1236
    %v1269 = vpack.c.b16 %v1241, %v1237
    %v1270 = vpack.c.b16 %v1242, %v1238
    %v1271 = vpack.c.b16 %v1243, %v1239
    %v1272 = vpack.c.b16 %v1248, %v1244
    %v1273 = vpack.c.b16 %v1249, %v1245
    %v1274 = vpack.c.b16 %v1250, %v1246
    %v1275 = vpack.c.b16 %v1251, %v1247
    %v1276 = vpack.c.b16 %v1256, %v1252
    %v1277 = vpack.c.b16 %v1257, %v1253
    %v1278 = vpack.c.b16 %v1258, %v1254
    %v1279 = vpack.c.b16 %v1259, %v1255
    %v1280 = vpack.c.b16 %v1264, %v1260
    %v1281 = vpack.c.b16 %v1265, %v1261
    %v1282 = vpack.c.b16 %v1266, %v1262
    %v1283 = vpack.c.b16 %v1267, %v1263
    %v1301 = vsel %vm374, %v1203, 0
    %1303 = vmatprep.subr.bf16.mxu0 0
    %1304 = vmatpush1.bf16.msra.mxu0 0
    %1305 = vmatprep.subr.bf16.mxu0 0
    %1306 = vmatpush1.bf16.msra.mxu0 0
    %1307 = vmatprep.subr.bf16.mxu0 0
    %1308 = vmatpush1.bf16.msra.mxu0 0
    %1309 = vmatprep.subr.bf16.mxu0 0
    %1310 = vmatpush1.bf16.msra.mxu0 0
    %1311 = vmatprep.subr.bf16.mxu0 %v1281
    %1312 = vmatpush1.bf16.msra.mxu0 %v1280
    %1313 = vmatprep.subr.bf16.mxu0 %v1277
    %1314 = vmatpush1.bf16.msra.mxu0 %v1276
    %1315 = vmatprep.subr.bf16.mxu0 %v1273
    %1316 = vmatpush1.bf16.msra.mxu0 %v1272
    %1317 = vmatprep.subr.bf16.mxu0 %v1269
    %1318 = vmatpush1.bf16.msra.mxu0 %v1268
    %1319 = vmatprep.subr.bf16.mxu0 0
    %1320 = vmatpush2.bf16.msra.mxu0 0
    %1321 = vmatprep.subr.bf16.mxu0 0
    %1322 = vmatpush2.bf16.msra.mxu0 0
    %1323 = vmatprep.subr.bf16.mxu0 0
    %1324 = vmatpush2.bf16.msra.mxu0 0
    %1325 = vmatprep.subr.bf16.mxu0 0
    %1326 = vmatpush2.bf16.msra.mxu0 0
    %1327 = vmatprep.subr.bf16.mxu0 0
    %1328 = vmatpush2.bf16.msra.mxu0 0
    %1329 = vmatprep.subr.bf16.mxu0 0
    %1330 = vmatpush2.bf16.msra.mxu0 0
    %1331 = vmatprep.subr.bf16.mxu0 0
    %1332 = vmatpush2.bf16.msra.mxu0 0
    %1333 = vmatprep.subr.bf16.mxu0 0
    %1334 = vmatpush2.bf16.msra.mxu0 0
    %1335 = vmatprep.mubr.bf16.mxu0 0
    %1336 = vmatmul.mubr.bf16.gmra.mxu0 %v1301
    %v1337 = vpop.f32.mrf.mxu0
    %v1338 = vadd.f32 0.0, %v1337
    %v1339 = vpop.f32.mrf.mxu0
    %v1340 = vadd.f32 0.0, %v1339
    %v1341 = vpop.f32.mrf.mxu0
    %v1342 = vpop.f32.mrf.mxu0
    %1343 = vdwg.mxu0
    %1344 = vmatprep.subr.bf16.mxu0 0
    %1345 = vmatpush1.bf16.msra.mxu0 0
    %1346 = vmatprep.subr.bf16.mxu0 0
    %1347 = vmatpush1.bf16.msra.mxu0 0
    %1348 = vmatprep.subr.bf16.mxu0 0
    %1349 = vmatpush1.bf16.msra.mxu0 0
    %1350 = vmatprep.subr.bf16.mxu0 0
    %1351 = vmatpush1.bf16.msra.mxu0 0
    %1352 = vmatprep.subr.bf16.mxu0 %v1283
    %1353 = vmatpush1.bf16.msra.mxu0 %v1282
    %1354 = vmatprep.subr.bf16.mxu0 %v1279
    %1355 = vmatpush1.bf16.msra.mxu0 %v1278
    %1356 = vmatprep.subr.bf16.mxu0 %v1275
    %1357 = vmatpush1.bf16.msra.mxu0 %v1274
    %1358 = vmatprep.subr.bf16.mxu0 %v1271
    %1359 = vmatpush1.bf16.msra.mxu0 %v1270
    %1360 = vmatprep.subr.bf16.mxu0 0
    %1361 = vmatpush2.bf16.msra.mxu0 0
    %1362 = vmatprep.subr.bf16.mxu0 0
    %1363 = vmatpush2.bf16.msra.mxu0 0
    %1364 = vmatprep.subr.bf16.mxu0 0
    %1365 = vmatpush2.bf16.msra.mxu0 0
    %1366 = vmatprep.subr.bf16.mxu0 0
    %1367 = vmatpush2.bf16.msra.mxu0 0
    %1368 = vmatprep.subr.bf16.mxu0 0
    %1369 = vmatpush2.bf16.msra.mxu0 0
    %1370 = vmatprep.subr.bf16.mxu0 0
    %1371 = vmatpush2.bf16.msra.mxu0 0
    %1372 = vmatprep.subr.bf16.mxu0 0
    %1373 = vmatpush2.bf16.msra.mxu0 0
    %1374 = vmatprep.subr.bf16.mxu0 0
    %1375 = vmatpush2.bf16.msra.mxu0 0
    %1376 = vmatprep.mubr.bf16.mxu0 0
    %1377 = vmatmul.mubr.bf16.gmra.mxu0 %v1301
    %v1378 = vpop.f32.mrf.mxu0
    %v1379 = vadd.f32 0.0, %v1378
    %v1380 = vpop.f32.mrf.mxu0
    %v1381 = vadd.f32 0.0, %v1380
    %v1382 = vpop.f32.mrf.mxu0
    %v1383 = vpop.f32.mrf.mxu0
    %1384 = vdwg.mxu0
    %v1385 = vadd.f32 %v986, %v1338
    %v1386 = vadd.f32 %v988, %v1340
    %v1387 = vadd.f32 %v1027, %v1379
    %v1388 = vadd.f32 %v1029, %v1381
    %s1389 = scalar_lea.vmem %s0, 15
    %v1390 = vld [vmem:[%s1389] sm:$0x1f]
    %v1392 = vcombine.high %v1390, %v1390
    %v1394 = vunpack.c.l.s4 1966171168
    %v1395 = vunpack.c.0.s8 %v1394
    %v1396 = vlaneseq
    %v1397 = vshrl.u32 %v1396, 7
    %v1398 = vsub.s32 %v1395, %v1397
    %v1399 = vrot.slane %v1390, %v1398
    %v1401 = vunpack.c.l.s4 1966171168
    %v1402 = vunpack.c.0.s8 %v1401
    %v1403 = vlaneseq
    %v1404 = vshrl.u32 %v1403, 7
    %v1405 = vsub.s32 %v1402, %v1404
    %v1406 = vrot.slane %v1392, %v1405
    %v1407 = vcombine.high %v1399, %v1399
    %v1409 = vunpack.c.l.s4 1966171168
    %v1410 = vunpack.c.0.s8 %v1409
    %v1411 = vlaneseq
    %v1412 = vshrl.u32 %v1411, 7
    %v1413 = vsub.s32 %v1410, %v1412
    %v1414 = vrot.slane %v1399, %v1413
    %v1416 = vunpack.c.l.s4 1966171168
    %v1417 = vunpack.c.0.s8 %v1416
    %v1418 = vlaneseq
    %v1419 = vshrl.u32 %v1418, 7
    %v1420 = vsub.s32 %v1417, %v1419
    %v1421 = vrot.slane %v1406, %v1420
    %v1423 = vunpack.c.l.s4 1966171168
    %v1424 = vunpack.c.0.s8 %v1423
    %v1425 = vlaneseq
    %v1426 = vshrl.u32 %v1425, 7
    %v1427 = vsub.s32 %v1424, %v1426
    %v1428 = vrot.slane %v1407, %v1427
    %v1429 = vcombine.high %v1414, %v1414
    %v1430 = vcombine.high %v1428, %v1428
    %v1436 = vsel %vm374, %v1421, 0
    %1438 = vmatprep.subr.bf16.mxu0 0
    %1439 = vmatpush1.bf16.msra.mxu0 %v309
    %1440 = vmatprep.subr.bf16.mxu0 0
    %1441 = vmatpush1.bf16.msra.mxu0 %v308
    %1442 = vmatprep.subr.bf16.mxu0 0
    %1443 = vmatpush1.bf16.msra.mxu0 %v307
    %1444 = vmatprep.subr.bf16.mxu0 0
    %1445 = vmatpush1.bf16.msra.mxu0 %v306
    %1446 = vmatprep.subr.bf16.mxu0 0
    %1447 = vmatpush1.bf16.msra.mxu0 %v305
    %1448 = vmatprep.subr.bf16.mxu0 0
    %1449 = vmatpush1.bf16.msra.mxu0 %v304
    %1450 = vmatprep.subr.bf16.mxu0 0
    %1451 = vmatpush1.bf16.msra.mxu0 %v303
    %1452 = vmatprep.subr.bf16.mxu0 0
    %1453 = vmatpush1.bf16.msra.mxu0 %v302
    %1454 = vmatprep.subr.bf16.mxu0 0
    %1455 = vmatpush2.bf16.msra.mxu0 %v317
    %1456 = vmatprep.subr.bf16.mxu0 0
    %1457 = vmatpush2.bf16.msra.mxu0 %v316
    %1458 = vmatprep.subr.bf16.mxu0 0
    %1459 = vmatpush2.bf16.msra.mxu0 %v315
    %1460 = vmatprep.subr.bf16.mxu0 0
    %1461 = vmatpush2.bf16.msra.mxu0 %v314
    %1462 = vmatprep.subr.bf16.mxu0 0
    %1463 = vmatpush2.bf16.msra.mxu0 %v313
    %1464 = vmatprep.subr.bf16.mxu0 0
    %1465 = vmatpush2.bf16.msra.mxu0 %v312
    %1466 = vmatprep.subr.bf16.mxu0 0
    %1467 = vmatpush2.bf16.msra.mxu0 %v311
    %1468 = vmatprep.subr.bf16.mxu0 0
    %1469 = vmatpush2.bf16.msra.mxu0 %v310
    %1470 = vmatprep.mubr.bf16.mxu0 %v1428
    %1471 = vmatmul.mubr.bf16.gmra.mxu0 %v1414
    %v1472 = vpop.f32.mrf.mxu0
    %v1473 = vadd.f32 %v112, %v1472
    %v1474 = vpop.f32.mrf.mxu0
    %v1475 = vpop.f32.mrf.mxu0
    %v1476 = vpop.f32.mrf.mxu0
    %1477 = vdwg.mxu0
    %1478 = vmatprep.subr.bf16.mxu0 0
    %1479 = vmatpush1.bf16.msra.mxu0 %v325
    %1480 = vmatprep.subr.bf16.mxu0 0
    %1481 = vmatpush1.bf16.msra.mxu0 %v324
    %1482 = vmatprep.subr.bf16.mxu0 0
    %1483 = vmatpush1.bf16.msra.mxu0 %v323
    %1484 = vmatprep.subr.bf16.mxu0 0
    %1485 = vmatpush1.bf16.msra.mxu0 %v322
    %1486 = vmatprep.subr.bf16.mxu0 0
    %1487 = vmatpush1.bf16.msra.mxu0 %v321
    %1488 = vmatprep.subr.bf16.mxu0 0
    %1489 = vmatpush1.bf16.msra.mxu0 %v320
    %1490 = vmatprep.subr.bf16.mxu0 0
    %1491 = vmatpush1.bf16.msra.mxu0 %v319
    %1492 = vmatprep.subr.bf16.mxu0 0
    %1493 = vmatpush1.bf16.msra.mxu0 %v318
    %1494 = vmatprep.subr.bf16.mxu0 0
    %1495 = vmatpush2.bf16.msra.mxu0 %v333
    %1496 = vmatprep.subr.bf16.mxu0 0
    %1497 = vmatpush2.bf16.msra.mxu0 %v332
    %1498 = vmatprep.subr.bf16.mxu0 0
    %1499 = vmatpush2.bf16.msra.mxu0 %v331
    %1500 = vmatprep.subr.bf16.mxu0 0
    %1501 = vmatpush2.bf16.msra.mxu0 %v330
    %1502 = vmatprep.subr.bf16.mxu0 0
    %1503 = vmatpush2.bf16.msra.mxu0 %v329
    %1504 = vmatprep.subr.bf16.mxu0 0
    %1505 = vmatpush2.bf16.msra.mxu0 %v328
    %1506 = vmatprep.subr.bf16.mxu0 0
    %1507 = vmatpush2.bf16.msra.mxu0 %v327
    %1508 = vmatprep.subr.bf16.mxu0 0
    %1509 = vmatpush2.bf16.msra.mxu0 %v326
    %1510 = vmatprep.mubr.bf16.mxu0 %v1430
    %1511 = vmatmul.mubr.bf16.gmra.mxu0 %v1429
    %v1512 = vpop.f32.mrf.mxu0
    %v1513 = vadd.f32 %v1473, %v1512
    %v1514 = vpop.f32.mrf.mxu0
    %v1515 = vpop.f32.mrf.mxu0
    %v1516 = vpop.f32.mrf.mxu0
    %1517 = vdwg.mxu0
    %1518 = vmatprep.subr.bf16.mxu0 0
    %1519 = vmatpush1.bf16.msra.mxu0 0
    %1520 = vmatprep.subr.bf16.mxu0 0
    %1521 = vmatpush1.bf16.msra.mxu0 0
    %1522 = vmatprep.subr.bf16.mxu0 0
    %1523 = vmatpush1.bf16.msra.mxu0 0
    %1524 = vmatprep.subr.bf16.mxu0 0
    %1525 = vmatpush1.bf16.msra.mxu0 0
    %1526 = vmatprep.subr.bf16.mxu0 0
    %1527 = vmatpush1.bf16.msra.mxu0 %v337
    %1528 = vmatprep.subr.bf16.mxu0 0
    %1529 = vmatpush1.bf16.msra.mxu0 %v336
    %1530 = vmatprep.subr.bf16.mxu0 0
    %1531 = vmatpush1.bf16.msra.mxu0 %v335
    %1532 = vmatprep.subr.bf16.mxu0 0
    %1533 = vmatpush1.bf16.msra.mxu0 %v334
    %1534 = vmatprep.subr.bf16.mxu0 0
    %1535 = vmatpush2.bf16.msra.mxu0 0
    %1536 = vmatprep.subr.bf16.mxu0 0
    %1537 = vmatpush2.bf16.msra.mxu0 0
    %1538 = vmatprep.subr.bf16.mxu0 0
    %1539 = vmatpush2.bf16.msra.mxu0 0
    %1540 = vmatprep.subr.bf16.mxu0 0
    %1541 = vmatpush2.bf16.msra.mxu0 0
    %1542 = vmatprep.subr.bf16.mxu0 0
    %1543 = vmatpush2.bf16.msra.mxu0 0
    %1544 = vmatprep.subr.bf16.mxu0 0
    %1545 = vmatpush2.bf16.msra.mxu0 0
    %1546 = vmatprep.subr.bf16.mxu0 0
    %1547 = vmatpush2.bf16.msra.mxu0 0
    %1548 = vmatprep.subr.bf16.mxu0 0
    %1549 = vmatpush2.bf16.msra.mxu0 0
    %1550 = vmatprep.mubr.bf16.mxu0 0
    %1551 = vmatmul.mubr.bf16.gmra.mxu0 %v1436
    %v1552 = vpop.f32.mrf.mxu0
    %v1553 = vadd.f32 %v1513, %v1552
    %v1554 = vpop.f32.mrf.mxu0
    %v1555 = vpop.f32.mrf.mxu0
    %v1556 = vpop.f32.mrf.mxu0
    %1557 = vdwg.mxu0
    %v1558 = vmax.f32 %v1553, 0.0
    %v1559 = vpack.c.bf16 %v1558, %v1558
    %v1560 = vld [vmem:[%s3 + $0x180] sm:$0xff]
    %v1561 = vld [vmem:[%s3 + $0x188] sm:$0xff]
    %v1562 = vld [vmem:[%s3 + $0x190] sm:$0xff]
    %v1563 = vld [vmem:[%s3 + $0x198] sm:$0xff]
    %v1564 = vld [vmem:[%s3 + $0x1a0] sm:$0xff]
    %v1565 = vld [vmem:[%s3 + $0x1a8] sm:$0xff]
    %v1566 = vld [vmem:[%s3 + $0x1b0] sm:$0xff]
    %v1567 = vld [vmem:[%s3 + $0x1b8] sm:$0xff]
    %v1568 = vld [vmem:[%s3 + $0x1c0] sm:$0xff]
    %v1569 = vld [vmem:[%s3 + $0x1c8] sm:$0xff]
    %v1570 = vld [vmem:[%s3 + $0x1d0] sm:$0xff]
    %v1571 = vld [vmem:[%s3 + $0x1d8] sm:$0xff]
    %v1572 = vld [vmem:[%s3 + $0x1e0] sm:$0xff]
    %v1573 = vld [vmem:[%s3 + $0x1e8] sm:$0xff]
    %v1574 = vld [vmem:[%s3 + $0x1f0] sm:$0xff]
    %v1575 = vld [vmem:[%s3 + $0x1f8] sm:$0xff]
    %v1592 = vunpack.c.l.b16 %v1560
    %v1593 = vunpack.c.h.b16 %v1560
    %v1594 = vunpack.c.l.b16 %v1561
    %v1595 = vunpack.c.h.b16 %v1561
    %v1596 = vunpack.c.l.b16 %v1562
    %v1597 = vunpack.c.h.b16 %v1562
    %v1598 = vunpack.c.l.b16 %v1563
    %v1599 = vunpack.c.h.b16 %v1563
    %v1600 = vunpack.c.l.b16 %v1564
    %v1601 = vunpack.c.h.b16 %v1564
    %v1602 = vunpack.c.l.b16 %v1565
    %v1603 = vunpack.c.h.b16 %v1565
    %v1604 = vunpack.c.l.b16 %v1566
    %v1605 = vunpack.c.h.b16 %v1566
    %v1606 = vunpack.c.l.b16 %v1567
    %v1607 = vunpack.c.h.b16 %v1567
    %v1608 = vunpack.c.l.b16 %v1568
    %v1609 = vunpack.c.h.b16 %v1568
    %v1610 = vunpack.c.l.b16 %v1569
    %v1611 = vunpack.c.h.b16 %v1569
    %v1612 = vunpack.c.l.b16 %v1570
    %v1613 = vunpack.c.h.b16 %v1570
    %v1614 = vunpack.c.l.b16 %v1571
    %v1615 = vunpack.c.h.b16 %v1571
    %v1616 = vunpack.c.l.b16 %v1572
    %v1617 = vunpack.c.h.b16 %v1572
    %v1618 = vunpack.c.l.b16 %v1573
    %v1619 = vunpack.c.h.b16 %v1573
    %v1620 = vunpack.c.l.b16 %v1574
    %v1621 = vunpack.c.h.b16 %v1574
    %v1622 = vunpack.c.l.b16 %v1575
    %v1623 = vunpack.c.h.b16 %v1575
    %v1624 = vpack.c.b16 %v1596, %v1592
    %v1625 = vpack.c.b16 %v1597, %v1593
    %v1626 = vpack.c.b16 %v1598, %v1594
    %v1627 = vpack.c.b16 %v1599, %v1595
    %v1628 = vpack.c.b16 %v1604, %v1600
    %v1629 = vpack.c.b16 %v1605, %v1601
    %v1630 = vpack.c.b16 %v1606, %v1602
    %v1631 = vpack.c.b16 %v1607, %v1603
    %v1632 = vpack.c.b16 %v1612, %v1608
    %v1633 = vpack.c.b16 %v1613, %v1609
    %v1634 = vpack.c.b16 %v1614, %v1610
    %v1635 = vpack.c.b16 %v1615, %v1611
    %v1636 = vpack.c.b16 %v1620, %v1616
    %v1637 = vpack.c.b16 %v1621, %v1617
    %v1638 = vpack.c.b16 %v1622, %v1618
    %v1639 = vpack.c.b16 %v1623, %v1619
    %v1657 = vsel %vm374, %v1559, 0
    %1659 = vmatprep.subr.bf16.mxu0 0
    %1660 = vmatpush1.bf16.msra.mxu0 0
    %1661 = vmatprep.subr.bf16.mxu0 0
    %1662 = vmatpush1.bf16.msra.mxu0 0
    %1663 = vmatprep.subr.bf16.mxu0 0
    %1664 = vmatpush1.bf16.msra.mxu0 0
    %1665 = vmatprep.subr.bf16.mxu0 0
    %1666 = vmatpush1.bf16.msra.mxu0 0
    %1667 = vmatprep.subr.bf16.mxu0 %v1637
    %1668 = vmatpush1.bf16.msra.mxu0 %v1636
    %1669 = vmatprep.subr.bf16.mxu0 %v1633
    %1670 = vmatpush1.bf16.msra.mxu0 %v1632
    %1671 = vmatprep.subr.bf16.mxu0 %v1629
    %1672 = vmatpush1.bf16.msra.mxu0 %v1628
    %1673 = vmatprep.subr.bf16.mxu0 %v1625
    %1674 = vmatpush1.bf16.msra.mxu0 %v1624
    %1675 = vmatprep.subr.bf16.mxu0 0
    %1676 = vmatpush2.bf16.msra.mxu0 0
    %1677 = vmatprep.subr.bf16.mxu0 0
    %1678 = vmatpush2.bf16.msra.mxu0 0
    %1679 = vmatprep.subr.bf16.mxu0 0
    %1680 = vmatpush2.bf16.msra.mxu0 0
    %1681 = vmatprep.subr.bf16.mxu0 0
    %1682 = vmatpush2.bf16.msra.mxu0 0
    %1683 = vmatprep.subr.bf16.mxu0 0
    %1684 = vmatpush2.bf16.msra.mxu0 0
    %1685 = vmatprep.subr.bf16.mxu0 0
    %1686 = vmatpush2.bf16.msra.mxu0 0
    %1687 = vmatprep.subr.bf16.mxu0 0
    %1688 = vmatpush2.bf16.msra.mxu0 0
    %1689 = vmatprep.subr.bf16.mxu0 0
    %1690 = vmatpush2.bf16.msra.mxu0 0
    %1691 = vmatprep.mubr.bf16.mxu0 0
    %1692 = vmatmul.mubr.bf16.gmra.mxu0 %v1657
    %v1693 = vpop.f32.mrf.mxu0
    %v1694 = vadd.f32 0.0, %v1693
    %v1695 = vpop.f32.mrf.mxu0
    %v1696 = vadd.f32 0.0, %v1695
    %v1697 = vpop.f32.mrf.mxu0
    %v1698 = vpop.f32.mrf.mxu0
    %1699 = vdwg.mxu0
    %1700 = vmatprep.subr.bf16.mxu0 0
    %1701 = vmatpush1.bf16.msra.mxu0 0
    %1702 = vmatprep.subr.bf16.mxu0 0
    %1703 = vmatpush1.bf16.msra.mxu0 0
    %1704 = vmatprep.subr.bf16.mxu0 0
    %1705 = vmatpush1.bf16.msra.mxu0 0
    %1706 = vmatprep.subr.bf16.mxu0 0
    %1707 = vmatpush1.bf16.msra.mxu0 0
    %1708 = vmatprep.subr.bf16.mxu0 %v1639
    %1709 = vmatpush1.bf16.msra.mxu0 %v1638
    %1710 = vmatprep.subr.bf16.mxu0 %v1635
    %1711 = vmatpush1.bf16.msra.mxu0 %v1634
    %1712 = vmatprep.subr.bf16.mxu0 %v1631
    %1713 = vmatpush1.bf16.msra.mxu0 %v1630
    %1714 = vmatprep.subr.bf16.mxu0 %v1627
    %1715 = vmatpush1.bf16.msra.mxu0 %v1626
    %1716 = vmatprep.subr.bf16.mxu0 0
    %1717 = vmatpush2.bf16.msra.mxu0 0
    %1718 = vmatprep.subr.bf16.mxu0 0
    %1719 = vmatpush2.bf16.msra.mxu0 0
    %1720 = vmatprep.subr.bf16.mxu0 0
    %1721 = vmatpush2.bf16.msra.mxu0 0
    %1722 = vmatprep.subr.bf16.mxu0 0
    %1723 = vmatpush2.bf16.msra.mxu0 0
    %1724 = vmatprep.subr.bf16.mxu0 0
    %1725 = vmatpush2.bf16.msra.mxu0 0
    %1726 = vmatprep.subr.bf16.mxu0 0
    %1727 = vmatpush2.bf16.msra.mxu0 0
    %1728 = vmatprep.subr.bf16.mxu0 0
    %1729 = vmatpush2.bf16.msra.mxu0 0
    %1730 = vmatprep.subr.bf16.mxu0 0
    %1731 = vmatpush2.bf16.msra.mxu0 0
    %1732 = vmatprep.mubr.bf16.mxu0 0
    %1733 = vmatmul.mubr.bf16.gmra.mxu0 %v1657
    %v1734 = vpop.f32.mrf.mxu0
    %v1735 = vadd.f32 0.0, %v1734
    %v1736 = vpop.f32.mrf.mxu0
    %v1737 = vadd.f32 0.0, %v1736
    %v1738 = vpop.f32.mrf.mxu0
    %v1739 = vpop.f32.mrf.mxu0
    %1740 = vdwg.mxu0
    %v1741 = vadd.f32 %v1385, %v1694
    %v1742 = vadd.f32 %v1386, %v1696
    %v1743 = vadd.f32 %v1387, %v1735
    %v1744 = vadd.f32 %v1388, %v1737
    %s1745 = scalar_lea.vmem %s0, 20
    %v1746 = vld [vmem:[%s1745] sm:$0x1f]
    %v1748 = vcombine.high %v1746, %v1746
    %v1750 = vunpack.c.l.s4 1966171168
    %v1751 = vunpack.c.0.s8 %v1750
    %v1752 = vlaneseq
    %v1753 = vshrl.u32 %v1752, 7
    %v1754 = vsub.s32 %v1751, %v1753
    %v1755 = vrot.slane %v1746, %v1754
    %v1757 = vunpack.c.l.s4 1966171168
    %v1758 = vunpack.c.0.s8 %v1757
    %v1759 = vlaneseq
    %v1760 = vshrl.u32 %v1759, 7
    %v1761 = vsub.s32 %v1758, %v1760
    %v1762 = vrot.slane %v1748, %v1761
    %v1763 = vcombine.high %v1755, %v1755
    %v1765 = vunpack.c.l.s4 1966171168
    %v1766 = vunpack.c.0.s8 %v1765
    %v1767 = vlaneseq
    %v1768 = vshrl.u32 %v1767, 7
    %v1769 = vsub.s32 %v1766, %v1768
    %v1770 = vrot.slane %v1755, %v1769
    %v1772 = vunpack.c.l.s4 1966171168
    %v1773 = vunpack.c.0.s8 %v1772
    %v1774 = vlaneseq
    %v1775 = vshrl.u32 %v1774, 7
    %v1776 = vsub.s32 %v1773, %v1775
    %v1777 = vrot.slane %v1762, %v1776
    %v1779 = vunpack.c.l.s4 1966171168
    %v1780 = vunpack.c.0.s8 %v1779
    %v1781 = vlaneseq
    %v1782 = vshrl.u32 %v1781, 7
    %v1783 = vsub.s32 %v1780, %v1782
    %v1784 = vrot.slane %v1763, %v1783
    %v1785 = vcombine.high %v1770, %v1770
    %v1786 = vcombine.high %v1784, %v1784
    %v1792 = vsel %vm374, %v1777, 0
    %1794 = vmatprep.subr.bf16.mxu0 0
    %1795 = vmatpush1.bf16.msra.mxu0 %v309
    %1796 = vmatprep.subr.bf16.mxu0 0
    %1797 = vmatpush1.bf16.msra.mxu0 %v308
    %1798 = vmatprep.subr.bf16.mxu0 0
    %1799 = vmatpush1.bf16.msra.mxu0 %v307
    %1800 = vmatprep.subr.bf16.mxu0 0
    %1801 = vmatpush1.bf16.msra.mxu0 %v306
    %1802 = vmatprep.subr.bf16.mxu0 0
    %1803 = vmatpush1.bf16.msra.mxu0 %v305
    %1804 = vmatprep.subr.bf16.mxu0 0
    %1805 = vmatpush1.bf16.msra.mxu0 %v304
    %1806 = vmatprep.subr.bf16.mxu0 0
    %1807 = vmatpush1.bf16.msra.mxu0 %v303
    %1808 = vmatprep.subr.bf16.mxu0 0
    %1809 = vmatpush1.bf16.msra.mxu0 %v302
    %1810 = vmatprep.subr.bf16.mxu0 0
    %1811 = vmatpush2.bf16.msra.mxu0 %v317
    %1812 = vmatprep.subr.bf16.mxu0 0
    %1813 = vmatpush2.bf16.msra.mxu0 %v316
    %1814 = vmatprep.subr.bf16.mxu0 0
    %1815 = vmatpush2.bf16.msra.mxu0 %v315
    %1816 = vmatprep.subr.bf16.mxu0 0
    %1817 = vmatpush2.bf16.msra.mxu0 %v314
    %1818 = vmatprep.subr.bf16.mxu0 0
    %1819 = vmatpush2.bf16.msra.mxu0 %v313
    %1820 = vmatprep.subr.bf16.mxu0 0
    %1821 = vmatpush2.bf16.msra.mxu0 %v312
    %1822 = vmatprep.subr.bf16.mxu0 0
    %1823 = vmatpush2.bf16.msra.mxu0 %v311
    %1824 = vmatprep.subr.bf16.mxu0 0
    %1825 = vmatpush2.bf16.msra.mxu0 %v310
    %1826 = vmatprep.mubr.bf16.mxu0 %v1784
    %1827 = vmatmul.mubr.bf16.gmra.mxu0 %v1770
    %v1828 = vpop.f32.mrf.mxu0
    %v1829 = vadd.f32 %v112, %v1828
    %v1830 = vpop.f32.mrf.mxu0
    %v1831 = vpop.f32.mrf.mxu0
    %v1832 = vpop.f32.mrf.mxu0
    %1833 = vdwg.mxu0
    %1834 = vmatprep.subr.bf16.mxu0 0
    %1835 = vmatpush1.bf16.msra.mxu0 %v325
    %1836 = vmatprep.subr.bf16.mxu0 0
    %1837 = vmatpush1.bf16.msra.mxu0 %v324
    %1838 = vmatprep.subr.bf16.mxu0 0
    %1839 = vmatpush1.bf16.msra.mxu0 %v323
    %1840 = vmatprep.subr.bf16.mxu0 0
    %1841 = vmatpush1.bf16.msra.mxu0 %v322
    %1842 = vmatprep.subr.bf16.mxu0 0
    %1843 = vmatpush1.bf16.msra.mxu0 %v321
    %1844 = vmatprep.subr.bf16.mxu0 0
    %1845 = vmatpush1.bf16.msra.mxu0 %v320
    %1846 = vmatprep.subr.bf16.mxu0 0
    %1847 = vmatpush1.bf16.msra.mxu0 %v319
    %1848 = vmatprep.subr.bf16.mxu0 0
    %1849 = vmatpush1.bf16.msra.mxu0 %v318
    %1850 = vmatprep.subr.bf16.mxu0 0
    %1851 = vmatpush2.bf16.msra.mxu0 %v333
    %1852 = vmatprep.subr.bf16.mxu0 0
    %1853 = vmatpush2.bf16.msra.mxu0 %v332
    %1854 = vmatprep.subr.bf16.mxu0 0
    %1855 = vmatpush2.bf16.msra.mxu0 %v331
    %1856 = vmatprep.subr.bf16.mxu0 0
    %1857 = vmatpush2.bf16.msra.mxu0 %v330
    %1858 = vmatprep.subr.bf16.mxu0 0
    %1859 = vmatpush2.bf16.msra.mxu0 %v329
    %1860 = vmatprep.subr.bf16.mxu0 0
    %1861 = vmatpush2.bf16.msra.mxu0 %v328
    %1862 = vmatprep.subr.bf16.mxu0 0
    %1863 = vmatpush2.bf16.msra.mxu0 %v327
    %1864 = vmatprep.subr.bf16.mxu0 0
    %1865 = vmatpush2.bf16.msra.mxu0 %v326
    %1866 = vmatprep.mubr.bf16.mxu0 %v1786
    %1867 = vmatmul.mubr.bf16.gmra.mxu0 %v1785
    %v1868 = vpop.f32.mrf.mxu0
    %v1869 = vadd.f32 %v1829, %v1868
    %v1870 = vpop.f32.mrf.mxu0
    %v1871 = vpop.f32.mrf.mxu0
    %v1872 = vpop.f32.mrf.mxu0
    %1873 = vdwg.mxu0
    %1874 = vmatprep.subr.bf16.mxu0 0
    %1875 = vmatpush1.bf16.msra.mxu0 0
    %1876 = vmatprep.subr.bf16.mxu0 0
    %1877 = vmatpush1.bf16.msra.mxu0 0
    %1878 = vmatprep.subr.bf16.mxu0 0
    %1879 = vmatpush1.bf16.msra.mxu0 0
    %1880 = vmatprep.subr.bf16.mxu0 0
    %1881 = vmatpush1.bf16.msra.mxu0 0
    %1882 = vmatprep.subr.bf16.mxu0 0
    %1883 = vmatpush1.bf16.msra.mxu0 %v337
    %1884 = vmatprep.subr.bf16.mxu0 0
    %1885 = vmatpush1.bf16.msra.mxu0 %v336
    %1886 = vmatprep.subr.bf16.mxu0 0
    %1887 = vmatpush1.bf16.msra.mxu0 %v335
    %1888 = vmatprep.subr.bf16.mxu0 0
    %1889 = vmatpush1.bf16.msra.mxu0 %v334
    %1890 = vmatprep.subr.bf16.mxu0 0
    %1891 = vmatpush2.bf16.msra.mxu0 0
    %1892 = vmatprep.subr.bf16.mxu0 0
    %1893 = vmatpush2.bf16.msra.mxu0 0
    %1894 = vmatprep.subr.bf16.mxu0 0
    %1895 = vmatpush2.bf16.msra.mxu0 0
    %1896 = vmatprep.subr.bf16.mxu0 0
    %1897 = vmatpush2.bf16.msra.mxu0 0
    %1898 = vmatprep.subr.bf16.mxu0 0
    %1899 = vmatpush2.bf16.msra.mxu0 0
    %1900 = vmatprep.subr.bf16.mxu0 0
    %1901 = vmatpush2.bf16.msra.mxu0 0
    %1902 = vmatprep.subr.bf16.mxu0 0
    %1903 = vmatpush2.bf16.msra.mxu0 0
    %1904 = vmatprep.subr.bf16.mxu0 0
    %1905 = vmatpush2.bf16.msra.mxu0 0
    %1906 = vmatprep.mubr.bf16.mxu0 0
    %1907 = vmatmul.mubr.bf16.gmra.mxu0 %v1792
    %v1908 = vpop.f32.mrf.mxu0
    %v1909 = vadd.f32 %v1869, %v1908
    %v1910 = vpop.f32.mrf.mxu0
    %v1911 = vpop.f32.mrf.mxu0
    %v1912 = vpop.f32.mrf.mxu0
    %1913 = vdwg.mxu0
    %v1914 = vmax.f32 %v1909, 0.0
    %v1915 = vpack.c.bf16 %v1914, %v1914
    %v1916 = vld [vmem:[%s3 + $0x200] sm:$0xff]
    %v1917 = vld [vmem:[%s3 + $0x208] sm:$0xff]
    %v1918 = vld [vmem:[%s3 + $0x210] sm:$0xff]
    %v1919 = vld [vmem:[%s3 + $0x218] sm:$0xff]
    %v1920 = vld [vmem:[%s3 + $0x220] sm:$0xff]
    %v1921 = vld [vmem:[%s3 + $0x228] sm:$0xff]
    %v1922 = vld [vmem:[%s3 + $0x230] sm:$0xff]
    %v1923 = vld [vmem:[%s3 + $0x238] sm:$0xff]
    %v1924 = vld [vmem:[%s3 + $0x240] sm:$0xff]
    %v1925 = vld [vmem:[%s3 + $0x248] sm:$0xff]
    %v1926 = vld [vmem:[%s3 + $0x250] sm:$0xff]
    %v1927 = vld [vmem:[%s3 + $0x258] sm:$0xff]
    %v1928 = vld [vmem:[%s3 + $0x260] sm:$0xff]
    %v1929 = vld [vmem:[%s3 + $0x268] sm:$0xff]
    %v1930 = vld [vmem:[%s3 + $0x270] sm:$0xff]
    %v1931 = vld [vmem:[%s3 + $0x278] sm:$0xff]
    %v1948 = vunpack.c.l.b16 %v1916
    %v1949 = vunpack.c.h.b16 %v1916
    %v1950 = vunpack.c.l.b16 %v1917
    %v1951 = vunpack.c.h.b16 %v1917
    %v1952 = vunpack.c.l.b16 %v1918
    %v1953 = vunpack.c.h.b16 %v1918
    %v1954 = vunpack.c.l.b16 %v1919
    %v1955 = vunpack.c.h.b16 %v1919
    %v1956 = vunpack.c.l.b16 %v1920
    %v1957 = vunpack.c.h.b16 %v1920
    %v1958 = vunpack.c.l.b16 %v1921
    %v1959 = vunpack.c.h.b16 %v1921
    %v1960 = vunpack.c.l.b16 %v1922
    %v1961 = vunpack.c.h.b16 %v1922
    %v1962 = vunpack.c.l.b16 %v1923
    %v1963 = vunpack.c.h.b16 %v1923
    %v1964 = vunpack.c.l.b16 %v1924
    %v1965 = vunpack.c.h.b16 %v1924
    %v1966 = vunpack.c.l.b16 %v1925
    %v1967 = vunpack.c.h.b16 %v1925
    %v1968 = vunpack.c.l.b16 %v1926
    %v1969 = vunpack.c.h.b16 %v1926
    %v1970 = vunpack.c.l.b16 %v1927
    %v1971 = vunpack.c.h.b16 %v1927
    %v1972 = vunpack.c.l.b16 %v1928
    %v1973 = vunpack.c.h.b16 %v1928
    %v1974 = vunpack.c.l.b16 %v1929
    %v1975 = vunpack.c.h.b16 %v1929
    %v1976 = vunpack.c.l.b16 %v1930
    %v1977 = vunpack.c.h.b16 %v1930
    %v1978 = vunpack.c.l.b16 %v1931
    %v1979 = vunpack.c.h.b16 %v1931
    %v1980 = vpack.c.b16 %v1952, %v1948
    %v1981 = vpack.c.b16 %v1953, %v1949
    %v1982 = vpack.c.b16 %v1954, %v1950
    %v1983 = vpack.c.b16 %v1955, %v1951
    %v1984 = vpack.c.b16 %v1960, %v1956
    %v1985 = vpack.c.b16 %v1961, %v1957
    %v1986 = vpack.c.b16 %v1962, %v1958
    %v1987 = vpack.c.b16 %v1963, %v1959
    %v1988 = vpack.c.b16 %v1968, %v1964
    %v1989 = vpack.c.b16 %v1969, %v1965
    %v1990 = vpack.c.b16 %v1970, %v1966
    %v1991 = vpack.c.b16 %v1971, %v1967
    %v1992 = vpack.c.b16 %v1976, %v1972
    %v1993 = vpack.c.b16 %v1977, %v1973
    %v1994 = vpack.c.b16 %v1978, %v1974
    %v1995 = vpack.c.b16 %v1979, %v1975
    %v2013 = vsel %vm374, %v1915, 0
    %2015 = vmatprep.subr.bf16.mxu0 0
    %2016 = vmatpush1.bf16.msra.mxu0 0
    %2017 = vmatprep.subr.bf16.mxu0 0
    %2018 = vmatpush1.bf16.msra.mxu0 0
    %2019 = vmatprep.subr.bf16.mxu0 0
    %2020 = vmatpush1.bf16.msra.mxu0 0
    %2021 = vmatprep.subr.bf16.mxu0 0
    %2022 = vmatpush1.bf16.msra.mxu0 0
    %2023 = vmatprep.subr.bf16.mxu0 %v1993
    %2024 = vmatpush1.bf16.msra.mxu0 %v1992
    %2025 = vmatprep.subr.bf16.mxu0 %v1989
    %2026 = vmatpush1.bf16.msra.mxu0 %v1988
    %2027 = vmatprep.subr.bf16.mxu0 %v1985
    %2028 = vmatpush1.bf16.msra.mxu0 %v1984
    %2029 = vmatprep.subr.bf16.mxu0 %v1981
    %2030 = vmatpush1.bf16.msra.mxu0 %v1980
    %2031 = vmatprep.subr.bf16.mxu0 0
    %2032 = vmatpush2.bf16.msra.mxu0 0
    %2033 = vmatprep.subr.bf16.mxu0 0
    %2034 = vmatpush2.bf16.msra.mxu0 0
    %2035 = vmatprep.subr.bf16.mxu0 0
    %2036 = vmatpush2.bf16.msra.mxu0 0
    %2037 = vmatprep.subr.bf16.mxu0 0
    %2038 = vmatpush2.bf16.msra.mxu0 0
    %2039 = vmatprep.subr.bf16.mxu0 0
    %2040 = vmatpush2.bf16.msra.mxu0 0
    %2041 = vmatprep.subr.bf16.mxu0 0
    %2042 = vmatpush2.bf16.msra.mxu0 0
    %2043 = vmatprep.subr.bf16.mxu0 0
    %2044 = vmatpush2.bf16.msra.mxu0 0
    %2045 = vmatprep.subr.bf16.mxu0 0
    %2046 = vmatpush2.bf16.msra.mxu0 0
    %2047 = vmatprep.mubr.bf16.mxu0 0
    %2048 = vmatmul.mubr.bf16.gmra.mxu0 %v2013
    %v2049 = vpop.f32.mrf.mxu0
    %v2050 = vadd.f32 0.0, %v2049
    %v2051 = vpop.f32.mrf.mxu0
    %v2052 = vadd.f32 0.0, %v2051
    %v2053 = vpop.f32.mrf.mxu0
    %v2054 = vpop.f32.mrf.mxu0
    %2055 = vdwg.mxu0
    %2056 = vmatprep.subr.bf16.mxu0 0
    %2057 = vmatpush1.bf16.msra.mxu0 0
    %2058 = vmatprep.subr.bf16.mxu0 0
    %2059 = vmatpush1.bf16.msra.mxu0 0
    %2060 = vmatprep.subr.bf16.mxu0 0
    %2061 = vmatpush1.bf16.msra.mxu0 0
    %2062 = vmatprep.subr.bf16.mxu0 0
    %2063 = vmatpush1.bf16.msra.mxu0 0
    %2064 = vmatprep.subr.bf16.mxu0 %v1995
    %2065 = vmatpush1.bf16.msra.mxu0 %v1994
    %2066 = vmatprep.subr.bf16.mxu0 %v1991
    %2067 = vmatpush1.bf16.msra.mxu0 %v1990
    %2068 = vmatprep.subr.bf16.mxu0 %v1987
    %2069 = vmatpush1.bf16.msra.mxu0 %v1986
    %2070 = vmatprep.subr.bf16.mxu0 %v1983
    %2071 = vmatpush1.bf16.msra.mxu0 %v1982
    %2072 = vmatprep.subr.bf16.mxu0 0
    %2073 = vmatpush2.bf16.msra.mxu0 0
    %2074 = vmatprep.subr.bf16.mxu0 0
    %2075 = vmatpush2.bf16.msra.mxu0 0
    %2076 = vmatprep.subr.bf16.mxu0 0
    %2077 = vmatpush2.bf16.msra.mxu0 0
    %2078 = vmatprep.subr.bf16.mxu0 0
    %2079 = vmatpush2.bf16.msra.mxu0 0
    %2080 = vmatprep.subr.bf16.mxu0 0
    %2081 = vmatpush2.bf16.msra.mxu0 0
    %2082 = vmatprep.subr.bf16.mxu0 0
    %2083 = vmatpush2.bf16.msra.mxu0 0
    %2084 = vmatprep.subr.bf16.mxu0 0
    %2085 = vmatpush2.bf16.msra.mxu0 0
    %2086 = vmatprep.subr.bf16.mxu0 0
    %2087 = vmatpush2.bf16.msra.mxu0 0
    %2088 = vmatprep.mubr.bf16.mxu0 0
    %2089 = vmatmul.mubr.bf16.gmra.mxu0 %v2013
    %v2090 = vpop.f32.mrf.mxu0
    %v2091 = vadd.f32 0.0, %v2090
    %v2092 = vpop.f32.mrf.mxu0
    %v2093 = vadd.f32 0.0, %v2092
    %v2094 = vpop.f32.mrf.mxu0
    %v2095 = vpop.f32.mrf.mxu0
    %2096 = vdwg.mxu0
    %v2097 = vadd.f32 %v1741, %v2050
    %v2098 = vadd.f32 %v1742, %v2052
    %v2099 = vadd.f32 %v1743, %v2091
    %v2100 = vadd.f32 %v1744, %v2093
    %s2101 = scalar_lea.vmem %s0, 25
    %v2102 = vld [vmem:[%s2101] sm:$0x1f]
    %v2104 = vcombine.high %v2102, %v2102
    %v2106 = vunpack.c.l.s4 1966171168
    %v2107 = vunpack.c.0.s8 %v2106
    %v2108 = vlaneseq
    %v2109 = vshrl.u32 %v2108, 7
    %v2110 = vsub.s32 %v2107, %v2109
    %v2111 = vrot.slane %v2102, %v2110
    %v2113 = vunpack.c.l.s4 1966171168
    %v2114 = vunpack.c.0.s8 %v2113
    %v2115 = vlaneseq
    %v2116 = vshrl.u32 %v2115, 7
    %v2117 = vsub.s32 %v2114, %v2116
    %v2118 = vrot.slane %v2104, %v2117
    %v2119 = vcombine.high %v2111, %v2111
    %v2121 = vunpack.c.l.s4 1966171168
    %v2122 = vunpack.c.0.s8 %v2121
    %v2123 = vlaneseq
    %v2124 = vshrl.u32 %v2123, 7
    %v2125 = vsub.s32 %v2122, %v2124
    %v2126 = vrot.slane %v2111, %v2125
    %v2128 = vunpack.c.l.s4 1966171168
    %v2129 = vunpack.c.0.s8 %v2128
    %v2130 = vlaneseq
    %v2131 = vshrl.u32 %v2130, 7
    %v2132 = vsub.s32 %v2129, %v2131
    %v2133 = vrot.slane %v2118, %v2132
    %v2135 = vunpack.c.l.s4 1966171168
    %v2136 = vunpack.c.0.s8 %v2135
    %v2137 = vlaneseq
    %v2138 = vshrl.u32 %v2137, 7
    %v2139 = vsub.s32 %v2136, %v2138
    %v2140 = vrot.slane %v2119, %v2139
    %v2141 = vcombine.high %v2126, %v2126
    %v2142 = vcombine.high %v2140, %v2140
    %v2148 = vsel %vm374, %v2133, 0
    %2150 = vmatprep.subr.bf16.mxu0 0
    %2151 = vmatpush1.bf16.msra.mxu0 %v309
    %2152 = vmatprep.subr.bf16.mxu0 0
    %2153 = vmatpush1.bf16.msra.mxu0 %v308
    %2154 = vmatprep.subr.bf16.mxu0 0
    %2155 = vmatpush1.bf16.msra.mxu0 %v307
    %2156 = vmatprep.subr.bf16.mxu0 0
    %2157 = vmatpush1.bf16.msra.mxu0 %v306
    %2158 = vmatprep.subr.bf16.mxu0 0
    %2159 = vmatpush1.bf16.msra.mxu0 %v305
    %2160 = vmatprep.subr.bf16.mxu0 0
    %2161 = vmatpush1.bf16.msra.mxu0 %v304
    %2162 = vmatprep.subr.bf16.mxu0 0
    %2163 = vmatpush1.bf16.msra.mxu0 %v303
    %2164 = vmatprep.subr.bf16.mxu0 0
    %2165 = vmatpush1.bf16.msra.mxu0 %v302
    %2166 = vmatprep.subr.bf16.mxu0 0
    %2167 = vmatpush2.bf16.msra.mxu0 %v317
    %2168 = vmatprep.subr.bf16.mxu0 0
    %2169 = vmatpush2.bf16.msra.mxu0 %v316
    %2170 = vmatprep.subr.bf16.mxu0 0
    %2171 = vmatpush2.bf16.msra.mxu0 %v315
    %2172 = vmatprep.subr.bf16.mxu0 0
    %2173 = vmatpush2.bf16.msra.mxu0 %v314
    %2174 = vmatprep.subr.bf16.mxu0 0
    %2175 = vmatpush2.bf16.msra.mxu0 %v313
    %2176 = vmatprep.subr.bf16.mxu0 0
    %2177 = vmatpush2.bf16.msra.mxu0 %v312
    %2178 = vmatprep.subr.bf16.mxu0 0
    %2179 = vmatpush2.bf16.msra.mxu0 %v311
    %2180 = vmatprep.subr.bf16.mxu0 0
    %2181 = vmatpush2.bf16.msra.mxu0 %v310
    %2182 = vmatprep.mubr.bf16.mxu0 %v2140
    %2183 = vmatmul.mubr.bf16.gmra.mxu0 %v2126
    %v2184 = vpop.f32.mrf.mxu0
    %v2185 = vadd.f32 %v112, %v2184
    %v2186 = vpop.f32.mrf.mxu0
    %v2187 = vpop.f32.mrf.mxu0
    %v2188 = vpop.f32.mrf.mxu0
    %2189 = vdwg.mxu0
    %2190 = vmatprep.subr.bf16.mxu0 0
    %2191 = vmatpush1.bf16.msra.mxu0 %v325
    %2192 = vmatprep.subr.bf16.mxu0 0
    %2193 = vmatpush1.bf16.msra.mxu0 %v324
    %2194 = vmatprep.subr.bf16.mxu0 0
    %2195 = vmatpush1.bf16.msra.mxu0 %v323
    %2196 = vmatprep.subr.bf16.mxu0 0
    %2197 = vmatpush1.bf16.msra.mxu0 %v322
    %2198 = vmatprep.subr.bf16.mxu0 0
    %2199 = vmatpush1.bf16.msra.mxu0 %v321
    %2200 = vmatprep.subr.bf16.mxu0 0
    %2201 = vmatpush1.bf16.msra.mxu0 %v320
    %2202 = vmatprep.subr.bf16.mxu0 0
    %2203 = vmatpush1.bf16.msra.mxu0 %v319
    %2204 = vmatprep.subr.bf16.mxu0 0
    %2205 = vmatpush1.bf16.msra.mxu0 %v318
    %2206 = vmatprep.subr.bf16.mxu0 0
    %2207 = vmatpush2.bf16.msra.mxu0 %v333
    %2208 = vmatprep.subr.bf16.mxu0 0
    %2209 = vmatpush2.bf16.msra.mxu0 %v332
    %2210 = vmatprep.subr.bf16.mxu0 0
    %2211 = vmatpush2.bf16.msra.mxu0 %v331
    %2212 = vmatprep.subr.bf16.mxu0 0
    %2213 = vmatpush2.bf16.msra.mxu0 %v330
    %2214 = vmatprep.subr.bf16.mxu0 0
    %2215 = vmatpush2.bf16.msra.mxu0 %v329
    %2216 = vmatprep.subr.bf16.mxu0 0
    %2217 = vmatpush2.bf16.msra.mxu0 %v328
    %2218 = vmatprep.subr.bf16.mxu0 0
    %2219 = vmatpush2.bf16.msra.mxu0 %v327
    %2220 = vmatprep.subr.bf16.mxu0 0
    %2221 = vmatpush2.bf16.msra.mxu0 %v326
    %2222 = vmatprep.mubr.bf16.mxu0 %v2142
    %2223 = vmatmul.mubr.bf16.gmra.mxu0 %v2141
    %v2224 = vpop.f32.mrf.mxu0
    %v2225 = vadd.f32 %v2185, %v2224
    %v2226 = vpop.f32.mrf.mxu0
    %v2227 = vpop.f32.mrf.mxu0
    %v2228 = vpop.f32.mrf.mxu0
    %2229 = vdwg.mxu0
    %2230 = vmatprep.subr.bf16.mxu0 0
    %2231 = vmatpush1.bf16.msra.mxu0 0
    %2232 = vmatprep.subr.bf16.mxu0 0
    %2233 = vmatpush1.bf16.msra.mxu0 0
    %2234 = vmatprep.subr.bf16.mxu0 0
    %2235 = vmatpush1.bf16.msra.mxu0 0
    %2236 = vmatprep.subr.bf16.mxu0 0
    %2237 = vmatpush1.bf16.msra.mxu0 0
    %2238 = vmatprep.subr.bf16.mxu0 0
    %2239 = vmatpush1.bf16.msra.mxu0 %v337
    %2240 = vmatprep.subr.bf16.mxu0 0
    %2241 = vmatpush1.bf16.msra.mxu0 %v336
    %2242 = vmatprep.subr.bf16.mxu0 0
    %2243 = vmatpush1.bf16.msra.mxu0 %v335
    %2244 = vmatprep.subr.bf16.mxu0 0
    %2245 = vmatpush1.bf16.msra.mxu0 %v334
    %2246 = vmatprep.subr.bf16.mxu0 0
    %2247 = vmatpush2.bf16.msra.mxu0 0
    %2248 = vmatprep.subr.bf16.mxu0 0
    %2249 = vmatpush2.bf16.msra.mxu0 0
    %2250 = vmatprep.subr.bf16.mxu0 0
    %2251 = vmatpush2.bf16.msra.mxu0 0
    %2252 = vmatprep.subr.bf16.mxu0 0
    %2253 = vmatpush2.bf16.msra.mxu0 0
    %2254 = vmatprep.subr.bf16.mxu0 0
    %2255 = vmatpush2.bf16.msra.mxu0 0
    %2256 = vmatprep.subr.bf16.mxu0 0
    %2257 = vmatpush2.bf16.msra.mxu0 0
    %2258 = vmatprep.subr.bf16.mxu0 0
    %2259 = vmatpush2.bf16.msra.mxu0 0
    %2260 = vmatprep.subr.bf16.mxu0 0
    %2261 = vmatpush2.bf16.msra.mxu0 0
    %2262 = vmatprep.mubr.bf16.mxu0 0
    %2263 = vmatmul.mubr.bf16.gmra.mxu0 %v2148
    %v2264 = vpop.f32.mrf.mxu0
    %v2265 = vadd.f32 %v2225, %v2264
    %v2266 = vpop.f32.mrf.mxu0
    %v2267 = vpop.f32.mrf.mxu0
    %v2268 = vpop.f32.mrf.mxu0
    %2269 = vdwg.mxu0
    %v2270 = vmax.f32 %v2265, 0.0
    %v2271 = vpack.c.bf16 %v2270, %v2270
    %v2272 = vld [vmem:[%s3 + $0x280] sm:$0xff]
    %v2273 = vld [vmem:[%s3 + $0x288] sm:$0xff]
    %v2274 = vld [vmem:[%s3 + $0x290] sm:$0xff]
    %v2275 = vld [vmem:[%s3 + $0x298] sm:$0xff]
    %v2276 = vld [vmem:[%s3 + $0x2a0] sm:$0xff]
    %v2277 = vld [vmem:[%s3 + $0x2a8] sm:$0xff]
    %v2278 = vld [vmem:[%s3 + $0x2b0] sm:$0xff]
    %v2279 = vld [vmem:[%s3 + $0x2b8] sm:$0xff]
    %v2280 = vld [vmem:[%s3 + $0x2c0] sm:$0xff]
    %v2281 = vld [vmem:[%s3 + $0x2c8] sm:$0xff]
    %v2282 = vld [vmem:[%s3 + $0x2d0] sm:$0xff]
    %v2283 = vld [vmem:[%s3 + $0x2d8] sm:$0xff]
    %v2284 = vld [vmem:[%s3 + $0x2e0] sm:$0xff]
    %v2285 = vld [vmem:[%s3 + $0x2e8] sm:$0xff]
    %v2286 = vld [vmem:[%s3 + $0x2f0] sm:$0xff]
    %v2287 = vld [vmem:[%s3 + $0x2f8] sm:$0xff]
    %v2304 = vunpack.c.l.b16 %v2272
    %v2305 = vunpack.c.h.b16 %v2272
    %v2306 = vunpack.c.l.b16 %v2273
    %v2307 = vunpack.c.h.b16 %v2273
    %v2308 = vunpack.c.l.b16 %v2274
    %v2309 = vunpack.c.h.b16 %v2274
    %v2310 = vunpack.c.l.b16 %v2275
    %v2311 = vunpack.c.h.b16 %v2275
    %v2312 = vunpack.c.l.b16 %v2276
    %v2313 = vunpack.c.h.b16 %v2276
    %v2314 = vunpack.c.l.b16 %v2277
    %v2315 = vunpack.c.h.b16 %v2277
    %v2316 = vunpack.c.l.b16 %v2278
    %v2317 = vunpack.c.h.b16 %v2278
    %v2318 = vunpack.c.l.b16 %v2279
    %v2319 = vunpack.c.h.b16 %v2279
    %v2320 = vunpack.c.l.b16 %v2280
    %v2321 = vunpack.c.h.b16 %v2280
    %v2322 = vunpack.c.l.b16 %v2281
    %v2323 = vunpack.c.h.b16 %v2281
    %v2324 = vunpack.c.l.b16 %v2282
    %v2325 = vunpack.c.h.b16 %v2282
    %v2326 = vunpack.c.l.b16 %v2283
    %v2327 = vunpack.c.h.b16 %v2283
    %v2328 = vunpack.c.l.b16 %v2284
    %v2329 = vunpack.c.h.b16 %v2284
    %v2330 = vunpack.c.l.b16 %v2285
    %v2331 = vunpack.c.h.b16 %v2285
    %v2332 = vunpack.c.l.b16 %v2286
    %v2333 = vunpack.c.h.b16 %v2286
    %v2334 = vunpack.c.l.b16 %v2287
    %v2335 = vunpack.c.h.b16 %v2287
    %v2336 = vpack.c.b16 %v2308, %v2304
    %v2337 = vpack.c.b16 %v2309, %v2305
    %v2338 = vpack.c.b16 %v2310, %v2306
    %v2339 = vpack.c.b16 %v2311, %v2307
    %v2340 = vpack.c.b16 %v2316, %v2312
    %v2341 = vpack.c.b16 %v2317, %v2313
    %v2342 = vpack.c.b16 %v2318, %v2314
    %v2343 = vpack.c.b16 %v2319, %v2315
    %v2344 = vpack.c.b16 %v2324, %v2320
    %v2345 = vpack.c.b16 %v2325, %v2321
    %v2346 = vpack.c.b16 %v2326, %v2322
    %v2347 = vpack.c.b16 %v2327, %v2323
    %v2348 = vpack.c.b16 %v2332, %v2328
    %v2349 = vpack.c.b16 %v2333, %v2329
    %v2350 = vpack.c.b16 %v2334, %v2330
    %v2351 = vpack.c.b16 %v2335, %v2331
    %v2369 = vsel %vm374, %v2271, 0
    %2371 = vmatprep.subr.bf16.mxu0 0
    %2372 = vmatpush1.bf16.msra.mxu0 0
    %2373 = vmatprep.subr.bf16.mxu0 0
    %2374 = vmatpush1.bf16.msra.mxu0 0
    %2375 = vmatprep.subr.bf16.mxu0 0
    %2376 = vmatpush1.bf16.msra.mxu0 0
    %2377 = vmatprep.subr.bf16.mxu0 0
    %2378 = vmatpush1.bf16.msra.mxu0 0
    %2379 = vmatprep.subr.bf16.mxu0 %v2349
    %2380 = vmatpush1.bf16.msra.mxu0 %v2348
    %2381 = vmatprep.subr.bf16.mxu0 %v2345
    %2382 = vmatpush1.bf16.msra.mxu0 %v2344
    %2383 = vmatprep.subr.bf16.mxu0 %v2341
    %2384 = vmatpush1.bf16.msra.mxu0 %v2340
    %2385 = vmatprep.subr.bf16.mxu0 %v2337
    %2386 = vmatpush1.bf16.msra.mxu0 %v2336
    %2387 = vmatprep.subr.bf16.mxu0 0
    %2388 = vmatpush2.bf16.msra.mxu0 0
    %2389 = vmatprep.subr.bf16.mxu0 0
    %2390 = vmatpush2.bf16.msra.mxu0 0
    %2391 = vmatprep.subr.bf16.mxu0 0
    %2392 = vmatpush2.bf16.msra.mxu0 0
    %2393 = vmatprep.subr.bf16.mxu0 0
    %2394 = vmatpush2.bf16.msra.mxu0 0
    %2395 = vmatprep.subr.bf16.mxu0 0
    %2396 = vmatpush2.bf16.msra.mxu0 0
    %2397 = vmatprep.subr.bf16.mxu0 0
    %2398 = vmatpush2.bf16.msra.mxu0 0
    %2399 = vmatprep.subr.bf16.mxu0 0
    %2400 = vmatpush2.bf16.msra.mxu0 0
    %2401 = vmatprep.subr.bf16.mxu0 0
    %2402 = vmatpush2.bf16.msra.mxu0 0
    %2403 = vmatprep.mubr.bf16.mxu0 0
    %2404 = vmatmul.mubr.bf16.gmra.mxu0 %v2369
    %v2405 = vpop.f32.mrf.mxu0
    %v2406 = vadd.f32 0.0, %v2405
    %v2407 = vpop.f32.mrf.mxu0
    %v2408 = vadd.f32 0.0, %v2407
    %v2409 = vpop.f32.mrf.mxu0
    %v2410 = vpop.f32.mrf.mxu0
    %2411 = vdwg.mxu0
    %2412 = vmatprep.subr.bf16.mxu0 0
    %2413 = vmatpush1.bf16.msra.mxu0 0
    %2414 = vmatprep.subr.bf16.mxu0 0
    %2415 = vmatpush1.bf16.msra.mxu0 0
    %2416 = vmatprep.subr.bf16.mxu0 0
    %2417 = vmatpush1.bf16.msra.mxu0 0
    %2418 = vmatprep.subr.bf16.mxu0 0
    %2419 = vmatpush1.bf16.msra.mxu0 0
    %2420 = vmatprep.subr.bf16.mxu0 %v2351
    %2421 = vmatpush1.bf16.msra.mxu0 %v2350
    %2422 = vmatprep.subr.bf16.mxu0 %v2347
    %2423 = vmatpush1.bf16.msra.mxu0 %v2346
    %2424 = vmatprep.subr.bf16.mxu0 %v2343
    %2425 = vmatpush1.bf16.msra.mxu0 %v2342
    %2426 = vmatprep.subr.bf16.mxu0 %v2339
    %2427 = vmatpush1.bf16.msra.mxu0 %v2338
    %2428 = vmatprep.subr.bf16.mxu0 0
    %2429 = vmatpush2.bf16.msra.mxu0 0
    %2430 = vmatprep.subr.bf16.mxu0 0
    %2431 = vmatpush2.bf16.msra.mxu0 0
    %2432 = vmatprep.subr.bf16.mxu0 0
    %2433 = vmatpush2.bf16.msra.mxu0 0
    %2434 = vmatprep.subr.bf16.mxu0 0
    %2435 = vmatpush2.bf16.msra.mxu0 0
    %2436 = vmatprep.subr.bf16.mxu0 0
    %2437 = vmatpush2.bf16.msra.mxu0 0
    %2438 = vmatprep.subr.bf16.mxu0 0
    %2439 = vmatpush2.bf16.msra.mxu0 0
    %2440 = vmatprep.subr.bf16.mxu0 0
    %2441 = vmatpush2.bf16.msra.mxu0 0
    %2442 = vmatprep.subr.bf16.mxu0 0
    %2443 = vmatpush2.bf16.msra.mxu0 0
    %2444 = vmatprep.mubr.bf16.mxu0 0
    %2445 = vmatmul.mubr.bf16.gmra.mxu0 %v2369
    %v2446 = vpop.f32.mrf.mxu0
    %v2447 = vadd.f32 0.0, %v2446
    %v2448 = vpop.f32.mrf.mxu0
    %v2449 = vadd.f32 0.0, %v2448
    %v2450 = vpop.f32.mrf.mxu0
    %v2451 = vpop.f32.mrf.mxu0
    %2452 = vdwg.mxu0
    %v2453 = vadd.f32 %v2097, %v2406
    %v2454 = vadd.f32 %v2098, %v2408
    %v2455 = vadd.f32 %v2099, %v2447
    %v2456 = vadd.f32 %v2100, %v2449
    %s2457 = scalar_lea.vmem %s0, 30
    %v2458 = vld [vmem:[%s2457] sm:$0x1f]
    %v2460 = vcombine.high %v2458, %v2458
    %v2462 = vunpack.c.l.s4 1966171168
    %v2463 = vunpack.c.0.s8 %v2462
    %v2464 = vlaneseq
    %v2465 = vshrl.u32 %v2464, 7
    %v2466 = vsub.s32 %v2463, %v2465
    %v2467 = vrot.slane %v2458, %v2466
    %v2469 = vunpack.c.l.s4 1966171168
    %v2470 = vunpack.c.0.s8 %v2469
    %v2471 = vlaneseq
    %v2472 = vshrl.u32 %v2471, 7
    %v2473 = vsub.s32 %v2470, %v2472
    %v2474 = vrot.slane %v2460, %v2473
    %v2475 = vcombine.high %v2467, %v2467
    %v2477 = vunpack.c.l.s4 1966171168
    %v2478 = vunpack.c.0.s8 %v2477
    %v2479 = vlaneseq
    %v2480 = vshrl.u32 %v2479, 7
    %v2481 = vsub.s32 %v2478, %v2480
    %v2482 = vrot.slane %v2467, %v2481
    %v2484 = vunpack.c.l.s4 1966171168
    %v2485 = vunpack.c.0.s8 %v2484
    %v2486 = vlaneseq
    %v2487 = vshrl.u32 %v2486, 7
    %v2488 = vsub.s32 %v2485, %v2487
    %v2489 = vrot.slane %v2474, %v2488
    %v2491 = vunpack.c.l.s4 1966171168
    %v2492 = vunpack.c.0.s8 %v2491
    %v2493 = vlaneseq
    %v2494 = vshrl.u32 %v2493, 7
    %v2495 = vsub.s32 %v2492, %v2494
    %v2496 = vrot.slane %v2475, %v2495
    %v2497 = vcombine.high %v2482, %v2482
    %v2498 = vcombine.high %v2496, %v2496
    %v2504 = vsel %vm374, %v2489, 0
    %2506 = vmatprep.subr.bf16.mxu0 0
    %2507 = vmatpush1.bf16.msra.mxu0 %v309
    %2508 = vmatprep.subr.bf16.mxu0 0
    %2509 = vmatpush1.bf16.msra.mxu0 %v308
    %2510 = vmatprep.subr.bf16.mxu0 0
    %2511 = vmatpush1.bf16.msra.mxu0 %v307
    %2512 = vmatprep.subr.bf16.mxu0 0
    %2513 = vmatpush1.bf16.msra.mxu0 %v306
    %2514 = vmatprep.subr.bf16.mxu0 0
    %2515 = vmatpush1.bf16.msra.mxu0 %v305
    %2516 = vmatprep.subr.bf16.mxu0 0
    %2517 = vmatpush1.bf16.msra.mxu0 %v304
    %2518 = vmatprep.subr.bf16.mxu0 0
    %2519 = vmatpush1.bf16.msra.mxu0 %v303
    %2520 = vmatprep.subr.bf16.mxu0 0
    %2521 = vmatpush1.bf16.msra.mxu0 %v302
    %2522 = vmatprep.subr.bf16.mxu0 0
    %2523 = vmatpush2.bf16.msra.mxu0 %v317
    %2524 = vmatprep.subr.bf16.mxu0 0
    %2525 = vmatpush2.bf16.msra.mxu0 %v316
    %2526 = vmatprep.subr.bf16.mxu0 0
    %2527 = vmatpush2.bf16.msra.mxu0 %v315
    %2528 = vmatprep.subr.bf16.mxu0 0
    %2529 = vmatpush2.bf16.msra.mxu0 %v314
    %2530 = vmatprep.subr.bf16.mxu0 0
    %2531 = vmatpush2.bf16.msra.mxu0 %v313
    %2532 = vmatprep.subr.bf16.mxu0 0
    %2533 = vmatpush2.bf16.msra.mxu0 %v312
    %2534 = vmatprep.subr.bf16.mxu0 0
    %2535 = vmatpush2.bf16.msra.mxu0 %v311
    %2536 = vmatprep.subr.bf16.mxu0 0
    %2537 = vmatpush2.bf16.msra.mxu0 %v310
    %2538 = vmatprep.mubr.bf16.mxu0 %v2496
    %2539 = vmatmul.mubr.bf16.gmra.mxu0 %v2482
    %v2540 = vpop.f32.mrf.mxu0
    %v2541 = vadd.f32 %v112, %v2540
    %v2542 = vpop.f32.mrf.mxu0
    %v2543 = vpop.f32.mrf.mxu0
    %v2544 = vpop.f32.mrf.mxu0
    %2545 = vdwg.mxu0
    %2546 = vmatprep.subr.bf16.mxu0 0
    %2547 = vmatpush1.bf16.msra.mxu0 %v325
    %2548 = vmatprep.subr.bf16.mxu0 0
    %2549 = vmatpush1.bf16.msra.mxu0 %v324
    %2550 = vmatprep.subr.bf16.mxu0 0
    %2551 = vmatpush1.bf16.msra.mxu0 %v323
    %2552 = vmatprep.subr.bf16.mxu0 0
    %2553 = vmatpush1.bf16.msra.mxu0 %v322
    %2554 = vmatprep.subr.bf16.mxu0 0
    %2555 = vmatpush1.bf16.msra.mxu0 %v321
    %2556 = vmatprep.subr.bf16.mxu0 0
    %2557 = vmatpush1.bf16.msra.mxu0 %v320
    %2558 = vmatprep.subr.bf16.mxu0 0
    %2559 = vmatpush1.bf16.msra.mxu0 %v319
    %2560 = vmatprep.subr.bf16.mxu0 0
    %2561 = vmatpush1.bf16.msra.mxu0 %v318
    %2562 = vmatprep.subr.bf16.mxu0 0
    %2563 = vmatpush2.bf16.msra.mxu0 %v333
    %2564 = vmatprep.subr.bf16.mxu0 0
    %2565 = vmatpush2.bf16.msra.mxu0 %v332
    %2566 = vmatprep.subr.bf16.mxu0 0
    %2567 = vmatpush2.bf16.msra.mxu0 %v331
    %2568 = vmatprep.subr.bf16.mxu0 0
    %2569 = vmatpush2.bf16.msra.mxu0 %v330
    %2570 = vmatprep.subr.bf16.mxu0 0
    %2571 = vmatpush2.bf16.msra.mxu0 %v329
    %2572 = vmatprep.subr.bf16.mxu0 0
    %2573 = vmatpush2.bf16.msra.mxu0 %v328
    %2574 = vmatprep.subr.bf16.mxu0 0
    %2575 = vmatpush2.bf16.msra.mxu0 %v327
    %2576 = vmatprep.subr.bf16.mxu0 0
    %2577 = vmatpush2.bf16.msra.mxu0 %v326
    %2578 = vmatprep.mubr.bf16.mxu0 %v2498
    %2579 = vmatmul.mubr.bf16.gmra.mxu0 %v2497
    %v2580 = vpop.f32.mrf.mxu0
    %v2581 = vadd.f32 %v2541, %v2580
    %v2582 = vpop.f32.mrf.mxu0
    %v2583 = vpop.f32.mrf.mxu0
    %v2584 = vpop.f32.mrf.mxu0
    %2585 = vdwg.mxu0
    %2586 = vmatprep.subr.bf16.mxu0 0
    %2587 = vmatpush1.bf16.msra.mxu0 0
    %2588 = vmatprep.subr.bf16.mxu0 0
    %2589 = vmatpush1.bf16.msra.mxu0 0
    %2590 = vmatprep.subr.bf16.mxu0 0
    %2591 = vmatpush1.bf16.msra.mxu0 0
    %2592 = vmatprep.subr.bf16.mxu0 0
    %2593 = vmatpush1.bf16.msra.mxu0 0
    %2594 = vmatprep.subr.bf16.mxu0 0
    %2595 = vmatpush1.bf16.msra.mxu0 %v337
    %2596 = vmatprep.subr.bf16.mxu0 0
    %2597 = vmatpush1.bf16.msra.mxu0 %v336
    %2598 = vmatprep.subr.bf16.mxu0 0
    %2599 = vmatpush1.bf16.msra.mxu0 %v335
    %2600 = vmatprep.subr.bf16.mxu0 0
    %2601 = vmatpush1.bf16.msra.mxu0 %v334
    %2602 = vmatprep.subr.bf16.mxu0 0
    %2603 = vmatpush2.bf16.msra.mxu0 0
    %2604 = vmatprep.subr.bf16.mxu0 0
    %2605 = vmatpush2.bf16.msra.mxu0 0
    %2606 = vmatprep.subr.bf16.mxu0 0
    %2607 = vmatpush2.bf16.msra.mxu0 0
    %2608 = vmatprep.subr.bf16.mxu0 0
    %2609 = vmatpush2.bf16.msra.mxu0 0
    %2610 = vmatprep.subr.bf16.mxu0 0
    %2611 = vmatpush2.bf16.msra.mxu0 0
    %2612 = vmatprep.subr.bf16.mxu0 0
    %2613 = vmatpush2.bf16.msra.mxu0 0
    %2614 = vmatprep.subr.bf16.mxu0 0
    %2615 = vmatpush2.bf16.msra.mxu0 0
    %2616 = vmatprep.subr.bf16.mxu0 0
    %2617 = vmatpush2.bf16.msra.mxu0 0
    %2618 = vmatprep.mubr.bf16.mxu0 0
    %2619 = vmatmul.mubr.bf16.gmra.mxu0 %v2504
    %v2620 = vpop.f32.mrf.mxu0
    %v2621 = vadd.f32 %v2581, %v2620
    %v2622 = vpop.f32.mrf.mxu0
    %v2623 = vpop.f32.mrf.mxu0
    %v2624 = vpop.f32.mrf.mxu0
    %2625 = vdwg.mxu0
    %v2626 = vmax.f32 %v2621, 0.0
    %v2627 = vpack.c.bf16 %v2626, %v2626
    %v2628 = vld [vmem:[%s3 + $0x300] sm:$0xff]
    %v2629 = vld [vmem:[%s3 + $0x308] sm:$0xff]
    %v2630 = vld [vmem:[%s3 + $0x310] sm:$0xff]
    %v2631 = vld [vmem:[%s3 + $0x318] sm:$0xff]
    %v2632 = vld [vmem:[%s3 + $0x320] sm:$0xff]
    %v2633 = vld [vmem:[%s3 + $0x328] sm:$0xff]
    %v2634 = vld [vmem:[%s3 + $0x330] sm:$0xff]
    %v2635 = vld [vmem:[%s3 + $0x338] sm:$0xff]
    %v2636 = vld [vmem:[%s3 + $0x340] sm:$0xff]
    %v2637 = vld [vmem:[%s3 + $0x348] sm:$0xff]
    %v2638 = vld [vmem:[%s3 + $0x350] sm:$0xff]
    %v2639 = vld [vmem:[%s3 + $0x358] sm:$0xff]
    %v2640 = vld [vmem:[%s3 + $0x360] sm:$0xff]
    %v2641 = vld [vmem:[%s3 + $0x368] sm:$0xff]
    %v2642 = vld [vmem:[%s3 + $0x370] sm:$0xff]
    %v2643 = vld [vmem:[%s3 + $0x378] sm:$0xff]
    %v2660 = vunpack.c.l.b16 %v2628
    %v2661 = vunpack.c.h.b16 %v2628
    %v2662 = vunpack.c.l.b16 %v2629
    %v2663 = vunpack.c.h.b16 %v2629
    %v2664 = vunpack.c.l.b16 %v2630
    %v2665 = vunpack.c.h.b16 %v2630
    %v2666 = vunpack.c.l.b16 %v2631
    %v2667 = vunpack.c.h.b16 %v2631
    %v2668 = vunpack.c.l.b16 %v2632
    %v2669 = vunpack.c.h.b16 %v2632
    %v2670 = vunpack.c.l.b16 %v2633
    %v2671 = vunpack.c.h.b16 %v2633
    %v2672 = vunpack.c.l.b16 %v2634
    %v2673 = vunpack.c.h.b16 %v2634
    %v2674 = vunpack.c.l.b16 %v2635
    %v2675 = vunpack.c.h.b16 %v2635
    %v2676 = vunpack.c.l.b16 %v2636
    %v2677 = vunpack.c.h.b16 %v2636
    %v2678 = vunpack.c.l.b16 %v2637
    %v2679 = vunpack.c.h.b16 %v2637
    %v2680 = vunpack.c.l.b16 %v2638
    %v2681 = vunpack.c.h.b16 %v2638
    %v2682 = vunpack.c.l.b16 %v2639
    %v2683 = vunpack.c.h.b16 %v2639
    %v2684 = vunpack.c.l.b16 %v2640
    %v2685 = vunpack.c.h.b16 %v2640
    %v2686 = vunpack.c.l.b16 %v2641
    %v2687 = vunpack.c.h.b16 %v2641
    %v2688 = vunpack.c.l.b16 %v2642
    %v2689 = vunpack.c.h.b16 %v2642
    %v2690 = vunpack.c.l.b16 %v2643
    %v2691 = vunpack.c.h.b16 %v2643
    %v2692 = vpack.c.b16 %v2664, %v2660
    %v2693 = vpack.c.b16 %v2665, %v2661
    %v2694 = vpack.c.b16 %v2666, %v2662
    %v2695 = vpack.c.b16 %v2667, %v2663
    %v2696 = vpack.c.b16 %v2672, %v2668
    %v2697 = vpack.c.b16 %v2673, %v2669
    %v2698 = vpack.c.b16 %v2674, %v2670
    %v2699 = vpack.c.b16 %v2675, %v2671
    %v2700 = vpack.c.b16 %v2680, %v2676
    %v2701 = vpack.c.b16 %v2681, %v2677
    %v2702 = vpack.c.b16 %v2682, %v2678
    %v2703 = vpack.c.b16 %v2683, %v2679
    %v2704 = vpack.c.b16 %v2688, %v2684
    %v2705 = vpack.c.b16 %v2689, %v2685
    %v2706 = vpack.c.b16 %v2690, %v2686
    %v2707 = vpack.c.b16 %v2691, %v2687
    %v2725 = vsel %vm374, %v2627, 0
    %2727 = vmatprep.subr.bf16.mxu0 0
    %2728 = vmatpush1.bf16.msra.mxu0 0
    %2729 = vmatprep.subr.bf16.mxu0 0
    %2730 = vmatpush1.bf16.msra.mxu0 0
    %2731 = vmatprep.subr.bf16.mxu0 0
    %2732 = vmatpush1.bf16.msra.mxu0 0
    %2733 = vmatprep.subr.bf16.mxu0 0
    %2734 = vmatpush1.bf16.msra.mxu0 0
    %2735 = vmatprep.subr.bf16.mxu0 %v2705
    %2736 = vmatpush1.bf16.msra.mxu0 %v2704
    %2737 = vmatprep.subr.bf16.mxu0 %v2701
    %2738 = vmatpush1.bf16.msra.mxu0 %v2700
    %2739 = vmatprep.subr.bf16.mxu0 %v2697
    %2740 = vmatpush1.bf16.msra.mxu0 %v2696
    %2741 = vmatprep.subr.bf16.mxu0 %v2693
    %2742 = vmatpush1.bf16.msra.mxu0 %v2692
    %2743 = vmatprep.subr.bf16.mxu0 0
    %2744 = vmatpush2.bf16.msra.mxu0 0
    %2745 = vmatprep.subr.bf16.mxu0 0
    %2746 = vmatpush2.bf16.msra.mxu0 0
    %2747 = vmatprep.subr.bf16.mxu0 0
    %2748 = vmatpush2.bf16.msra.mxu0 0
    %2749 = vmatprep.subr.bf16.mxu0 0
    %2750 = vmatpush2.bf16.msra.mxu0 0
    %2751 = vmatprep.subr.bf16.mxu0 0
    %2752 = vmatpush2.bf16.msra.mxu0 0
    %2753 = vmatprep.subr.bf16.mxu0 0
    %2754 = vmatpush2.bf16.msra.mxu0 0
    %2755 = vmatprep.subr.bf16.mxu0 0
    %2756 = vmatpush2.bf16.msra.mxu0 0
    %2757 = vmatprep.subr.bf16.mxu0 0
    %2758 = vmatpush2.bf16.msra.mxu0 0
    %2759 = vmatprep.mubr.bf16.mxu0 0
    %2760 = vmatmul.mubr.bf16.gmra.mxu0 %v2725
    %v2761 = vpop.f32.mrf.mxu0
    %v2762 = vadd.f32 0.0, %v2761
    %v2763 = vpop.f32.mrf.mxu0
    %v2764 = vadd.f32 0.0, %v2763
    %v2765 = vpop.f32.mrf.mxu0
    %v2766 = vpop.f32.mrf.mxu0
    %2767 = vdwg.mxu0
    %2768 = vmatprep.subr.bf16.mxu0 0
    %2769 = vmatpush1.bf16.msra.mxu0 0
    %2770 = vmatprep.subr.bf16.mxu0 0
    %2771 = vmatpush1.bf16.msra.mxu0 0
    %2772 = vmatprep.subr.bf16.mxu0 0
    %2773 = vmatpush1.bf16.msra.mxu0 0
    %2774 = vmatprep.subr.bf16.mxu0 0
    %2775 = vmatpush1.bf16.msra.mxu0 0
    %2776 = vmatprep.subr.bf16.mxu0 %v2707
    %2777 = vmatpush1.bf16.msra.mxu0 %v2706
    %2778 = vmatprep.subr.bf16.mxu0 %v2703
    %2779 = vmatpush1.bf16.msra.mxu0 %v2702
    %2780 = vmatprep.subr.bf16.mxu0 %v2699
    %2781 = vmatpush1.bf16.msra.mxu0 %v2698
    %2782 = vmatprep.subr.bf16.mxu0 %v2695
    %2783 = vmatpush1.bf16.msra.mxu0 %v2694
    %2784 = vmatprep.subr.bf16.mxu0 0
    %2785 = vmatpush2.bf16.msra.mxu0 0
    %2786 = vmatprep.subr.bf16.mxu0 0
    %2787 = vmatpush2.bf16.msra.mxu0 0
    %2788 = vmatprep.subr.bf16.mxu0 0
    %2789 = vmatpush2.bf16.msra.mxu0 0
    %2790 = vmatprep.subr.bf16.mxu0 0
    %2791 = vmatpush2.bf16.msra.mxu0 0
    %2792 = vmatprep.subr.bf16.mxu0 0
    %2793 = vmatpush2.bf16.msra.mxu0 0
    %2794 = vmatprep.subr.bf16.mxu0 0
    %2795 = vmatpush2.bf16.msra.mxu0 0
    %2796 = vmatprep.subr.bf16.mxu0 0
    %2797 = vmatpush2.bf16.msra.mxu0 0
    %2798 = vmatprep.subr.bf16.mxu0 0
    %2799 = vmatpush2.bf16.msra.mxu0 0
    %2800 = vmatprep.mubr.bf16.mxu0 0
    %2801 = vmatmul.mubr.bf16.gmra.mxu0 %v2725
    %v2802 = vpop.f32.mrf.mxu0
    %v2803 = vadd.f32 0.0, %v2802
    %v2804 = vpop.f32.mrf.mxu0
    %v2805 = vadd.f32 0.0, %v2804
    %v2806 = vpop.f32.mrf.mxu0
    %v2807 = vpop.f32.mrf.mxu0
    %2808 = vdwg.mxu0
    %v2809 = vadd.f32 %v2453, %v2762
    %v2810 = vadd.f32 %v2454, %v2764
    %v2811 = vadd.f32 %v2455, %v2803
    %v2812 = vadd.f32 %v2456, %v2805
    %s2813 = scalar_lea.vmem %s0, 35
    %v2814 = vld [vmem:[%s2813] sm:$0x1f]
    %v2816 = vcombine.high %v2814, %v2814
    %v2818 = vunpack.c.l.s4 1966171168
    %v2819 = vunpack.c.0.s8 %v2818
    %v2820 = vlaneseq
    %v2821 = vshrl.u32 %v2820, 7
    %v2822 = vsub.s32 %v2819, %v2821
    %v2823 = vrot.slane %v2814, %v2822
    %v2825 = vunpack.c.l.s4 1966171168
    %v2826 = vunpack.c.0.s8 %v2825
    %v2827 = vlaneseq
    %v2828 = vshrl.u32 %v2827, 7
    %v2829 = vsub.s32 %v2826, %v2828
    %v2830 = vrot.slane %v2816, %v2829
    %v2831 = vcombine.high %v2823, %v2823
    %v2833 = vunpack.c.l.s4 1966171168
    %v2834 = vunpack.c.0.s8 %v2833
    %v2835 = vlaneseq
    %v2836 = vshrl.u32 %v2835, 7
    %v2837 = vsub.s32 %v2834, %v2836
    %v2838 = vrot.slane %v2823, %v2837
    %v2840 = vunpack.c.l.s4 1966171168
    %v2841 = vunpack.c.0.s8 %v2840
    %v2842 = vlaneseq
    %v2843 = vshrl.u32 %v2842, 7
    %v2844 = vsub.s32 %v2841, %v2843
    %v2845 = vrot.slane %v2830, %v2844
    %v2847 = vunpack.c.l.s4 1966171168
    %v2848 = vunpack.c.0.s8 %v2847
    %v2849 = vlaneseq
    %v2850 = vshrl.u32 %v2849, 7
    %v2851 = vsub.s32 %v2848, %v2850
    %v2852 = vrot.slane %v2831, %v2851
    %v2853 = vcombine.high %v2838, %v2838
    %v2854 = vcombine.high %v2852, %v2852
    %v2860 = vsel %vm374, %v2845, 0
    %2862 = vmatprep.subr.bf16.mxu0 0
    %2863 = vmatpush1.bf16.msra.mxu0 %v309
    %2864 = vmatprep.subr.bf16.mxu0 0
    %2865 = vmatpush1.bf16.msra.mxu0 %v308
    %2866 = vmatprep.subr.bf16.mxu0 0
    %2867 = vmatpush1.bf16.msra.mxu0 %v307
    %2868 = vmatprep.subr.bf16.mxu0 0
    %2869 = vmatpush1.bf16.msra.mxu0 %v306
    %2870 = vmatprep.subr.bf16.mxu0 0
    %2871 = vmatpush1.bf16.msra.mxu0 %v305
    %2872 = vmatprep.subr.bf16.mxu0 0
    %2873 = vmatpush1.bf16.msra.mxu0 %v304
    %2874 = vmatprep.subr.bf16.mxu0 0
    %2875 = vmatpush1.bf16.msra.mxu0 %v303
    %2876 = vmatprep.subr.bf16.mxu0 0
    %2877 = vmatpush1.bf16.msra.mxu0 %v302
    %2878 = vmatprep.subr.bf16.mxu0 0
    %2879 = vmatpush2.bf16.msra.mxu0 %v317
    %2880 = vmatprep.subr.bf16.mxu0 0
    %2881 = vmatpush2.bf16.msra.mxu0 %v316
    %2882 = vmatprep.subr.bf16.mxu0 0
    %2883 = vmatpush2.bf16.msra.mxu0 %v315
    %2884 = vmatprep.subr.bf16.mxu0 0
    %2885 = vmatpush2.bf16.msra.mxu0 %v314
    %2886 = vmatprep.subr.bf16.mxu0 0
    %2887 = vmatpush2.bf16.msra.mxu0 %v313
    %2888 = vmatprep.subr.bf16.mxu0 0
    %2889 = vmatpush2.bf16.msra.mxu0 %v312
    %2890 = vmatprep.subr.bf16.mxu0 0
    %2891 = vmatpush2.bf16.msra.mxu0 %v311
    %2892 = vmatprep.subr.bf16.mxu0 0
    %2893 = vmatpush2.bf16.msra.mxu0 %v310
    %2894 = vmatprep.mubr.bf16.mxu0 %v2852
    %2895 = vmatmul.mubr.bf16.gmra.mxu0 %v2838
    %v2896 = vpop.f32.mrf.mxu0
    %v2897 = vadd.f32 %v112, %v2896
    %v2898 = vpop.f32.mrf.mxu0
    %v2899 = vpop.f32.mrf.mxu0
    %v2900 = vpop.f32.mrf.mxu0
    %2901 = vdwg.mxu0
    %2902 = vmatprep.subr.bf16.mxu0 0
    %2903 = vmatpush1.bf16.msra.mxu0 %v325
    %2904 = vmatprep.subr.bf16.mxu0 0
    %2905 = vmatpush1.bf16.msra.mxu0 %v324
    %2906 = vmatprep.subr.bf16.mxu0 0
    %2907 = vmatpush1.bf16.msra.mxu0 %v323
    %2908 = vmatprep.subr.bf16.mxu0 0
    %2909 = vmatpush1.bf16.msra.mxu0 %v322
    %2910 = vmatprep.subr.bf16.mxu0 0
    %2911 = vmatpush1.bf16.msra.mxu0 %v321
    %2912 = vmatprep.subr.bf16.mxu0 0
    %2913 = vmatpush1.bf16.msra.mxu0 %v320
    %2914 = vmatprep.subr.bf16.mxu0 0
    %2915 = vmatpush1.bf16.msra.mxu0 %v319
    %2916 = vmatprep.subr.bf16.mxu0 0
    %2917 = vmatpush1.bf16.msra.mxu0 %v318
    %2918 = vmatprep.subr.bf16.mxu0 0
    %2919 = vmatpush2.bf16.msra.mxu0 %v333
    %2920 = vmatprep.subr.bf16.mxu0 0
    %2921 = vmatpush2.bf16.msra.mxu0 %v332
    %2922 = vmatprep.subr.bf16.mxu0 0
    %2923 = vmatpush2.bf16.msra.mxu0 %v331
    %2924 = vmatprep.subr.bf16.mxu0 0
    %2925 = vmatpush2.bf16.msra.mxu0 %v330
    %2926 = vmatprep.subr.bf16.mxu0 0
    %2927 = vmatpush2.bf16.msra.mxu0 %v329
    %2928 = vmatprep.subr.bf16.mxu0 0
    %2929 = vmatpush2.bf16.msra.mxu0 %v328
    %2930 = vmatprep.subr.bf16.mxu0 0
    %2931 = vmatpush2.bf16.msra.mxu0 %v327
    %2932 = vmatprep.subr.bf16.mxu0 0
    %2933 = vmatpush2.bf16.msra.mxu0 %v326
    %2934 = vmatprep.mubr.bf16.mxu0 %v2854
    %2935 = vmatmul.mubr.bf16.gmra.mxu0 %v2853
    %v2936 = vpop.f32.mrf.mxu0
    %v2937 = vadd.f32 %v2897, %v2936
    %v2938 = vpop.f32.mrf.mxu0
    %v2939 = vpop.f32.mrf.mxu0
    %v2940 = vpop.f32.mrf.mxu0
    %2941 = vdwg.mxu0
    %2942 = vmatprep.subr.bf16.mxu0 0
    %2943 = vmatpush1.bf16.msra.mxu0 0
    %2944 = vmatprep.subr.bf16.mxu0 0
    %2945 = vmatpush1.bf16.msra.mxu0 0
    %2946 = vmatprep.subr.bf16.mxu0 0
    %2947 = vmatpush1.bf16.msra.mxu0 0
    %2948 = vmatprep.subr.bf16.mxu0 0
    %2949 = vmatpush1.bf16.msra.mxu0 0
    %2950 = vmatprep.subr.bf16.mxu0 0
    %2951 = vmatpush1.bf16.msra.mxu0 %v337
    %2952 = vmatprep.subr.bf16.mxu0 0
    %2953 = vmatpush1.bf16.msra.mxu0 %v336
    %2954 = vmatprep.subr.bf16.mxu0 0
    %2955 = vmatpush1.bf16.msra.mxu0 %v335
    %2956 = vmatprep.subr.bf16.mxu0 0
    %2957 = vmatpush1.bf16.msra.mxu0 %v334
    %2958 = vmatprep.subr.bf16.mxu0 0
    %2959 = vmatpush2.bf16.msra.mxu0 0
    %2960 = vmatprep.subr.bf16.mxu0 0
    %2961 = vmatpush2.bf16.msra.mxu0 0
    %2962 = vmatprep.subr.bf16.mxu0 0
    %2963 = vmatpush2.bf16.msra.mxu0 0
    %2964 = vmatprep.subr.bf16.mxu0 0
    %2965 = vmatpush2.bf16.msra.mxu0 0
    %2966 = vmatprep.subr.bf16.mxu0 0
    %2967 = vmatpush2.bf16.msra.mxu0 0
    %2968 = vmatprep.subr.bf16.mxu0 0
    %2969 = vmatpush2.bf16.msra.mxu0 0
    %2970 = vmatprep.subr.bf16.mxu0 0
    %2971 = vmatpush2.bf16.msra.mxu0 0
    %2972 = vmatprep.subr.bf16.mxu0 0
    %2973 = vmatpush2.bf16.msra.mxu0 0
    %2974 = vmatprep.mubr.bf16.mxu0 0
    %2975 = vmatmul.mubr.bf16.gmra.mxu0 %v2860
    %v2976 = vpop.f32.mrf.mxu0
    %v2977 = vadd.f32 %v2937, %v2976
    %v2978 = vpop.f32.mrf.mxu0
    %v2979 = vpop.f32.mrf.mxu0
    %v2980 = vpop.f32.mrf.mxu0
    %2981 = vdwg.mxu0
    %v2982 = vmax.f32 %v2977, 0.0
    %v2983 = vpack.c.bf16 %v2982, %v2982
    %v2984 = vld [vmem:[%s3 + $0x380] sm:$0xff]
    %v2985 = vld [vmem:[%s3 + $0x388] sm:$0xff]
    %v2986 = vld [vmem:[%s3 + $0x390] sm:$0xff]
    %v2987 = vld [vmem:[%s3 + $0x398] sm:$0xff]
    %v2988 = vld [vmem:[%s3 + $0x3a0] sm:$0xff]
    %v2989 = vld [vmem:[%s3 + $0x3a8] sm:$0xff]
    %v2990 = vld [vmem:[%s3 + $0x3b0] sm:$0xff]
    %v2991 = vld [vmem:[%s3 + $0x3b8] sm:$0xff]
    %v2992 = vld [vmem:[%s3 + $0x3c0] sm:$0xff]
    %v2993 = vld [vmem:[%s3 + $0x3c8] sm:$0xff]
    %v2994 = vld [vmem:[%s3 + $0x3d0] sm:$0xff]
    %v2995 = vld [vmem:[%s3 + $0x3d8] sm:$0xff]
    %v2996 = vld [vmem:[%s3 + $0x3e0] sm:$0xff]
    %v2997 = vld [vmem:[%s3 + $0x3e8] sm:$0xff]
    %v2998 = vld [vmem:[%s3 + $0x3f0] sm:$0xff]
    %v2999 = vld [vmem:[%s3 + $0x3f8] sm:$0xff]
    %v3016 = vunpack.c.l.b16 %v2984
    %v3017 = vunpack.c.h.b16 %v2984
    %v3018 = vunpack.c.l.b16 %v2985
    %v3019 = vunpack.c.h.b16 %v2985
    %v3020 = vunpack.c.l.b16 %v2986
    %v3021 = vunpack.c.h.b16 %v2986
    %v3022 = vunpack.c.l.b16 %v2987
    %v3023 = vunpack.c.h.b16 %v2987
    %v3024 = vunpack.c.l.b16 %v2988
    %v3025 = vunpack.c.h.b16 %v2988
    %v3026 = vunpack.c.l.b16 %v2989
    %v3027 = vunpack.c.h.b16 %v2989
    %v3028 = vunpack.c.l.b16 %v2990
    %v3029 = vunpack.c.h.b16 %v2990
    %v3030 = vunpack.c.l.b16 %v2991
    %v3031 = vunpack.c.h.b16 %v2991
    %v3032 = vunpack.c.l.b16 %v2992
    %v3033 = vunpack.c.h.b16 %v2992
    %v3034 = vunpack.c.l.b16 %v2993
    %v3035 = vunpack.c.h.b16 %v2993
    %v3036 = vunpack.c.l.b16 %v2994
    %v3037 = vunpack.c.h.b16 %v2994
    %v3038 = vunpack.c.l.b16 %v2995
    %v3039 = vunpack.c.h.b16 %v2995
    %v3040 = vunpack.c.l.b16 %v2996
    %v3041 = vunpack.c.h.b16 %v2996
    %v3042 = vunpack.c.l.b16 %v2997
    %v3043 = vunpack.c.h.b16 %v2997
    %v3044 = vunpack.c.l.b16 %v2998
    %v3045 = vunpack.c.h.b16 %v2998
    %v3046 = vunpack.c.l.b16 %v2999
    %v3047 = vunpack.c.h.b16 %v2999
    %v3048 = vpack.c.b16 %v3020, %v3016
    %v3049 = vpack.c.b16 %v3021, %v3017
    %v3050 = vpack.c.b16 %v3022, %v3018
    %v3051 = vpack.c.b16 %v3023, %v3019
    %v3052 = vpack.c.b16 %v3028, %v3024
    %v3053 = vpack.c.b16 %v3029, %v3025
    %v3054 = vpack.c.b16 %v3030, %v3026
    %v3055 = vpack.c.b16 %v3031, %v3027
    %v3056 = vpack.c.b16 %v3036, %v3032
    %v3057 = vpack.c.b16 %v3037, %v3033
    %v3058 = vpack.c.b16 %v3038, %v3034
    %v3059 = vpack.c.b16 %v3039, %v3035
    %v3060 = vpack.c.b16 %v3044, %v3040
    %v3061 = vpack.c.b16 %v3045, %v3041
    %v3062 = vpack.c.b16 %v3046, %v3042
    %v3063 = vpack.c.b16 %v3047, %v3043
    %v3081 = vsel %vm374, %v2983, 0
    %3083 = vmatprep.subr.bf16.mxu0 0
    %3084 = vmatpush1.bf16.msra.mxu0 0
    %3085 = vmatprep.subr.bf16.mxu0 0
    %3086 = vmatpush1.bf16.msra.mxu0 0
    %3087 = vmatprep.subr.bf16.mxu0 0
    %3088 = vmatpush1.bf16.msra.mxu0 0
    %3089 = vmatprep.subr.bf16.mxu0 0
    %3090 = vmatpush1.bf16.msra.mxu0 0
    %3091 = vmatprep.subr.bf16.mxu0 %v3061
    %3092 = vmatpush1.bf16.msra.mxu0 %v3060
    %3093 = vmatprep.subr.bf16.mxu0 %v3057
    %3094 = vmatpush1.bf16.msra.mxu0 %v3056
    %3095 = vmatprep.subr.bf16.mxu0 %v3053
    %3096 = vmatpush1.bf16.msra.mxu0 %v3052
    %3097 = vmatprep.subr.bf16.mxu0 %v3049
    %3098 = vmatpush1.bf16.msra.mxu0 %v3048
    %3099 = vmatprep.subr.bf16.mxu0 0
    %3100 = vmatpush2.bf16.msra.mxu0 0
    %3101 = vmatprep.subr.bf16.mxu0 0
    %3102 = vmatpush2.bf16.msra.mxu0 0
    %3103 = vmatprep.subr.bf16.mxu0 0
    %3104 = vmatpush2.bf16.msra.mxu0 0
    %3105 = vmatprep.subr.bf16.mxu0 0
    %3106 = vmatpush2.bf16.msra.mxu0 0
    %3107 = vmatprep.subr.bf16.mxu0 0
    %3108 = vmatpush2.bf16.msra.mxu0 0
    %3109 = vmatprep.subr.bf16.mxu0 0
    %3110 = vmatpush2.bf16.msra.mxu0 0
    %3111 = vmatprep.subr.bf16.mxu0 0
    %3112 = vmatpush2.bf16.msra.mxu0 0
    %3113 = vmatprep.subr.bf16.mxu0 0
    %3114 = vmatpush2.bf16.msra.mxu0 0
    %3115 = vmatprep.mubr.bf16.mxu0 0
    %3116 = vmatmul.mubr.bf16.gmra.mxu0 %v3081
    %v3117 = vpop.f32.mrf.mxu0
    %v3118 = vadd.f32 0.0, %v3117
    %v3119 = vpop.f32.mrf.mxu0
    %v3120 = vadd.f32 0.0, %v3119
    %v3121 = vpop.f32.mrf.mxu0
    %v3122 = vpop.f32.mrf.mxu0
    %3123 = vdwg.mxu0
    %3124 = vmatprep.subr.bf16.mxu0 0
    %3125 = vmatpush1.bf16.msra.mxu0 0
    %3126 = vmatprep.subr.bf16.mxu0 0
    %3127 = vmatpush1.bf16.msra.mxu0 0
    %3128 = vmatprep.subr.bf16.mxu0 0
    %3129 = vmatpush1.bf16.msra.mxu0 0
    %3130 = vmatprep.subr.bf16.mxu0 0
    %3131 = vmatpush1.bf16.msra.mxu0 0
    %3132 = vmatprep.subr.bf16.mxu0 %v3063
    %3133 = vmatpush1.bf16.msra.mxu0 %v3062
    %3134 = vmatprep.subr.bf16.mxu0 %v3059
    %3135 = vmatpush1.bf16.msra.mxu0 %v3058
    %3136 = vmatprep.subr.bf16.mxu0 %v3055
    %3137 = vmatpush1.bf16.msra.mxu0 %v3054
    %3138 = vmatprep.subr.bf16.mxu0 %v3051
    %3139 = vmatpush1.bf16.msra.mxu0 %v3050
    %3140 = vmatprep.subr.bf16.mxu0 0
    %3141 = vmatpush2.bf16.msra.mxu0 0
    %3142 = vmatprep.subr.bf16.mxu0 0
    %3143 = vmatpush2.bf16.msra.mxu0 0
    %3144 = vmatprep.subr.bf16.mxu0 0
    %3145 = vmatpush2.bf16.msra.mxu0 0
    %3146 = vmatprep.subr.bf16.mxu0 0
    %3147 = vmatpush2.bf16.msra.mxu0 0
    %3148 = vmatprep.subr.bf16.mxu0 0
    %3149 = vmatpush2.bf16.msra.mxu0 0
    %3150 = vmatprep.subr.bf16.mxu0 0
    %3151 = vmatpush2.bf16.msra.mxu0 0
    %3152 = vmatprep.subr.bf16.mxu0 0
    %3153 = vmatpush2.bf16.msra.mxu0 0
    %3154 = vmatprep.subr.bf16.mxu0 0
    %3155 = vmatpush2.bf16.msra.mxu0 0
    %3156 = vmatprep.mubr.bf16.mxu0 0
    %3157 = vmatmul.mubr.bf16.gmra.mxu0 %v3081
    %v3158 = vpop.f32.mrf.mxu0
    %v3159 = vadd.f32 0.0, %v3158
    %v3160 = vpop.f32.mrf.mxu0
    %v3161 = vadd.f32 0.0, %v3160
    %v3162 = vpop.f32.mrf.mxu0
    %v3163 = vpop.f32.mrf.mxu0
    %3164 = vdwg.mxu0
    %v3165 = vadd.f32 %v2809, %v3118
    %v3166 = vadd.f32 %v2810, %v3120
    %v3167 = vadd.f32 %v2811, %v3159
    %v3168 = vadd.f32 %v2812, %v3161
    %s3169 = scalar_lea.vmem %s0, 40
    %v3170 = vld [vmem:[%s3169] sm:$0x1f]
    %v3172 = vcombine.high %v3170, %v3170
    %v3174 = vunpack.c.l.s4 1966171168
    %v3175 = vunpack.c.0.s8 %v3174
    %v3176 = vlaneseq
    %v3177 = vshrl.u32 %v3176, 7
    %v3178 = vsub.s32 %v3175, %v3177
    %v3179 = vrot.slane %v3170, %v3178
    %v3181 = vunpack.c.l.s4 1966171168
    %v3182 = vunpack.c.0.s8 %v3181
    %v3183 = vlaneseq
    %v3184 = vshrl.u32 %v3183, 7
    %v3185 = vsub.s32 %v3182, %v3184
    %v3186 = vrot.slane %v3172, %v3185
    %v3187 = vcombine.high %v3179, %v3179
    %v3189 = vunpack.c.l.s4 1966171168
    %v3190 = vunpack.c.0.s8 %v3189
    %v3191 = vlaneseq
    %v3192 = vshrl.u32 %v3191, 7
    %v3193 = vsub.s32 %v3190, %v3192
    %v3194 = vrot.slane %v3179, %v3193
    %v3196 = vunpack.c.l.s4 1966171168
    %v3197 = vunpack.c.0.s8 %v3196
    %v3198 = vlaneseq
    %v3199 = vshrl.u32 %v3198, 7
    %v3200 = vsub.s32 %v3197, %v3199
    %v3201 = vrot.slane %v3186, %v3200
    %v3203 = vunpack.c.l.s4 1966171168
    %v3204 = vunpack.c.0.s8 %v3203
    %v3205 = vlaneseq
    %v3206 = vshrl.u32 %v3205, 7
    %v3207 = vsub.s32 %v3204, %v3206
    %v3208 = vrot.slane %v3187, %v3207
    %v3209 = vcombine.high %v3194, %v3194
    %v3210 = vcombine.high %v3208, %v3208
    %v3216 = vsel %vm374, %v3201, 0
    %3218 = vmatprep.subr.bf16.mxu0 0
    %3219 = vmatpush1.bf16.msra.mxu0 %v309
    %3220 = vmatprep.subr.bf16.mxu0 0
    %3221 = vmatpush1.bf16.msra.mxu0 %v308
    %3222 = vmatprep.subr.bf16.mxu0 0
    %3223 = vmatpush1.bf16.msra.mxu0 %v307
    %3224 = vmatprep.subr.bf16.mxu0 0
    %3225 = vmatpush1.bf16.msra.mxu0 %v306
    %3226 = vmatprep.subr.bf16.mxu0 0
    %3227 = vmatpush1.bf16.msra.mxu0 %v305
    %3228 = vmatprep.subr.bf16.mxu0 0
    %3229 = vmatpush1.bf16.msra.mxu0 %v304
    %3230 = vmatprep.subr.bf16.mxu0 0
    %3231 = vmatpush1.bf16.msra.mxu0 %v303
    %3232 = vmatprep.subr.bf16.mxu0 0
    %3233 = vmatpush1.bf16.msra.mxu0 %v302
    %3234 = vmatprep.subr.bf16.mxu0 0
    %3235 = vmatpush2.bf16.msra.mxu0 %v317
    %3236 = vmatprep.subr.bf16.mxu0 0
    %3237 = vmatpush2.bf16.msra.mxu0 %v316
    %3238 = vmatprep.subr.bf16.mxu0 0
    %3239 = vmatpush2.bf16.msra.mxu0 %v315
    %3240 = vmatprep.subr.bf16.mxu0 0
    %3241 = vmatpush2.bf16.msra.mxu0 %v314
    %3242 = vmatprep.subr.bf16.mxu0 0
    %3243 = vmatpush2.bf16.msra.mxu0 %v313
    %3244 = vmatprep.subr.bf16.mxu0 0
    %3245 = vmatpush2.bf16.msra.mxu0 %v312
    %3246 = vmatprep.subr.bf16.mxu0 0
    %3247 = vmatpush2.bf16.msra.mxu0 %v311
    %3248 = vmatprep.subr.bf16.mxu0 0
    %3249 = vmatpush2.bf16.msra.mxu0 %v310
    %3250 = vmatprep.mubr.bf16.mxu0 %v3208
    %3251 = vmatmul.mubr.bf16.gmra.mxu0 %v3194
    %v3252 = vpop.f32.mrf.mxu0
    %v3253 = vadd.f32 %v112, %v3252
    %v3254 = vpop.f32.mrf.mxu0
    %v3255 = vpop.f32.mrf.mxu0
    %v3256 = vpop.f32.mrf.mxu0
    %3257 = vdwg.mxu0
    %3258 = vmatprep.subr.bf16.mxu0 0
    %3259 = vmatpush1.bf16.msra.mxu0 %v325
    %3260 = vmatprep.subr.bf16.mxu0 0
    %3261 = vmatpush1.bf16.msra.mxu0 %v324
    %3262 = vmatprep.subr.bf16.mxu0 0
    %3263 = vmatpush1.bf16.msra.mxu0 %v323
    %3264 = vmatprep.subr.bf16.mxu0 0
    %3265 = vmatpush1.bf16.msra.mxu0 %v322
    %3266 = vmatprep.subr.bf16.mxu0 0
    %3267 = vmatpush1.bf16.msra.mxu0 %v321
    %3268 = vmatprep.subr.bf16.mxu0 0
    %3269 = vmatpush1.bf16.msra.mxu0 %v320
    %3270 = vmatprep.subr.bf16.mxu0 0
    %3271 = vmatpush1.bf16.msra.mxu0 %v319
    %3272 = vmatprep.subr.bf16.mxu0 0
    %3273 = vmatpush1.bf16.msra.mxu0 %v318
    %3274 = vmatprep.subr.bf16.mxu0 0
    %3275 = vmatpush2.bf16.msra.mxu0 %v333
    %3276 = vmatprep.subr.bf16.mxu0 0
    %3277 = vmatpush2.bf16.msra.mxu0 %v332
    %3278 = vmatprep.subr.bf16.mxu0 0
    %3279 = vmatpush2.bf16.msra.mxu0 %v331
    %3280 = vmatprep.subr.bf16.mxu0 0
    %3281 = vmatpush2.bf16.msra.mxu0 %v330
    %3282 = vmatprep.subr.bf16.mxu0 0
    %3283 = vmatpush2.bf16.msra.mxu0 %v329
    %3284 = vmatprep.subr.bf16.mxu0 0
    %3285 = vmatpush2.bf16.msra.mxu0 %v328
    %3286 = vmatprep.subr.bf16.mxu0 0
    %3287 = vmatpush2.bf16.msra.mxu0 %v327
    %3288 = vmatprep.subr.bf16.mxu0 0
    %3289 = vmatpush2.bf16.msra.mxu0 %v326
    %3290 = vmatprep.mubr.bf16.mxu0 %v3210
    %3291 = vmatmul.mubr.bf16.gmra.mxu0 %v3209
    %v3292 = vpop.f32.mrf.mxu0
    %v3293 = vadd.f32 %v3253, %v3292
    %v3294 = vpop.f32.mrf.mxu0
    %v3295 = vpop.f32.mrf.mxu0
    %v3296 = vpop.f32.mrf.mxu0
    %3297 = vdwg.mxu0
    %3298 = vmatprep.subr.bf16.mxu0 0
    %3299 = vmatpush1.bf16.msra.mxu0 0
    %3300 = vmatprep.subr.bf16.mxu0 0
    %3301 = vmatpush1.bf16.msra.mxu0 0
    %3302 = vmatprep.subr.bf16.mxu0 0
    %3303 = vmatpush1.bf16.msra.mxu0 0
    %3304 = vmatprep.subr.bf16.mxu0 0
    %3305 = vmatpush1.bf16.msra.mxu0 0
    %3306 = vmatprep.subr.bf16.mxu0 0
    %3307 = vmatpush1.bf16.msra.mxu0 %v337
    %3308 = vmatprep.subr.bf16.mxu0 0
    %3309 = vmatpush1.bf16.msra.mxu0 %v336
    %3310 = vmatprep.subr.bf16.mxu0 0
    %3311 = vmatpush1.bf16.msra.mxu0 %v335
    %3312 = vmatprep.subr.bf16.mxu0 0
    %3313 = vmatpush1.bf16.msra.mxu0 %v334
    %3314 = vmatprep.subr.bf16.mxu0 0
    %3315 = vmatpush2.bf16.msra.mxu0 0
    %3316 = vmatprep.subr.bf16.mxu0 0
    %3317 = vmatpush2.bf16.msra.mxu0 0
    %3318 = vmatprep.subr.bf16.mxu0 0
    %3319 = vmatpush2.bf16.msra.mxu0 0
    %3320 = vmatprep.subr.bf16.mxu0 0
    %3321 = vmatpush2.bf16.msra.mxu0 0
    %3322 = vmatprep.subr.bf16.mxu0 0
    %3323 = vmatpush2.bf16.msra.mxu0 0
    %3324 = vmatprep.subr.bf16.mxu0 0
    %3325 = vmatpush2.bf16.msra.mxu0 0
    %3326 = vmatprep.subr.bf16.mxu0 0
    %3327 = vmatpush2.bf16.msra.mxu0 0
    %3328 = vmatprep.subr.bf16.mxu0 0
    %3329 = vmatpush2.bf16.msra.mxu0 0
    %3330 = vmatprep.mubr.bf16.mxu0 0
    %3331 = vmatmul.mubr.bf16.gmra.mxu0 %v3216
    %v3332 = vpop.f32.mrf.mxu0
    %v3333 = vadd.f32 %v3293, %v3332
    %v3334 = vpop.f32.mrf.mxu0
    %v3335 = vpop.f32.mrf.mxu0
    %v3336 = vpop.f32.mrf.mxu0
    %3337 = vdwg.mxu0
    %v3338 = vmax.f32 %v3333, 0.0
    %v3339 = vpack.c.bf16 %v3338, %v3338
    %v3340 = vld [vmem:[%s3 + $0x400] sm:$0xff]
    %v3341 = vld [vmem:[%s3 + $0x408] sm:$0xff]
    %v3342 = vld [vmem:[%s3 + $0x410] sm:$0xff]
    %v3343 = vld [vmem:[%s3 + $0x418] sm:$0xff]
    %v3344 = vld [vmem:[%s3 + $0x420] sm:$0xff]
    %v3345 = vld [vmem:[%s3 + $0x428] sm:$0xff]
    %v3346 = vld [vmem:[%s3 + $0x430] sm:$0xff]
    %v3347 = vld [vmem:[%s3 + $0x438] sm:$0xff]
    %v3348 = vld [vmem:[%s3 + $0x440] sm:$0xff]
    %v3349 = vld [vmem:[%s3 + $0x448] sm:$0xff]
    %v3350 = vld [vmem:[%s3 + $0x450] sm:$0xff]
    %v3351 = vld [vmem:[%s3 + $0x458] sm:$0xff]
    %v3352 = vld [vmem:[%s3 + $0x460] sm:$0xff]
    %v3353 = vld [vmem:[%s3 + $0x468] sm:$0xff]
    %v3354 = vld [vmem:[%s3 + $0x470] sm:$0xff]
    %v3355 = vld [vmem:[%s3 + $0x478] sm:$0xff]
    %v3372 = vunpack.c.l.b16 %v3340
    %v3373 = vunpack.c.h.b16 %v3340
    %v3374 = vunpack.c.l.b16 %v3341
    %v3375 = vunpack.c.h.b16 %v3341
    %v3376 = vunpack.c.l.b16 %v3342
    %v3377 = vunpack.c.h.b16 %v3342
    %v3378 = vunpack.c.l.b16 %v3343
    %v3379 = vunpack.c.h.b16 %v3343
    %v3380 = vunpack.c.l.b16 %v3344
    %v3381 = vunpack.c.h.b16 %v3344
    %v3382 = vunpack.c.l.b16 %v3345
    %v3383 = vunpack.c.h.b16 %v3345
    %v3384 = vunpack.c.l.b16 %v3346
    %v3385 = vunpack.c.h.b16 %v3346
    %v3386 = vunpack.c.l.b16 %v3347
    %v3387 = vunpack.c.h.b16 %v3347
    %v3388 = vunpack.c.l.b16 %v3348
    %v3389 = vunpack.c.h.b16 %v3348
    %v3390 = vunpack.c.l.b16 %v3349
    %v3391 = vunpack.c.h.b16 %v3349
    %v3392 = vunpack.c.l.b16 %v3350
    %v3393 = vunpack.c.h.b16 %v3350
    %v3394 = vunpack.c.l.b16 %v3351
    %v3395 = vunpack.c.h.b16 %v3351
    %v3396 = vunpack.c.l.b16 %v3352
    %v3397 = vunpack.c.h.b16 %v3352
    %v3398 = vunpack.c.l.b16 %v3353
    %v3399 = vunpack.c.h.b16 %v3353
    %v3400 = vunpack.c.l.b16 %v3354
    %v3401 = vunpack.c.h.b16 %v3354
    %v3402 = vunpack.c.l.b16 %v3355
    %v3403 = vunpack.c.h.b16 %v3355
    %v3404 = vpack.c.b16 %v3376, %v3372
    %v3405 = vpack.c.b16 %v3377, %v3373
    %v3406 = vpack.c.b16 %v3378, %v3374
    %v3407 = vpack.c.b16 %v3379, %v3375
    %v3408 = vpack.c.b16 %v3384, %v3380
    %v3409 = vpack.c.b16 %v3385, %v3381
    %v3410 = vpack.c.b16 %v3386, %v3382
    %v3411 = vpack.c.b16 %v3387, %v3383
    %v3412 = vpack.c.b16 %v3392, %v3388
    %v3413 = vpack.c.b16 %v3393, %v3389
    %v3414 = vpack.c.b16 %v3394, %v3390
    %v3415 = vpack.c.b16 %v3395, %v3391
    %v3416 = vpack.c.b16 %v3400, %v3396
    %v3417 = vpack.c.b16 %v3401, %v3397
    %v3418 = vpack.c.b16 %v3402, %v3398
    %v3419 = vpack.c.b16 %v3403, %v3399
    %v3437 = vsel %vm374, %v3339, 0
    %3439 = vmatprep.subr.bf16.mxu0 0
    %3440 = vmatpush1.bf16.msra.mxu0 0
    %3441 = vmatprep.subr.bf16.mxu0 0
    %3442 = vmatpush1.bf16.msra.mxu0 0
    %3443 = vmatprep.subr.bf16.mxu0 0
    %3444 = vmatpush1.bf16.msra.mxu0 0
    %3445 = vmatprep.subr.bf16.mxu0 0
    %3446 = vmatpush1.bf16.msra.mxu0 0
    %3447 = vmatprep.subr.bf16.mxu0 %v3417
    %3448 = vmatpush1.bf16.msra.mxu0 %v3416
    %3449 = vmatprep.subr.bf16.mxu0 %v3413
    %3450 = vmatpush1.bf16.msra.mxu0 %v3412
    %3451 = vmatprep.subr.bf16.mxu0 %v3409
    %3452 = vmatpush1.bf16.msra.mxu0 %v3408
    %3453 = vmatprep.subr.bf16.mxu0 %v3405
    %3454 = vmatpush1.bf16.msra.mxu0 %v3404
    %3455 = vmatprep.subr.bf16.mxu0 0
    %3456 = vmatpush2.bf16.msra.mxu0 0
    %3457 = vmatprep.subr.bf16.mxu0 0
    %3458 = vmatpush2.bf16.msra.mxu0 0
    %3459 = vmatprep.subr.bf16.mxu0 0
    %3460 = vmatpush2.bf16.msra.mxu0 0
    %3461 = vmatprep.subr.bf16.mxu0 0
    %3462 = vmatpush2.bf16.msra.mxu0 0
    %3463 = vmatprep.subr.bf16.mxu0 0
    %3464 = vmatpush2.bf16.msra.mxu0 0
    %3465 = vmatprep.subr.bf16.mxu0 0
    %3466 = vmatpush2.bf16.msra.mxu0 0
    %3467 = vmatprep.subr.bf16.mxu0 0
    %3468 = vmatpush2.bf16.msra.mxu0 0
    %3469 = vmatprep.subr.bf16.mxu0 0
    %3470 = vmatpush2.bf16.msra.mxu0 0
    %3471 = vmatprep.mubr.bf16.mxu0 0
    %3472 = vmatmul.mubr.bf16.gmra.mxu0 %v3437
    %v3473 = vpop.f32.mrf.mxu0
    %v3474 = vadd.f32 0.0, %v3473
    %v3475 = vpop.f32.mrf.mxu0
    %v3476 = vadd.f32 0.0, %v3475
    %v3477 = vpop.f32.mrf.mxu0
    %v3478 = vpop.f32.mrf.mxu0
    %3479 = vdwg.mxu0
    %3480 = vmatprep.subr.bf16.mxu0 0
    %3481 = vmatpush1.bf16.msra.mxu0 0
    %3482 = vmatprep.subr.bf16.mxu0 0
    %3483 = vmatpush1.bf16.msra.mxu0 0
    %3484 = vmatprep.subr.bf16.mxu0 0
    %3485 = vmatpush1.bf16.msra.mxu0 0
    %3486 = vmatprep.subr.bf16.mxu0 0
    %3487 = vmatpush1.bf16.msra.mxu0 0
    %3488 = vmatprep.subr.bf16.mxu0 %v3419
    %3489 = vmatpush1.bf16.msra.mxu0 %v3418
    %3490 = vmatprep.subr.bf16.mxu0 %v3415
    %3491 = vmatpush1.bf16.msra.mxu0 %v3414
    %3492 = vmatprep.subr.bf16.mxu0 %v3411
    %3493 = vmatpush1.bf16.msra.mxu0 %v3410
    %3494 = vmatprep.subr.bf16.mxu0 %v3407
    %3495 = vmatpush1.bf16.msra.mxu0 %v3406
    %3496 = vmatprep.subr.bf16.mxu0 0
    %3497 = vmatpush2.bf16.msra.mxu0 0
    %3498 = vmatprep.subr.bf16.mxu0 0
    %3499 = vmatpush2.bf16.msra.mxu0 0
    %3500 = vmatprep.subr.bf16.mxu0 0
    %3501 = vmatpush2.bf16.msra.mxu0 0
    %3502 = vmatprep.subr.bf16.mxu0 0
    %3503 = vmatpush2.bf16.msra.mxu0 0
    %3504 = vmatprep.subr.bf16.mxu0 0
    %3505 = vmatpush2.bf16.msra.mxu0 0
    %3506 = vmatprep.subr.bf16.mxu0 0
    %3507 = vmatpush2.bf16.msra.mxu0 0
    %3508 = vmatprep.subr.bf16.mxu0 0
    %3509 = vmatpush2.bf16.msra.mxu0 0
    %3510 = vmatprep.subr.bf16.mxu0 0
    %3511 = vmatpush2.bf16.msra.mxu0 0
    %3512 = vmatprep.mubr.bf16.mxu0 0
    %3513 = vmatmul.mubr.bf16.gmra.mxu0 %v3437
    %v3514 = vpop.f32.mrf.mxu0
    %v3515 = vadd.f32 0.0, %v3514
    %v3516 = vpop.f32.mrf.mxu0
    %v3517 = vadd.f32 0.0, %v3516
    %v3518 = vpop.f32.mrf.mxu0
    %v3519 = vpop.f32.mrf.mxu0
    %3520 = vdwg.mxu0
    %v3521 = vadd.f32 %v3165, %v3474
    %v3522 = vadd.f32 %v3166, %v3476
    %v3523 = vadd.f32 %v3167, %v3515
    %v3524 = vadd.f32 %v3168, %v3517
    %v3525 = vld [vmem:[%s4] sm:$0xf]
    %v3527 = vlaneseq
    %v3528 = vshrl.u32 %v3527, 7
    %v3529 = vsub.s32 0, %v3528
    %v3530 = vrot.slane %v3525, %v3529
    %v3531 = vlaneseq
    %v3532 = vshrl.u32 %v3531, 7
    %v3533 = vsub.s32 1, %v3532
    %v3534 = vrot.slane %v3525, %v3533
    %v3535 = vlaneseq
    %v3536 = vshrl.u32 %v3535, 7
    %v3537 = vsub.s32 2, %v3536
    %v3538 = vrot.slane %v3525, %v3537
    %v3539 = vlaneseq
    %v3540 = vshrl.u32 %v3539, 7
    %v3541 = vsub.s32 3, %v3540
    %v3542 = vrot.slane %v3525, %v3541
    %v3547 = vadd.f32 %v3521, %v3530
    %v3548 = vadd.f32 %v3522, %v3534
    %v3549 = vadd.f32 %v3523, %v3538
    %v3550 = vadd.f32 %v3524, %v3542
    %v3551 = vmax.f32 %v3547, 0.0
    %v3552 = vmax.f32 %v3548, 0.0
    %v3553 = vmax.f32 %v3549, 0.0
    %v3554 = vmax.f32 %v3550, 0.0
    %v3555 = vpack.c.bf16 %v3551, %v3551
    %v3556 = vpack.c.bf16 %v3552, %v3552
    %v3557 = vpack.c.bf16 %v3553, %v3553
    %v3558 = vpack.c.bf16 %v3554, %v3554
    %v3559 = vld [vmem:[%s5] sm:$0xff]
    %v3560 = vld [vmem:[%s5 + $0x8] sm:$0xff]
    %v3561 = vld [vmem:[%s5 + $0x10] sm:$0xff]
    %v3562 = vld [vmem:[%s5 + $0x18] sm:$0xff]
    %v3563 = vld [vmem:[%s5 + $0x20] sm:$0xff]
    %v3564 = vld [vmem:[%s5 + $0x28] sm:$0xff]
    %v3565 = vld [vmem:[%s5 + $0x30] sm:$0xff]
    %v3566 = vld [vmem:[%s5 + $0x38] sm:$0xff]
    %v3567 = vld [vmem:[%s5 + $0x40] sm:$0xff]
    %v3568 = vld [vmem:[%s5 + $0x48] sm:$0xff]
    %v3569 = vld [vmem:[%s5 + $0x50] sm:$0xff]
    %v3570 = vld [vmem:[%s5 + $0x58] sm:$0xff]
    %v3571 = vld [vmem:[%s5 + $0x60] sm:$0xff]
    %v3572 = vld [vmem:[%s5 + $0x68] sm:$0xff]
    %v3573 = vld [vmem:[%s5 + $0x70] sm:$0xff]
    %v3574 = vld [vmem:[%s5 + $0x78] sm:$0xff]
    %v3575 = vld [vmem:[%s5 + $0x80] sm:$0xff]
    %v3576 = vld [vmem:[%s5 + $0x88] sm:$0xff]
    %v3577 = vld [vmem:[%s5 + $0x90] sm:$0xff]
    %v3578 = vld [vmem:[%s5 + $0x98] sm:$0xff]
    %v3579 = vld [vmem:[%s5 + $0xa0] sm:$0xff]
    %v3580 = vld [vmem:[%s5 + $0xa8] sm:$0xff]
    %v3581 = vld [vmem:[%s5 + $0xb0] sm:$0xff]
    %v3582 = vld [vmem:[%s5 + $0xb8] sm:$0xff]
    %v3583 = vld [vmem:[%s5 + $0xc0] sm:$0xff]
    %v3584 = vld [vmem:[%s5 + $0xc8] sm:$0xff]
    %v3585 = vld [vmem:[%s5 + $0xd0] sm:$0xff]
    %v3586 = vld [vmem:[%s5 + $0xd8] sm:$0xff]
    %v3587 = vld [vmem:[%s5 + $0xe0] sm:$0xff]
    %v3588 = vld [vmem:[%s5 + $0xe8] sm:$0xff]
    %v3589 = vld [vmem:[%s5 + $0xf0] sm:$0xff]
    %v3590 = vld [vmem:[%s5 + $0xf8] sm:$0xff]
    %v3591 = vld [vmem:[%s5 + $0x100] sm:$0xff]
    %v3592 = vld [vmem:[%s5 + $0x108] sm:$0xff]
    %v3593 = vld [vmem:[%s5 + $0x110] sm:$0xff]
    %v3594 = vld [vmem:[%s5 + $0x118] sm:$0xff]
    %v3595 = vld [vmem:[%s5 + $0x120] sm:$0xff]
    %v3596 = vld [vmem:[%s5 + $0x128] sm:$0xff]
    %v3597 = vld [vmem:[%s5 + $0x130] sm:$0xff]
    %v3598 = vld [vmem:[%s5 + $0x138] sm:$0xff]
    %v3599 = vld [vmem:[%s5 + $0x140] sm:$0xff]
    %v3600 = vld [vmem:[%s5 + $0x148] sm:$0xff]
    %v3601 = vld [vmem:[%s5 + $0x150] sm:$0xff]
    %v3602 = vld [vmem:[%s5 + $0x158] sm:$0xff]
    %v3603 = vld [vmem:[%s5 + $0x160] sm:$0xff]
    %v3604 = vld [vmem:[%s5 + $0x168] sm:$0xff]
    %v3605 = vld [vmem:[%s5 + $0x170] sm:$0xff]
    %v3606 = vld [vmem:[%s5 + $0x178] sm:$0xff]
    %v3607 = vld [vmem:[%s5 + $0x180] sm:$0xff]
    %v3608 = vld [vmem:[%s5 + $0x188] sm:$0xff]
    %v3609 = vld [vmem:[%s5 + $0x190] sm:$0xff]
    %v3610 = vld [vmem:[%s5 + $0x198] sm:$0xff]
    %v3611 = vld [vmem:[%s5 + $0x1a0] sm:$0xff]
    %v3612 = vld [vmem:[%s5 + $0x1a8] sm:$0xff]
    %v3613 = vld [vmem:[%s5 + $0x1b0] sm:$0xff]
    %v3614 = vld [vmem:[%s5 + $0x1b8] sm:$0xff]
    %v3615 = vld [vmem:[%s5 + $0x1c0] sm:$0xff]
    %v3616 = vld [vmem:[%s5 + $0x1c8] sm:$0xff]
    %v3617 = vld [vmem:[%s5 + $0x1d0] sm:$0xff]
    %v3618 = vld [vmem:[%s5 + $0x1d8] sm:$0xff]
    %v3619 = vld [vmem:[%s5 + $0x1e0] sm:$0xff]
    %v3620 = vld [vmem:[%s5 + $0x1e8] sm:$0xff]
    %v3621 = vld [vmem:[%s5 + $0x1f0] sm:$0xff]
    %v3622 = vld [vmem:[%s5 + $0x1f8] sm:$0xff]
    %v3623 = vld [vmem:[%s6] sm:$0x3]
    %v3625 = vlaneseq
    %v3626 = vshrl.u32 %v3625, 7
    %v3627 = vsub.s32 0, %v3626
    %v3628 = vrot.slane %v3623, %v3627
    %v3629 = vlaneseq
    %v3630 = vshrl.u32 %v3629, 7
    %v3631 = vsub.s32 1, %v3630
    %v3632 = vrot.slane %v3623, %v3631
    %v3699 = vunpack.c.l.b16 %v3559
    %v3700 = vunpack.c.h.b16 %v3559
    %v3701 = vunpack.c.l.b16 %v3560
    %v3702 = vunpack.c.h.b16 %v3560
    %v3703 = vunpack.c.l.b16 %v3561
    %v3704 = vunpack.c.h.b16 %v3561
    %v3705 = vunpack.c.l.b16 %v3562
    %v3706 = vunpack.c.h.b16 %v3562
    %v3707 = vunpack.c.l.b16 %v3563
    %v3708 = vunpack.c.h.b16 %v3563
    %v3709 = vunpack.c.l.b16 %v3564
    %v3710 = vunpack.c.h.b16 %v3564
    %v3711 = vunpack.c.l.b16 %v3565
    %v3712 = vunpack.c.h.b16 %v3565
    %v3713 = vunpack.c.l.b16 %v3566
    %v3714 = vunpack.c.h.b16 %v3566
    %v3715 = vunpack.c.l.b16 %v3567
    %v3716 = vunpack.c.h.b16 %v3567
    %v3717 = vunpack.c.l.b16 %v3568
    %v3718 = vunpack.c.h.b16 %v3568
    %v3719 = vunpack.c.l.b16 %v3569
    %v3720 = vunpack.c.h.b16 %v3569
    %v3721 = vunpack.c.l.b16 %v3570
    %v3722 = vunpack.c.h.b16 %v3570
    %v3723 = vunpack.c.l.b16 %v3571
    %v3724 = vunpack.c.h.b16 %v3571
    %v3725 = vunpack.c.l.b16 %v3572
    %v3726 = vunpack.c.h.b16 %v3572
    %v3727 = vunpack.c.l.b16 %v3573
    %v3728 = vunpack.c.h.b16 %v3573
    %v3729 = vunpack.c.l.b16 %v3574
    %v3730 = vunpack.c.h.b16 %v3574
    %v3731 = vunpack.c.l.b16 %v3575
    %v3732 = vunpack.c.h.b16 %v3575
    %v3733 = vunpack.c.l.b16 %v3576
    %v3734 = vunpack.c.h.b16 %v3576
    %v3735 = vunpack.c.l.b16 %v3577
    %v3736 = vunpack.c.h.b16 %v3577
    %v3737 = vunpack.c.l.b16 %v3578
    %v3738 = vunpack.c.h.b16 %v3578
    %v3739 = vunpack.c.l.b16 %v3579
    %v3740 = vunpack.c.h.b16 %v3579
    %v3741 = vunpack.c.l.b16 %v3580
    %v3742 = vunpack.c.h.b16 %v3580
    %v3743 = vunpack.c.l.b16 %v3581
    %v3744 = vunpack.c.h.b16 %v3581
    %v3745 = vunpack.c.l.b16 %v3582
    %v3746 = vunpack.c.h.b16 %v3582
    %v3747 = vunpack.c.l.b16 %v3583
    %v3748 = vunpack.c.h.b16 %v3583
    %v3749 = vunpack.c.l.b16 %v3584
    %v3750 = vunpack.c.h.b16 %v3584
    %v3751 = vunpack.c.l.b16 %v3585
    %v3752 = vunpack.c.h.b16 %v3585
    %v3753 = vunpack.c.l.b16 %v3586
    %v3754 = vunpack.c.h.b16 %v3586
    %v3755 = vunpack.c.l.b16 %v3587
    %v3756 = vunpack.c.h.b16 %v3587
    %v3757 = vunpack.c.l.b16 %v3588
    %v3758 = vunpack.c.h.b16 %v3588
    %v3759 = vunpack.c.l.b16 %v3589
    %v3760 = vunpack.c.h.b16 %v3589
    %v3761 = vunpack.c.l.b16 %v3590
    %v3762 = vunpack.c.h.b16 %v3590
    %v3763 = vunpack.c.l.b16 %v3591
    %v3764 = vunpack.c.h.b16 %v3591
    %v3765 = vunpack.c.l.b16 %v3592
    %v3766 = vunpack.c.h.b16 %v3592
    %v3767 = vunpack.c.l.b16 %v3593
    %v3768 = vunpack.c.h.b16 %v3593
    %v3769 = vunpack.c.l.b16 %v3594
    %v3770 = vunpack.c.h.b16 %v3594
    %v3771 = vunpack.c.l.b16 %v3595
    %v3772 = vunpack.c.h.b16 %v3595
    %v3773 = vunpack.c.l.b16 %v3596
    %v3774 = vunpack.c.h.b16 %v3596
    %v3775 = vunpack.c.l.b16 %v3597
    %v3776 = vunpack.c.h.b16 %v3597
    %v3777 = vunpack.c.l.b16 %v3598
    %v3778 = vunpack.c.h.b16 %v3598
    %v3779 = vunpack.c.l.b16 %v3599
    %v3780 = vunpack.c.h.b16 %v3599
    %v3781 = vunpack.c.l.b16 %v3600
    %v3782 = vunpack.c.h.b16 %v3600
    %v3783 = vunpack.c.l.b16 %v3601
    %v3784 = vunpack.c.h.b16 %v3601
    %v3785 = vunpack.c.l.b16 %v3602
    %v3786 = vunpack.c.h.b16 %v3602
    %v3787 = vunpack.c.l.b16 %v3603
    %v3788 = vunpack.c.h.b16 %v3603
    %v3789 = vunpack.c.l.b16 %v3604
    %v3790 = vunpack.c.h.b16 %v3604
    %v3791 = vunpack.c.l.b16 %v3605
    %v3792 = vunpack.c.h.b16 %v3605
    %v3793 = vunpack.c.l.b16 %v3606
    %v3794 = vunpack.c.h.b16 %v3606
    %v3795 = vunpack.c.l.b16 %v3607
    %v3796 = vunpack.c.h.b16 %v3607
    %v3797 = vunpack.c.l.b16 %v3608
    %v3798 = vunpack.c.h.b16 %v3608
    %v3799 = vunpack.c.l.b16 %v3609
    %v3800 = vunpack.c.h.b16 %v3609
    %v3801 = vunpack.c.l.b16 %v3610
    %v3802 = vunpack.c.h.b16 %v3610
    %v3803 = vunpack.c.l.b16 %v3611
    %v3804 = vunpack.c.h.b16 %v3611
    %v3805 = vunpack.c.l.b16 %v3612
    %v3806 = vunpack.c.h.b16 %v3612
    %v3807 = vunpack.c.l.b16 %v3613
    %v3808 = vunpack.c.h.b16 %v3613
    %v3809 = vunpack.c.l.b16 %v3614
    %v3810 = vunpack.c.h.b16 %v3614
    %v3811 = vunpack.c.l.b16 %v3615
    %v3812 = vunpack.c.h.b16 %v3615
    %v3813 = vunpack.c.l.b16 %v3616
    %v3814 = vunpack.c.h.b16 %v3616
    %v3815 = vunpack.c.l.b16 %v3617
    %v3816 = vunpack.c.h.b16 %v3617
    %v3817 = vunpack.c.l.b16 %v3618
    %v3818 = vunpack.c.h.b16 %v3618
    %v3819 = vunpack.c.l.b16 %v3619
    %v3820 = vunpack.c.h.b16 %v3619
    %v3821 = vunpack.c.l.b16 %v3620
    %v3822 = vunpack.c.h.b16 %v3620
    %v3823 = vunpack.c.l.b16 %v3621
    %v3824 = vunpack.c.h.b16 %v3621
    %v3825 = vunpack.c.l.b16 %v3622
    %v3826 = vunpack.c.h.b16 %v3622
    %v3827 = vpack.c.b16 %v3701, %v3699
    %v3828 = vpack.c.b16 %v3702, %v3700
    %v3829 = vpack.c.b16 %v3705, %v3703
    %v3830 = vpack.c.b16 %v3706, %v3704
    %v3831 = vpack.c.b16 %v3709, %v3707
    %v3832 = vpack.c.b16 %v3710, %v3708
    %v3833 = vpack.c.b16 %v3713, %v3711
    %v3834 = vpack.c.b16 %v3714, %v3712
    %v3835 = vpack.c.b16 %v3717, %v3715
    %v3836 = vpack.c.b16 %v3718, %v3716
    %v3837 = vpack.c.b16 %v3721, %v3719
    %v3838 = vpack.c.b16 %v3722, %v3720
    %v3839 = vpack.c.b16 %v3725, %v3723
    %v3840 = vpack.c.b16 %v3726, %v3724
    %v3841 = vpack.c.b16 %v3729, %v3727
    %v3842 = vpack.c.b16 %v3730, %v3728
    %v3843 = vpack.c.b16 %v3733, %v3731
    %v3844 = vpack.c.b16 %v3734, %v3732
    %v3845 = vpack.c.b16 %v3737, %v3735
    %v3846 = vpack.c.b16 %v3738, %v3736
    %v3847 = vpack.c.b16 %v3741, %v3739
    %v3848 = vpack.c.b16 %v3742, %v3740
    %v3849 = vpack.c.b16 %v3745, %v3743
    %v3850 = vpack.c.b16 %v3746, %v3744
    %v3851 = vpack.c.b16 %v3749, %v3747
    %v3852 = vpack.c.b16 %v3750, %v3748
    %v3853 = vpack.c.b16 %v3753, %v3751
    %v3854 = vpack.c.b16 %v3754, %v3752
    %v3855 = vpack.c.b16 %v3757, %v3755
    %v3856 = vpack.c.b16 %v3758, %v3756
    %v3857 = vpack.c.b16 %v3761, %v3759
    %v3858 = vpack.c.b16 %v3762, %v3760
    %v3859 = vpack.c.b16 %v3765, %v3763
    %v3860 = vpack.c.b16 %v3766, %v3764
    %v3861 = vpack.c.b16 %v3769, %v3767
    %v3862 = vpack.c.b16 %v3770, %v3768
    %v3863 = vpack.c.b16 %v3773, %v3771
    %v3864 = vpack.c.b16 %v3774, %v3772
    %v3865 = vpack.c.b16 %v3777, %v3775
    %v3866 = vpack.c.b16 %v3778, %v3776
    %v3867 = vpack.c.b16 %v3781, %v3779
    %v3868 = vpack.c.b16 %v3782, %v3780
    %v3869 = vpack.c.b16 %v3785, %v3783
    %v3870 = vpack.c.b16 %v3786, %v3784
    %v3871 = vpack.c.b16 %v3789, %v3787
    %v3872 = vpack.c.b16 %v3790, %v3788
    %v3873 = vpack.c.b16 %v3793, %v3791
    %v3874 = vpack.c.b16 %v3794, %v3792
    %v3875 = vpack.c.b16 %v3797, %v3795
    %v3876 = vpack.c.b16 %v3798, %v3796
    %v3877 = vpack.c.b16 %v3801, %v3799
    %v3878 = vpack.c.b16 %v3802, %v3800
    %v3879 = vpack.c.b16 %v3805, %v3803
    %v3880 = vpack.c.b16 %v3806, %v3804
    %v3881 = vpack.c.b16 %v3809, %v3807
    %v3882 = vpack.c.b16 %v3810, %v3808
    %v3883 = vpack.c.b16 %v3813, %v3811
    %v3884 = vpack.c.b16 %v3814, %v3812
    %v3885 = vpack.c.b16 %v3817, %v3815
    %v3886 = vpack.c.b16 %v3818, %v3816
    %v3887 = vpack.c.b16 %v3821, %v3819
    %v3888 = vpack.c.b16 %v3822, %v3820
    %v3889 = vpack.c.b16 %v3825, %v3823
    %v3890 = vpack.c.b16 %v3826, %v3824
    %3955 = vmatprep.subr.bf16.mxu0 %v3842
    %3956 = vmatpush1.bf16.msra.mxu0 %v3841
    %3957 = vmatprep.subr.bf16.mxu0 %v3840
    %3958 = vmatpush1.bf16.msra.mxu0 %v3839
    %3959 = vmatprep.subr.bf16.mxu0 %v3838
    %3960 = vmatpush1.bf16.msra.mxu0 %v3837
    %3961 = vmatprep.subr.bf16.mxu0 %v3836
    %3962 = vmatpush1.bf16.msra.mxu0 %v3835
    %3963 = vmatprep.subr.bf16.mxu0 %v3834
    %3964 = vmatpush1.bf16.msra.mxu0 %v3833
    %3965 = vmatprep.subr.bf16.mxu0 %v3832
    %3966 = vmatpush1.bf16.msra.mxu0 %v3831
    %3967 = vmatprep.subr.bf16.mxu0 %v3830
    %3968 = vmatpush1.bf16.msra.mxu0 %v3829
    %3969 = vmatprep.subr.bf16.mxu0 %v3828
    %3970 = vmatpush1.bf16.msra.mxu0 %v3827
    %3971 = vmatprep.subr.bf16.mxu0 %v3858
    %3972 = vmatpush2.bf16.msra.mxu0 %v3857
    %3973 = vmatprep.subr.bf16.mxu0 %v3856
    %3974 = vmatpush2.bf16.msra.mxu0 %v3855
    %3975 = vmatprep.subr.bf16.mxu0 %v3854
    %3976 = vmatpush2.bf16.msra.mxu0 %v3853
    %3977 = vmatprep.subr.bf16.mxu0 %v3852
    %3978 = vmatpush2.bf16.msra.mxu0 %v3851
    %3979 = vmatprep.subr.bf16.mxu0 %v3850
    %3980 = vmatpush2.bf16.msra.mxu0 %v3849
    %3981 = vmatprep.subr.bf16.mxu0 %v3848
    %3982 = vmatpush2.bf16.msra.mxu0 %v3847
    %3983 = vmatprep.subr.bf16.mxu0 %v3846
    %3984 = vmatpush2.bf16.msra.mxu0 %v3845
    %3985 = vmatprep.subr.bf16.mxu0 %v3844
    %3986 = vmatpush2.bf16.msra.mxu0 %v3843
    %3987 = vmatprep.mubr.bf16.mxu0 %v3556
    %3988 = vmatmul.mubr.bf16.gmra.mxu0 %v3555
    %v3989 = vpop.f32.mrf.mxu0
    %v3990 = vadd.f32 %v3628, %v3989
    %v3991 = vpop.f32.mrf.mxu0
    %v3992 = vadd.f32 %v3632, %v3991
    %v3993 = vpop.f32.mrf.mxu0
    %v3994 = vpop.f32.mrf.mxu0
    %3995 = vdwg.mxu0
    %3996 = vmatprep.subr.bf16.mxu0 %v3874
    %3997 = vmatpush1.bf16.msra.mxu0 %v3873
    %3998 = vmatprep.subr.bf16.mxu0 %v3872
    %3999 = vmatpush1.bf16.msra.mxu0 %v3871
    %4000 = vmatprep.subr.bf16.mxu0 %v3870
    %4001 = vmatpush1.bf16.msra.mxu0 %v3869
    %4002 = vmatprep.subr.bf16.mxu0 %v3868
    %4003 = vmatpush1.bf16.msra.mxu0 %v3867
    %4004 = vmatprep.subr.bf16.mxu0 %v3866
    %4005 = vmatpush1.bf16.msra.mxu0 %v3865
    %4006 = vmatprep.subr.bf16.mxu0 %v3864
    %4007 = vmatpush1.bf16.msra.mxu0 %v3863
    %4008 = vmatprep.subr.bf16.mxu0 %v3862
    %4009 = vmatpush1.bf16.msra.mxu0 %v3861
    %4010 = vmatprep.subr.bf16.mxu0 %v3860
    %4011 = vmatpush1.bf16.msra.mxu0 %v3859
    %4012 = vmatprep.subr.bf16.mxu0 %v3890
    %4013 = vmatpush2.bf16.msra.mxu0 %v3889
    %4014 = vmatprep.subr.bf16.mxu0 %v3888
    %4015 = vmatpush2.bf16.msra.mxu0 %v3887
    %4016 = vmatprep.subr.bf16.mxu0 %v3886
    %4017 = vmatpush2.bf16.msra.mxu0 %v3885
    %4018 = vmatprep.subr.bf16.mxu0 %v3884
    %4019 = vmatpush2.bf16.msra.mxu0 %v3883
    %4020 = vmatprep.subr.bf16.mxu0 %v3882
    %4021 = vmatpush2.bf16.msra.mxu0 %v3881
    %4022 = vmatprep.subr.bf16.mxu0 %v3880
    %4023 = vmatpush2.bf16.msra.mxu0 %v3879
    %4024 = vmatprep.subr.bf16.mxu0 %v3878
    %4025 = vmatpush2.bf16.msra.mxu0 %v3877
    %4026 = vmatprep.subr.bf16.mxu0 %v3876
    %4027 = vmatpush2.bf16.msra.mxu0 %v3875
    %4028 = vmatprep.mubr.bf16.mxu0 %v3558
    %4029 = vmatmul.mubr.bf16.gmra.mxu0 %v3557
    %v4030 = vpop.f32.mrf.mxu0
    %v4031 = vadd.f32 %v3990, %v4030
    %v4032 = vpop.f32.mrf.mxu0
    %v4033 = vadd.f32 %v3992, %v4032
    %v4034 = vpop.f32.mrf.mxu0
    %v4035 = vpop.f32.mrf.mxu0
    %4036 = vdwg.mxu0
    %v4037 = vmax.f32 %v4031, 0.0
    %v4038 = vmax.f32 %v4033, 0.0
    %v4039 = vpack.c.bf16 %v4037, %v4037
    %v4040 = vpack.c.bf16 %v4038, %v4038
    %v4041 = vld [vmem:[%s7] sm:$0xf]
    %v4042 = vld [vmem:[%s7 + $0x4] sm:$0xf]
    %v4043 = vld [vmem:[%s7 + $0x8] sm:$0xf]
    %v4044 = vld [vmem:[%s7 + $0xc] sm:$0xf]
    %v4045 = vld [vmem:[%s7 + $0x10] sm:$0xf]
    %v4046 = vld [vmem:[%s7 + $0x14] sm:$0xf]
    %v4047 = vld [vmem:[%s7 + $0x18] sm:$0xf]
    %v4048 = vld [vmem:[%s7 + $0x1c] sm:$0xf]
    %v4049 = vld [vmem:[%s7 + $0x20] sm:$0xf]
    %v4050 = vld [vmem:[%s7 + $0x24] sm:$0xf]
    %v4051 = vld [vmem:[%s7 + $0x28] sm:$0xf]
    %v4052 = vld [vmem:[%s7 + $0x2c] sm:$0xf]
    %v4053 = vld [vmem:[%s7 + $0x30] sm:$0xf]
    %v4054 = vld [vmem:[%s7 + $0x34] sm:$0xf]
    %v4055 = vld [vmem:[%s7 + $0x38] sm:$0xf]
    %v4056 = vld [vmem:[%s7 + $0x3c] sm:$0xf]
    %v4057 = vld [vmem:[%s7 + $0x40] sm:$0xf]
    %v4058 = vld [vmem:[%s7 + $0x44] sm:$0xf]
    %v4059 = vld [vmem:[%s7 + $0x48] sm:$0xf]
    %v4060 = vld [vmem:[%s7 + $0x4c] sm:$0xf]
    %v4061 = vld [vmem:[%s7 + $0x50] sm:$0xf]
    %v4062 = vld [vmem:[%s7 + $0x54] sm:$0xf]
    %v4063 = vld [vmem:[%s7 + $0x58] sm:$0xf]
    %v4064 = vld [vmem:[%s7 + $0x5c] sm:$0xf]
    %v4065 = vld [vmem:[%s7 + $0x60] sm:$0xf]
    %v4066 = vld [vmem:[%s7 + $0x64] sm:$0xf]
    %v4067 = vld [vmem:[%s7 + $0x68] sm:$0xf]
    %v4068 = vld [vmem:[%s7 + $0x6c] sm:$0xf]
    %v4069 = vld [vmem:[%s7 + $0x70] sm:$0xf]
    %v4070 = vld [vmem:[%s7 + $0x74] sm:$0xf]
    %v4071 = vld [vmem:[%s7 + $0x78] sm:$0xf]
    %v4072 = vld [vmem:[%s7 + $0x7c] sm:$0xf]
    %v4073 = vld [vmem:[%s8] sm:$0x1]
    %v4075 = vlaneseq
    %v4076 = vshrl.u32 %v4075, 7
    %v4077 = vsub.s32 0, %v4076
    %v4078 = vrot.slane %v4073, %v4077
    %v4112 = vunpack.c.l.b16 %v4041
    %v4113 = vunpack.c.l.b16 %v4042
    %v4114 = vunpack.c.l.b16 %v4043
    %v4115 = vunpack.c.l.b16 %v4044
    %v4116 = vunpack.c.l.b16 %v4045
    %v4117 = vunpack.c.l.b16 %v4046
    %v4118 = vunpack.c.l.b16 %v4047
    %v4119 = vunpack.c.l.b16 %v4048
    %v4120 = vunpack.c.l.b16 %v4049
    %v4121 = vunpack.c.l.b16 %v4050
    %v4122 = vunpack.c.l.b16 %v4051
    %v4123 = vunpack.c.l.b16 %v4052
    %v4124 = vunpack.c.l.b16 %v4053
    %v4125 = vunpack.c.l.b16 %v4054
    %v4126 = vunpack.c.l.b16 %v4055
    %v4127 = vunpack.c.l.b16 %v4056
    %v4128 = vunpack.c.l.b16 %v4057
    %v4129 = vunpack.c.l.b16 %v4058
    %v4130 = vunpack.c.l.b16 %v4059
    %v4131 = vunpack.c.l.b16 %v4060
    %v4132 = vunpack.c.l.b16 %v4061
    %v4133 = vunpack.c.l.b16 %v4062
    %v4134 = vunpack.c.l.b16 %v4063
    %v4135 = vunpack.c.l.b16 %v4064
    %v4136 = vunpack.c.l.b16 %v4065
    %v4137 = vunpack.c.l.b16 %v4066
    %v4138 = vunpack.c.l.b16 %v4067
    %v4139 = vunpack.c.l.b16 %v4068
    %v4140 = vunpack.c.l.b16 %v4069
    %v4141 = vunpack.c.l.b16 %v4070
    %v4142 = vunpack.c.l.b16 %v4071
    %v4143 = vunpack.c.l.b16 %v4072
    %v4144 = vpack.c.b16 %v4113, %v4112
    %v4145 = vpack.c.b16 %v4115, %v4114
    %v4146 = vpack.c.b16 %v4117, %v4116
    %v4147 = vpack.c.b16 %v4119, %v4118
    %v4148 = vpack.c.b16 %v4121, %v4120
    %v4149 = vpack.c.b16 %v4123, %v4122
    %v4150 = vpack.c.b16 %v4125, %v4124
    %v4151 = vpack.c.b16 %v4127, %v4126
    %v4152 = vpack.c.b16 %v4129, %v4128
    %v4153 = vpack.c.b16 %v4131, %v4130
    %v4154 = vpack.c.b16 %v4133, %v4132
    %v4155 = vpack.c.b16 %v4135, %v4134
    %v4156 = vpack.c.b16 %v4137, %v4136
    %v4157 = vpack.c.b16 %v4139, %v4138
    %v4158 = vpack.c.b16 %v4141, %v4140
    %v4159 = vpack.c.b16 %v4143, %v4142
    %4176 = vmatprep.subr.bf16.mxu0 0
    %4177 = vmatpush1.bf16.msra.mxu0 %v4151
    %4178 = vmatprep.subr.bf16.mxu0 0
    %4179 = vmatpush1.bf16.msra.mxu0 %v4150
    %4180 = vmatprep.subr.bf16.mxu0 0
    %4181 = vmatpush1.bf16.msra.mxu0 %v4149
    %4182 = vmatprep.subr.bf16.mxu0 0
    %4183 = vmatpush1.bf16.msra.mxu0 %v4148
    %4184 = vmatprep.subr.bf16.mxu0 0
    %4185 = vmatpush1.bf16.msra.mxu0 %v4147
    %4186 = vmatprep.subr.bf16.mxu0 0
    %4187 = vmatpush1.bf16.msra.mxu0 %v4146
    %4188 = vmatprep.subr.bf16.mxu0 0
    %4189 = vmatpush1.bf16.msra.mxu0 %v4145
    %4190 = vmatprep.subr.bf16.mxu0 0
    %4191 = vmatpush1.bf16.msra.mxu0 %v4144
    %4192 = vmatprep.subr.bf16.mxu0 0
    %4193 = vmatpush2.bf16.msra.mxu0 %v4159
    %4194 = vmatprep.subr.bf16.mxu0 0
    %4195 = vmatpush2.bf16.msra.mxu0 %v4158
    %4196 = vmatprep.subr.bf16.mxu0 0
    %4197 = vmatpush2.bf16.msra.mxu0 %v4157
    %4198 = vmatprep.subr.bf16.mxu0 0
    %4199 = vmatpush2.bf16.msra.mxu0 %v4156
    %4200 = vmatprep.subr.bf16.mxu0 0
    %4201 = vmatpush2.bf16.msra.mxu0 %v4155
    %4202 = vmatprep.subr.bf16.mxu0 0
    %4203 = vmatpush2.bf16.msra.mxu0 %v4154
    %4204 = vmatprep.subr.bf16.mxu0 0
    %4205 = vmatpush2.bf16.msra.mxu0 %v4153
    %4206 = vmatprep.subr.bf16.mxu0 0
    %4207 = vmatpush2.bf16.msra.mxu0 %v4152
    %4208 = vmatprep.mubr.bf16.mxu0 %v4040
    %4209 = vmatmul.mubr.bf16.gmra.mxu0 %v4039
    %v4210 = vpop.f32.mrf.mxu0
    %v4211 = vadd.f32 %v4078, %v4210
    %v4212 = vpop.f32.mrf.mxu0
    %v4213 = vpop.f32.mrf.mxu0
    %v4214 = vpop.f32.mrf.mxu0
    %4215 = vdwg.mxu0
    %4217 = vrot.lane.b32.xlu0 %v4211, 127
    %v4218 = vpop.permute.xlu0 %4217
    %vm4220 = vcmask 41984
    %v4221 = vsel %vm4220, %v4218, 0.0
    %4222 = vadd.xlane.f32.xlu0 %v4221
    %v4223 = vpop.xlane.xlu0 %4222
    %v4224 = vrcp.pop 6.0
    %v4225 = vmul.f32 %v4223, %v4224
    %v4226 = vsub.f32 %v4211, %v4225
    %4227 = vset.pattern.permute.xlu0 0
    %4228 = vperm.xlu0 %4227, %v4211
    %v4229 = vpop.permute.xlu0 %4228
    %v4231 = vadd.f32 %v4229, %v4226
    %4233 = vrot.lane.b32.xlu0 %v4231, 127
    %v4234 = vpop.permute.xlu0 %4233
    %4236 = vst.msk [vmem:[#allocation2] sm:$0x3] %vm4220, %v4234
    // Predicated region
    $region38: #{dueling_dqn_forward.5} parent=1 // pred_check
      _
    $region39: #{dueling_dqn_forward.5} parent=1 // pred_check_branch
      %4238 = sbr.rel (0) target = $region41
    $region40: #{dueling_dqn_forward.5} parent=1 // pred_region
      %s4240 = ssub.s32 32, 32
      %4241 = vsyncadd [#allocation3], %s4240
      %s4243 = sshll.u32 [#allocation2], 4
      %s4244 = int_to_ptr.vmem [resolvable:$true] %s4243
      %4246 = dma.vmem_to_hbm [thread:$0]  %s4244, 32, %s9, [#allocation3]
    $region41: #{dueling_dqn_forward.5} parent=1 // pred_fallthru
      _
    // Predicated region
    $region42: #{dueling_dqn_forward.5} parent=1 // pred_check
      _
    $region43: #{dueling_dqn_forward.5} parent=1 // pred_check_branch
      %4248 = sbr.rel (0) target = $region45
    $region44: #{dueling_dqn_forward.5} parent=1 // pred_region
      %4249 = dma.done [#allocation3], 32
    $region45: #{dueling_dqn_forward.5} parent=1 // pred_fallthru
      _
    %4250 = vsyncpa [#allocation3], 1

</llo_original>
